<compile_context>
chip_gen: v7x
topology: tpu7x:2x2x1
jax: 0.10.0
libtpu: 0.0.40
codegen_flags: <defaults>
</compile_context>

<pallas_src>
import math

import jax
import jax.numpy as jnp
from jax.experimental import pallas as pl
from jax.experimental.pallas import tpu as pltpu

# ----------------------- synthetic stand-in config --------------------------
VOCAB = 100
MAX_POS = 16
B = 2                       # batch
S = 8                       # sequence length
H = 256                     # hidden size (stands in for 768; lane-dense)
NUM_HEADS = 2
HEAD_DIM = H // NUM_HEADS   # 128 -> per-head slices are full 128-lane tiles
FFN = 512                   # intermediate size (stands in for 3072)
NUM_LAYERS = 2              # encoder layers (stands in for 12)
INNER = 128                 # ClassificationHead inner_dim (stands in for 300)
NUM_CLASSES = 5             # class_num
OUT_PAD = 128               # logits padded to a lane-dense slab; sliced in wrapper
LN_EPS = 1e-12
SCALE = 1.0 / math.sqrt(HEAD_DIM)


def _layer_norm(x, g, b):
    mu = jnp.mean(x, axis=-1, keepdims=True)
    var = jnp.mean((x - mu) ** 2, axis=-1, keepdims=True)
    return (x - mu) * jax.lax.rsqrt(var + LN_EPS) * g + b


# ------------------------------- fused kernel --------------------------------
def bert_fused_kernel(x_emb_ref, neg_ref,
                      w_attn_ref, vec_ref, w1_ref, b1_ref, w2_ref,
                      hw1_ref, hb1_ref, hw2_ref, hb2_ref,
                      logits_ref, x_scr):
    """Grid axis = encoder layer. Hidden state is VMEM-resident across layers."""
    l = pl.program_id(0)

    @pl.when(l == 0)
    def _init():
        x_scr[...] = x_emb_ref[...]

    x3 = x_scr[...]                                  # (B, S, H) f32
    x2 = x3.reshape(B * S, H)
    xb = x2.astype(jnp.bfloat16)

    vec = vec_ref[0]                                 # (9, H) f32 packed per-layer vectors
    bq, bk, bv, bo = vec[0:1], vec[1:2], vec[2:3], vec[3:4]
    ln1_g, ln1_b = vec[4:5], vec[5:6]
    bff2 = vec[6:7]
    ln2_g, ln2_b = vec[7:8], vec[8:9]

    # QKV projections: bf16 operands, f32 accumulation.
    q = jnp.dot(xb, w_attn_ref[0, 0], preferred_element_type=jnp.float32) + bq
    k = jnp.dot(xb, w_attn_ref[0, 1], preferred_element_type=jnp.float32) + bk
    v = jnp.dot(xb, w_attn_ref[0, 2], preferred_element_type=jnp.float32) + bv

    q3 = q.reshape(B, S, H)
    k3 = k.reshape(B, S, H)
    v3 = v.reshape(B, S, H)
    neg = neg_ref[...]                               # (B, 1, S) additive mask

    ctx_parts = []
    for h in range(NUM_HEADS):                       # static unroll; 128-lane-aligned slices
        lo = h * HEAD_DIM
        qh = q3[:, :, lo:lo + HEAD_DIM].astype(jnp.bfloat16)
        kh = k3[:, :, lo:lo + HEAD_DIM].astype(jnp.bfloat16)
        vh = v3[:, :, lo:lo + HEAD_DIM].astype(jnp.bfloat16)
        sc = jnp.einsum('bqd,bkd->bqk', qh, kh,
                        preferred_element_type=jnp.float32)        # (B, S, S)
        sc = sc * SCALE + neg
        sc = sc - jnp.max(sc, axis=-1, keepdims=True)
        p = jnp.exp(sc)
        p = p * pl.reciprocal(jnp.sum(p, axis=-1, keepdims=True), approx=True)
        ctx_parts.append(jnp.einsum('bqk,bkd->bqd', p.astype(jnp.bfloat16), vh,
                                    preferred_element_type=jnp.float32))
    # Concatenate per-head contexts once, then a single output projection.
    ctx = jnp.concatenate(ctx_parts, axis=-1).reshape(B * S, H)
    attn = jnp.dot(ctx.astype(jnp.bfloat16), w_attn_ref[0, 3],
                   preferred_element_type=jnp.float32) + bo

    h1 = _layer_norm(x2 + attn, ln1_g, ln1_b)        # f32

    ff = jnp.dot(h1.astype(jnp.bfloat16), w1_ref[0],
                 preferred_element_type=jnp.float32) + b1_ref[0]
    # TODO(synk): HF bert-base uses exact erf GELU; tanh approximation used here.
    ff = jax.nn.gelu(ff, approximate=True)
    ff = jnp.dot(ff.astype(jnp.bfloat16), w2_ref[0],
                 preferred_element_type=jnp.float32) + bff2

    out2 = _layer_norm(h1 + ff, ln2_g, ln2_b)        # (B*S, H) f32
    x_scr[...] = out2.reshape(B, S, H)

    @pl.when(l == NUM_LAYERS - 1)
    def _head():
        # ClassificationHead: pooling='first' -> dense1 -> dropout(identity) -> out_proj
        cls = out2.reshape(B, S, H)[:, 0, :]                             # (B, H)
        z = jnp.dot(cls.astype(jnp.bfloat16), hw1_ref[...],
                    preferred_element_type=jnp.float32) + hb1_ref[...]
        logits = jnp.dot(z.astype(jnp.bfloat16), hw2_ref[...],
                         preferred_element_type=jnp.float32) + hb2_ref[...]
        logits_ref[...] = logits.astype(logits_ref.dtype)


# --------------------------------- wrapper -----------------------------------
def fused_encoder_and_head(x_emb, neg, params):
    grid_spec = pltpu.PrefetchScalarGridSpec(
        num_scalar_prefetch=0,
        grid=(NUM_LAYERS,),
        in_specs=[
            pl.BlockSpec((B, S, H), lambda l: (0, 0, 0)),           # embedded input
            pl.BlockSpec((B, 1, S), lambda l: (0, 0, 0)),           # additive attn mask
            pl.BlockSpec((1, 4, H, H), lambda l: (l, 0, 0, 0)),     # wq/wk/wv/wo (bf16)
            pl.BlockSpec((1, 9, H), lambda l: (l, 0, 0)),           # packed biases + LN
            pl.BlockSpec((1, H, FFN), lambda l: (l, 0, 0)),         # FFN w1 (bf16)
            pl.BlockSpec((1, 1, FFN), lambda l: (l, 0, 0)),         # FFN b1
            pl.BlockSpec((1, FFN, H), lambda l: (l, 0, 0)),         # FFN w2 (bf16)
            pl.BlockSpec((H, INNER), lambda l: (0, 0)),             # head dense1 W
            pl.BlockSpec((1, INNER), lambda l: (0, 0)),             # head dense1 b
            pl.BlockSpec((INNER, OUT_PAD), lambda l: (0, 0)),       # head out_proj W (padded)
            pl.BlockSpec((1, OUT_PAD), lambda l: (0, 0)),           # head out_proj b (padded)
        ],
        out_specs=pl.BlockSpec((B, OUT_PAD), lambda l: (0, 0)),
        scratch_shapes=[pltpu.VMEM((B, S, H), jnp.float32)],        # resident hidden state
    )
    logits_pad = pl.pallas_call(
        bert_fused_kernel,
        out_shape=jax.ShapeDtypeStruct((B, OUT_PAD), jnp.float32),
        grid_spec=grid_spec,
        # Layer axis carries the hidden state through VMEM scratch -> "arbitrary".
        # TODO(synk): on v7x a >=2-wide "parallel" axis would use both TCs, but the
        #             layer recurrence is sequential; single-core execution accepted.
        compiler_params=pltpu.CompilerParams(dimension_semantics=("arbitrary",)),
    )(x_emb, neg,
      params["w_attn"], params["vecs"],
      params["w_ffn1"], params["b_ffn1"], params["w_ffn2"],
      params["head_w1"], params["head_b1"], params["head_w2"], params["head_b2"])
    return logits_pad[:, :NUM_CLASSES]


# ------------------------------ parameters -----------------------------------
def init_params(key):
    def nrm(k, shape):
        return jax.random.normal(k, shape, jnp.float32) * 0.02

    keys = jax.random.split(key, 6 + NUM_LAYERS)
    hw2 = jnp.zeros((INNER, OUT_PAD), jnp.float32)
    hw2 = hw2.at[:, :NUM_CLASSES].set(nrm(keys[4], (INNER, NUM_CLASSES)))
    params = {
        "tok_emb": nrm(keys[0], (VOCAB, H)),
        "pos_emb": nrm(keys[1], (MAX_POS, H)),
        "seg_emb": nrm(keys[2], (2, H)),
        "emb_ln_g": jnp.ones((1, 1, H), jnp.float32),
        "emb_ln_b": jnp.zeros((1, 1, H), jnp.float32),
        "head_w1": nrm(keys[3], (H, INNER)).astype(jnp.bfloat16),
        "head_b1": jnp.zeros((1, INNER), jnp.float32),
        "head_w2": hw2.astype(jnp.bfloat16),
        "head_b2": jnp.zeros((1, OUT_PAD), jnp.float32),
    }
    w_attn, vecs, w1s, b1s, w2s = [], [], [], [], []
    zeros_h = jnp.zeros((H,), jnp.float32)
    ones_h = jnp.ones((H,), jnp.float32)
    for l in range(NUM_LAYERS):
        lk = jax.random.split(keys[6 + l], 6)
        wq, wk = nrm(lk[0], (H, H)), nrm(lk[1], (H, H))
        wv, wo = nrm(lk[2], (H, H)), nrm(lk[3], (H, H))
        w1, w2 = nrm(lk[4], (H, FFN)), nrm(lk[5], (FFN, H))
        w_attn.append(jnp.stack([wq, wk, wv, wo]))
        # rows: bq bk bv bo ln1_g ln1_b b_ffn2 ln2_g ln2_b
        vecs.append(jnp.stack([zeros_h, zeros_h, zeros_h, zeros_h,
                               ones_h, zeros_h, zeros_h, ones_h, zeros_h]))
        w1s.append(w1)
        b1s.append(jnp.zeros((1, FFN), jnp.float32))
        w2s.append(w2)
    params["w_attn"] = jnp.stack(w_attn).astype(jnp.bfloat16)   # (L, 4, H, H)
    params["vecs"] = jnp.stack(vecs)                            # (L, 9, H) f32
    params["w_ffn1"] = jnp.stack(w1s).astype(jnp.bfloat16)      # (L, H, FFN)
    params["b_ffn1"] = jnp.stack(b1s)                           # (L, 1, FFN) f32
    params["w_ffn2"] = jnp.stack(w2s).astype(jnp.bfloat16)      # (L, FFN, H)
    return params


# ------------------------------ forward pass ----------------------------------
def embed(input_ids, token_type_ids, params):
    tok = params["tok_emb"][input_ids]                     # (B, S, H)
    pos = params["pos_emb"][jnp.arange(S)][None, :, :]     # (1, S, H)
    seg = params["seg_emb"][token_type_ids]                # (B, S, H)
    e = tok + pos + seg
    mu = e.mean(-1, keepdims=True)
    var = ((e - mu) ** 2).mean(-1, keepdims=True)
    return (e - mu) * jax.lax.rsqrt(var + LN_EPS) * params["emb_ln_g"] + params["emb_ln_b"]


def model_forward(input_ids, attention_mask, token_type_ids, params):
    # TODO(synk): BertTokenizer (host-side string tokenization) has no device
    #             equivalent; inputs here are already-encoded ids/masks.
    x = embed(input_ids, token_type_ids, params)                         # (B, S, H) f32
    neg = (attention_mask.astype(jnp.float32) - 1.0)[:, None, :] * 1e9   # (B, 1, S)
    return fused_encoder_and_head(x, neg, params)


# ---------------------------------- main --------------------------------------
if __name__ == "__main__":
    key = jax.random.PRNGKey(0)
    pkey, ikey = jax.random.split(key)
    params = init_params(pkey)

    input_ids = jax.random.randint(ikey, (B, S), 0, VOCAB, dtype=jnp.int32)
    # simulate padded batch: sequence lengths [S, S-2]
    lens = jnp.array([S, S - 2], dtype=jnp.int32)
    attention_mask = (jnp.arange(S)[None, :] < lens[:, None]).astype(jnp.int32)
    token_type_ids = jnp.zeros((B, S), dtype=jnp.int32)

    logits = model_forward(input_ids, attention_mask, token_type_ids, params)
    logits = jax.block_until_ready(logits)
    assert logits.shape == (B, NUM_CLASSES) and logits.dtype == jnp.float32
    print("KERNEL_OK")
</pallas_src>

<mosaic_0001>
module attributes {stable_mosaic.version = 11 : i64} {
  func.func @bert_fused_kernel(%arg0: i32, %arg1: memref<2x8x256xf32, #tpu.memory_space<vmem>>, %arg2: memref<2x1x8xf32, #tpu.memory_space<vmem>>, %arg3: memref<1x4x256x256xbf16, #tpu.memory_space<vmem>>, %arg4: memref<1x9x256xf32, #tpu.memory_space<vmem>>, %arg5: memref<1x256x512xbf16, #tpu.memory_space<vmem>>, %arg6: memref<1x1x512xf32, #tpu.memory_space<vmem>>, %arg7: memref<1x512x256xbf16, #tpu.memory_space<vmem>>, %arg8: memref<256x128xbf16, #tpu.memory_space<vmem>>, %arg9: memref<1x128xf32, #tpu.memory_space<vmem>>, %arg10: memref<128x128xbf16, #tpu.memory_space<vmem>>, %arg11: memref<1x128xf32, #tpu.memory_space<vmem>>, %arg12: memref<2x128xf32, #tpu.memory_space<vmem>>, %arg13: memref<2x8x256xf32, #tpu.memory_space<vmem>>) attributes {dimension_semantics = [#tpu.dimension_semantics<arbitrary>], iteration_bounds = array<i64: 2>, scalar_prefetch = 0 : i64, scratch_operands = 1 : i64, tpu.core_type = #tpu.core_type<tc>, window_params = [{pipeline_mode = #tpu.pipeline_mode<synchronous>, transform_indices = @transform_0, window_bounds = array<i64: 2, 8, 256>}, {pipeline_mode = #tpu.pipeline_mode<synchronous>, transform_indices = @transform_1, window_bounds = array<i64: 2, 1, 8>}, {transform_indices = @transform_2, window_bounds = array<i64: 1, 4, 256, 256>}, {transform_indices = @transform_3, window_bounds = array<i64: 1, 9, 256>}, {transform_indices = @transform_4, window_bounds = array<i64: 1, 256, 512>}, {transform_indices = @transform_5, window_bounds = array<i64: 1, 1, 512>}, {transform_indices = @transform_6, window_bounds = array<i64: 1, 512, 256>}, {pipeline_mode = #tpu.pipeline_mode<synchronous>, transform_indices = @transform_7, window_bounds = array<i64: 256, 128>}, {pipeline_mode = #tpu.pipeline_mode<synchronous>, transform_indices = @transform_8, window_bounds = array<i64: 1, 128>}, {pipeline_mode = #tpu.pipeline_mode<synchronous>, transform_indices = @transform_9, window_bounds = array<i64: 128, 128>}, {pipeline_mode = #tpu.pipeline_mode<synchronous>, transform_indices = @transform_10, window_bounds = array<i64: 1, 128>}, {pipeline_mode = #tpu.pipeline_mode<synchronous>, transform_indices = @transform_11, window_bounds = array<i64: 2, 128>}]} {
    %c0_i32 = arith.constant 0 : i32
    %0 = arith.cmpi eq, %arg0, %c0_i32 : i32
    %1 = arith.extui %0 : i1 to i32
    %c0_i32_0 = arith.constant 0 : i32
    %2 = arith.cmpi ne, %1, %c0_i32_0 : i32
    scf.if %2 {
      %c0_64 = arith.constant 0 : index
      %c0_65 = arith.constant 0 : index
      %c0_66 = arith.constant 0 : index
      %168 = vector.load %arg1[%c0_64, %c0_65, %c0_66] : memref<2x8x256xf32, #tpu.memory_space<vmem>>, vector<2x8x256xf32>
      %c0_67 = arith.constant 0 : index
      %c0_68 = arith.constant 0 : index
      %c0_69 = arith.constant 0 : index
      %169 = vector.load %arg13[%c0_67, %c0_68, %c0_69] : memref<2x8x256xf32, #tpu.memory_space<vmem>>, vector<2x8x256xf32>
      tpu.vector_store %arg13[%c0_67, %c0_68, %c0_69], %168 {strides = array<i32>} : memref<2x8x256xf32, #tpu.memory_space<vmem>>, vector<2x8x256xf32>,
    } else {
    }
    %c0 = arith.constant 0 : index
    %c0_1 = arith.constant 0 : index
    %c0_2 = arith.constant 0 : index
    %3 = vector.load %arg13[%c0, %c0_1, %c0_2] : memref<2x8x256xf32, #tpu.memory_space<vmem>>, vector<2x8x256xf32>
    %4 = vector.shape_cast %3 : vector<2x8x256xf32> to vector<16x256xf32>
    %5 = arith.truncf %4 : vector<16x256xf32> to vector<16x256xbf16>
    %c0_3 = arith.constant 0 : index
    %c0_4 = arith.constant 0 : index
    %c0_5 = arith.constant 0 : index
    %6 = vector.load %arg4[%c0_3, %c0_4, %c0_5] : memref<1x9x256xf32, #tpu.memory_space<vmem>>, vector<1x9x256xf32>
    %7 = vector.shape_cast %6 : vector<1x9x256xf32> to vector<9x256xf32>
    %8 = vector.extract_strided_slice %7 {offsets = [0, 0], sizes = [1, 256], strides = [1, 1]} : vector<9x256xf32> to vector<1x256xf32>
    %9 = vector.extract_strided_slice %7 {offsets = [1, 0], sizes = [1, 256], strides = [1, 1]} : vector<9x256xf32> to vector<1x256xf32>
    %10 = vector.extract_strided_slice %7 {offsets = [2, 0], sizes = [1, 256], strides = [1, 1]} : vector<9x256xf32> to vector<1x256xf32>
    %11 = vector.extract_strided_slice %7 {offsets = [3, 0], sizes = [1, 256], strides = [1, 1]} : vector<9x256xf32> to vector<1x256xf32>
    %12 = vector.extract_strided_slice %7 {offsets = [4, 0], sizes = [1, 256], strides = [1, 1]} : vector<9x256xf32> to vector<1x256xf32>
    %13 = vector.extract_strided_slice %7 {offsets = [5, 0], sizes = [1, 256], strides = [1, 1]} : vector<9x256xf32> to vector<1x256xf32>
    %14 = vector.extract_strided_slice %7 {offsets = [6, 0], sizes = [1, 256], strides = [1, 1]} : vector<9x256xf32> to vector<1x256xf32>
    %15 = vector.extract_strided_slice %7 {offsets = [7, 0], sizes = [1, 256], strides = [1, 1]} : vector<9x256xf32> to vector<1x256xf32>
    %16 = vector.extract_strided_slice %7 {offsets = [8, 0], sizes = [1, 256], strides = [1, 1]} : vector<9x256xf32> to vector<1x256xf32>
    %c0_6 = arith.constant 0 : index
    %c0_7 = arith.constant 0 : index
    %c0_8 = arith.constant 0 : index
    %c0_9 = arith.constant 0 : index
    %17 = vector.load %arg3[%c0_6, %c0_7, %c0_8, %c0_9] : memref<1x4x256x256xbf16, #tpu.memory_space<vmem>>, vector<1x1x256x256xbf16>
    %18 = vector.shape_cast %17 : vector<1x1x256x256xbf16> to vector<256x256xbf16>
    %cst = arith.constant dense<0.000000e+00> : vector<16x256xf32>
    %19 = tpu.matmul %5, %18, %cst {dimension_numbers = #tpu.dot_dimension_numbers<[1], [0], [0], [1], [0, 0, 1, 1], [], []>} : vector<16x256xbf16>, vector<256x256xbf16>, vector<16x256xf32> -> vector<16x256xf32>
    %20 = vector.broadcast %8 : vector<1x256xf32> to vector<16x256xf32>
    %21 = arith.addf %19, %20 : vector<16x256xf32>
    %c0_10 = arith.constant 0 : index
    %c1 = arith.constant 1 : index
    %c0_11 = arith.constant 0 : index
    %c0_12 = arith.constant 0 : index
    %22 = vector.load %arg3[%c0_10, %c1, %c0_11, %c0_12] : memref<1x4x256x256xbf16, #tpu.memory_space<vmem>>, vector<1x1x256x256xbf16>
    %23 = vector.shape_cast %22 : vector<1x1x256x256xbf16> to vector<256x256xbf16>
    %cst_13 = arith.constant dense<0.000000e+00> : vector<16x256xf32>
    %24 = tpu.matmul %5, %23, %cst_13 {dimension_numbers = #tpu.dot_dimension_numbers<[1], [0], [0], [1], [0, 0, 1, 1], [], []>} : vector<16x256xbf16>, vector<256x256xbf16>, vector<16x256xf32> -> vector<16x256xf32>
    %25 = vector.broadcast %9 : vector<1x256xf32> to vector<16x256xf32>
    %26 = arith.addf %24, %25 : vector<16x256xf32>
    %c0_14 = arith.constant 0 : index
    %c2 = arith.constant 2 : index
    %c0_15 = arith.constant 0 : index
    %c0_16 = arith.constant 0 : index
    %27 = vector.load %arg3[%c0_14, %c2, %c0_15, %c0_16] : memref<1x4x256x256xbf16, #tpu.memory_space<vmem>>, vector<1x1x256x256xbf16>
    %28 = vector.shape_cast %27 : vector<1x1x256x256xbf16> to vector<256x256xbf16>
    %cst_17 = arith.constant dense<0.000000e+00> : vector<16x256xf32>
    %29 = tpu.matmul %5, %28, %cst_17 {dimension_numbers = #tpu.dot_dimension_numbers<[1], [0], [0], [1], [0, 0, 1, 1], [], []>} : vector<16x256xbf16>, vector<256x256xbf16>, vector<16x256xf32> -> vector<16x256xf32>
    %30 = vector.broadcast %10 : vector<1x256xf32> to vector<16x256xf32>
    %31 = arith.addf %29, %30 : vector<16x256xf32>
    %32 = vector.shape_cast %21 : vector<16x256xf32> to vector<2x8x256xf32>
    %33 = vector.shape_cast %26 : vector<16x256xf32> to vector<2x8x256xf32>
    %34 = vector.shape_cast %31 : vector<16x256xf32> to vector<2x8x256xf32>
    %c0_18 = arith.constant 0 : index
    %c0_19 = arith.constant 0 : index
    %c0_20 = arith.constant 0 : index
    %35 = vector.load %arg2[%c0_18, %c0_19, %c0_20] : memref<2x1x8xf32, #tpu.memory_space<vmem>>, vector<2x1x8xf32>
    %36 = vector.extract_strided_slice %32 {offsets = [0, 0, 0], sizes = [2, 8, 128], strides = [1, 1, 1]} : vector<2x8x256xf32> to vector<2x8x128xf32>
    %37 = arith.truncf %36 : vector<2x8x128xf32> to vector<2x8x128xbf16>
    %38 = vector.extract_strided_slice %33 {offsets = [0, 0, 0], sizes = [2, 8, 128], strides = [1, 1, 1]} : vector<2x8x256xf32> to vector<2x8x128xf32>
    %39 = arith.truncf %38 : vector<2x8x128xf32> to vector<2x8x128xbf16>
    %40 = vector.extract_strided_slice %34 {offsets = [0, 0, 0], sizes = [2, 8, 128], strides = [1, 1, 1]} : vector<2x8x256xf32> to vector<2x8x128xf32>
    %41 = arith.truncf %40 : vector<2x8x128xf32> to vector<2x8x128xbf16>
    "tpu.trace_start"() <{level = 10 : i32, message = "bqd,bkd->bqk"}> : () -> ()
    %cst_21 = arith.constant dense<0.000000e+00> : vector<2x8x8xf32>
    %42 = tpu.matmul %37, %39, %cst_21 {dimension_numbers = #tpu.dot_dimension_numbers<[2], [2], [1], [1], [0, 0, 0, 1, 1, 1], [0], [0]>} : vector<2x8x128xbf16>, vector<2x8x128xbf16>, vector<2x8x8xf32> -> vector<2x8x8xf32>
    "tpu.trace_stop"() : () -> ()
    %cst_22 = arith.constant 0.0883883461 : f32
    %43 = vector.broadcast %cst_22 : f32 to vector<2x8x8xf32>
    %44 = arith.mulf %42, %43 : vector<2x8x8xf32>
    %45 = vector.broadcast %35 : vector<2x1x8xf32> to vector<2x8x8xf32>
    %46 = arith.addf %44, %45 : vector<2x8x8xf32>
    %cst_23 = arith.constant dense<0xFF800000> : vector<2x8xf32>
    %47 = vector.multi_reduction <maximumf>, %46, %cst_23 [2] : vector<2x8x8xf32> to vector<2x8xf32>
    %48 = vector.shape_cast %47 : vector<2x8xf32> to vector<2x8x1xf32>
    %49 = vector.broadcast %48 : vector<2x8x1xf32> to vector<2x8x8xf32>
    %50 = arith.subf %46, %49 : vector<2x8x8xf32>
    %51 = math.exp %50 : vector<2x8x8xf32>
    %cst_24 = arith.constant dense<0.000000e+00> : vector<2x8xf32>
    %52 = vector.multi_reduction <add>, %51, %cst_24 [2] : vector<2x8x8xf32> to vector<2x8xf32>
    %53 = vector.shape_cast %52 : vector<2x8xf32> to vector<2x8x1xf32>
    %54 = tpu.reciprocal %53 {approx = true} : vector<2x8x1xf32> -> vector<2x8x1xf32>
    %55 = vector.broadcast %54 : vector<2x8x1xf32> to vector<2x8x8xf32>
    %56 = arith.mulf %51, %55 : vector<2x8x8xf32>
    %57 = arith.truncf %56 : vector<2x8x8xf32> to vector<2x8x8xbf16>
    "tpu.trace_start"() <{level = 10 : i32, message = "bqk,bkd->bqd"}> : () -> ()
    %cst_25 = arith.constant dense<0.000000e+00> : vector<2x8x128xf32>
    %58 = tpu.matmul %57, %41, %cst_25 {dimension_numbers = #tpu.dot_dimension_numbers<[2], [1], [1], [2], [0, 0, 0, 1, 1, 2], [0], [0]>} : vector<2x8x8xbf16>, vector<2x8x128xbf16>, vector<2x8x128xf32> -> vector<2x8x128xf32>
    "tpu.trace_stop"() : () -> ()
    %59 = vector.extract_strided_slice %32 {offsets = [0, 0, 128], sizes = [2, 8, 128], strides = [1, 1, 1]} : vector<2x8x256xf32> to vector<2x8x128xf32>
    %60 = arith.truncf %59 : vector<2x8x128xf32> to vector<2x8x128xbf16>
    %61 = vector.extract_strided_slice %33 {offsets = [0, 0, 128], sizes = [2, 8, 128], strides = [1, 1, 1]} : vector<2x8x256xf32> to vector<2x8x128xf32>
    %62 = arith.truncf %61 : vector<2x8x128xf32> to vector<2x8x128xbf16>
    %63 = vector.extract_strided_slice %34 {offsets = [0, 0, 128], sizes = [2, 8, 128], strides = [1, 1, 1]} : vector<2x8x256xf32> to vector<2x8x128xf32>
    %64 = arith.truncf %63 : vector<2x8x128xf32> to vector<2x8x128xbf16>
    "tpu.trace_start"() <{level = 10 : i32, message = "bqd,bkd->bqk"}> : () -> ()
    %cst_26 = arith.constant dense<0.000000e+00> : vector<2x8x8xf32>
    %65 = tpu.matmul %60, %62, %cst_26 {dimension_numbers = #tpu.dot_dimension_numbers<[2], [2], [1], [1], [0, 0, 0, 1, 1, 1], [0], [0]>} : vector<2x8x128xbf16>, vector<2x8x128xbf16>, vector<2x8x8xf32> -> vector<2x8x8xf32>
    "tpu.trace_stop"() : () -> ()
    %cst_27 = arith.constant 0.0883883461 : f32
    %66 = vector.broadcast %cst_27 : f32 to vector<2x8x8xf32>
    %67 = arith.mulf %65, %66 : vector<2x8x8xf32>
    %68 = vector.broadcast %35 : vector<2x1x8xf32> to vector<2x8x8xf32>
    %69 = arith.addf %67, %68 : vector<2x8x8xf32>
    %cst_28 = arith.constant dense<0xFF800000> : vector<2x8xf32>
    %70 = vector.multi_reduction <maximumf>, %69, %cst_28 [2] : vector<2x8x8xf32> to vector<2x8xf32>
    %71 = vector.shape_cast %70 : vector<2x8xf32> to vector<2x8x1xf32>
    %72 = vector.broadcast %71 : vector<2x8x1xf32> to vector<2x8x8xf32>
    %73 = arith.subf %69, %72 : vector<2x8x8xf32>
    %74 = math.exp %73 : vector<2x8x8xf32>
    %cst_29 = arith.constant dense<0.000000e+00> : vector<2x8xf32>
    %75 = vector.multi_reduction <add>, %74, %cst_29 [2] : vector<2x8x8xf32> to vector<2x8xf32>
    %76 = vector.shape_cast %75 : vector<2x8xf32> to vector<2x8x1xf32>
    %77 = tpu.reciprocal %76 {approx = true} : vector<2x8x1xf32> -> vector<2x8x1xf32>
    %78 = vector.broadcast %77 : vector<2x8x1xf32> to vector<2x8x8xf32>
    %79 = arith.mulf %74, %78 : vector<2x8x8xf32>
    %80 = arith.truncf %79 : vector<2x8x8xf32> to vector<2x8x8xbf16>
    "tpu.trace_start"() <{level = 10 : i32, message = "bqk,bkd->bqd"}> : () -> ()
    %cst_30 = arith.constant dense<0.000000e+00> : vector<2x8x128xf32>
    %81 = tpu.matmul %80, %64, %cst_30 {dimension_numbers = #tpu.dot_dimension_numbers<[2], [1], [1], [2], [0, 0, 0, 1, 1, 2], [0], [0]>} : vector<2x8x8xbf16>, vector<2x8x128xbf16>, vector<2x8x128xf32> -> vector<2x8x128xf32>
    "tpu.trace_stop"() : () -> ()
    %82 = tpu.concatenate %58, %81 in 2 : vector<2x8x128xf32>, vector<2x8x128xf32> -> vector<2x8x256xf32>
    %83 = vector.shape_cast %82 : vector<2x8x256xf32> to vector<16x256xf32>
    %84 = arith.truncf %83 : vector<16x256xf32> to vector<16x256xbf16>
    %c0_31 = arith.constant 0 : index
    %c3 = arith.constant 3 : index
    %c0_32 = arith.constant 0 : index
    %c0_33 = arith.constant 0 : index
    %85 = vector.load %arg3[%c0_31, %c3, %c0_32, %c0_33] : memref<1x4x256x256xbf16, #tpu.memory_space<vmem>>, vector<1x1x256x256xbf16>
    %86 = vector.shape_cast %85 : vector<1x1x256x256xbf16> to vector<256x256xbf16>
    %cst_34 = arith.constant dense<0.000000e+00> : vector<16x256xf32>
    %87 = tpu.matmul %84, %86, %cst_34 {dimension_numbers = #tpu.dot_dimension_numbers<[1], [0], [0], [1], [0, 0, 1, 1], [], []>} : vector<16x256xbf16>, vector<256x256xbf16>, vector<16x256xf32> -> vector<16x256xf32>
    %88 = vector.broadcast %11 : vector<1x256xf32> to vector<16x256xf32>
    %89 = arith.addf %87, %88 : vector<16x256xf32>
    %90 = arith.addf %4, %89 : vector<16x256xf32>
    %cst_35 = arith.constant dense<0.000000e+00> : vector<16xf32>
    %91 = vector.multi_reduction <add>, %90, %cst_35 [1] : vector<16x256xf32> to vector<16xf32>
    %92 = vector.shape_cast %91 : vector<16xf32> to vector<16x1xf32>
    %cst_36 = arith.constant 2.560000e+02 : f32
    %93 = vector.broadcast %cst_36 : f32 to vector<16x1xf32>
    %94 = arith.divf %92, %93 : vector<16x1xf32>
    %95 = vector.broadcast %94 : vector<16x1xf32> to vector<16x256xf32>
    %96 = arith.subf %90, %95 : vector<16x256xf32>
    %97 = arith.mulf %96, %96 : vector<16x256xf32>
    %cst_37 = arith.constant dense<0.000000e+00> : vector<16xf32>
    %98 = vector.multi_reduction <add>, %97, %cst_37 [1] : vector<16x256xf32> to vector<16xf32>
    %99 = vector.shape_cast %98 : vector<16xf32> to vector<16x1xf32>
    %cst_38 = arith.constant 2.560000e+02 : f32
    %100 = vector.broadcast %cst_38 : f32 to vector<16x1xf32>
    %101 = arith.divf %99, %100 : vector<16x1xf32>
    %102 = vector.broadcast %94 : vector<16x1xf32> to vector<16x256xf32>
    %103 = arith.subf %90, %102 : vector<16x256xf32>
    %cst_39 = arith.constant 9.99999996E-13 : f32
    %104 = vector.broadcast %cst_39 : f32 to vector<16x1xf32>
    %105 = arith.addf %101, %104 : vector<16x1xf32>
    %106 = math.rsqrt %105 : vector<16x1xf32>
    %107 = vector.broadcast %106 : vector<16x1xf32> to vector<16x256xf32>
    %108 = arith.mulf %103, %107 : vector<16x256xf32>
    %109 = vector.broadcast %12 : vector<1x256xf32> to vector<16x256xf32>
    %110 = arith.mulf %108, %109 : vector<16x256xf32>
    %111 = vector.broadcast %13 : vector<1x256xf32> to vector<16x256xf32>
    %112 = arith.addf %110, %111 : vector<16x256xf32>
    %113 = arith.truncf %112 : vector<16x256xf32> to vector<16x256xbf16>
    %c0_40 = arith.constant 0 : index
    %c0_41 = arith.constant 0 : index
    %c0_42 = arith.constant 0 : index
    %114 = vector.load %arg5[%c0_40, %c0_41, %c0_42] : memref<1x256x512xbf16, #tpu.memory_space<vmem>>, vector<1x256x512xbf16>
    %115 = vector.shape_cast %114 : vector<1x256x512xbf16> to vector<256x512xbf16>
    %cst_43 = arith.constant dense<0.000000e+00> : vector<16x512xf32>
    %116 = tpu.matmul %113, %115, %cst_43 {dimension_numbers = #tpu.dot_dimension_numbers<[1], [0], [0], [1], [0, 0, 1, 1], [], []>} : vector<16x256xbf16>, vector<256x512xbf16>, vector<16x512xf32> -> vector<16x512xf32>
    %c0_44 = arith.constant 0 : index
    %c0_45 = arith.constant 0 : index
    %c0_46 = arith.constant 0 : index
    %117 = vector.load %arg6[%c0_44, %c0_45, %c0_46] : memref<1x1x512xf32, #tpu.memory_space<vmem>>, vector<1x1x512xf32>
    %118 = vector.shape_cast %117 : vector<1x1x512xf32> to vector<1x512xf32>
    %119 = vector.broadcast %118 : vector<1x512xf32> to vector<16x512xf32>
    %120 = arith.addf %116, %119 : vector<16x512xf32>
    %121 = arith.mulf %120, %120 : vector<16x512xf32>
    %122 = arith.mulf %120, %121 : vector<16x512xf32>
    %cst_47 = arith.constant 4.471500e-02 : f32
    %123 = vector.broadcast %cst_47 : f32 to vector<16x512xf32>
    %124 = arith.mulf %123, %122 : vector<16x512xf32>
    %125 = arith.addf %120, %124 : vector<16x512xf32>
    %cst_48 = arith.constant 0.797884583 : f32
    %126 = vector.broadcast %cst_48 : f32 to vector<16x512xf32>
    %127 = arith.mulf %126, %125 : vector<16x512xf32>
    %128 = math.tanh %127 : vector<16x512xf32>
    %cst_49 = arith.constant 1.000000e+00 : f32
    %129 = vector.broadcast %cst_49 : f32 to vector<16x512xf32>
    %130 = arith.addf %129, %128 : vector<16x512xf32>
    %cst_50 = arith.constant 5.000000e-01 : f32
    %131 = vector.broadcast %cst_50 : f32 to vector<16x512xf32>
    %132 = arith.mulf %131, %130 : vector<16x512xf32>
    %133 = arith.mulf %120, %132 : vector<16x512xf32>
    %134 = arith.truncf %133 : vector<16x512xf32> to vector<16x512xbf16>
    %c0_51 = arith.constant 0 : index
    %c0_52 = arith.constant 0 : index
    %c0_53 = arith.constant 0 : index
    %135 = vector.load %arg7[%c0_51, %c0_52, %c0_53] : memref<1x512x256xbf16, #tpu.memory_space<vmem>>, vector<1x512x256xbf16>
    %136 = vector.shape_cast %135 : vector<1x512x256xbf16> to vector<512x256xbf16>
    %cst_54 = arith.constant dense<0.000000e+00> : vector<16x256xf32>
    %137 = tpu.matmul %134, %136, %cst_54 {dimension_numbers = #tpu.dot_dimension_numbers<[1], [0], [0], [1], [0, 0, 1, 1], [], []>} : vector<16x512xbf16>, vector<512x256xbf16>, vector<16x256xf32> -> vector<16x256xf32>
    %138 = vector.broadcast %14 : vector<1x256xf32> to vector<16x256xf32>
    %139 = arith.addf %137, %138 : vector<16x256xf32>
    %140 = arith.addf %112, %139 : vector<16x256xf32>
    %cst_55 = arith.constant dense<0.000000e+00> : vector<16xf32>
    %141 = vector.multi_reduction <add>, %140, %cst_55 [1] : vector<16x256xf32> to vector<16xf32>
    %142 = vector.shape_cast %141 : vector<16xf32> to vector<16x1xf32>
    %cst_56 = arith.constant 2.560000e+02 : f32
    %143 = vector.broadcast %cst_56 : f32 to vector<16x1xf32>
    %144 = arith.divf %142, %143 : vector<16x1xf32>
    %145 = vector.broadcast %144 : vector<16x1xf32> to vector<16x256xf32>
    %146 = arith.subf %140, %145 : vector<16x256xf32>
    %147 = arith.mulf %146, %146 : vector<16x256xf32>
    %cst_57 = arith.constant dense<0.000000e+00> : vector<16xf32>
    %148 = vector.multi_reduction <add>, %147, %cst_57 [1] : vector<16x256xf32> to vector<16xf32>
    %149 = vector.shape_cast %148 : vector<16xf32> to vector<16x1xf32>
    %cst_58 = arith.constant 2.560000e+02 : f32
    %150 = vector.broadcast %cst_58 : f32 to vector<16x1xf32>
    %151 = arith.divf %149, %150 : vector<16x1xf32>
    %152 = vector.broadcast %144 : vector<16x1xf32> to vector<16x256xf32>
    %153 = arith.subf %140, %152 : vector<16x256xf32>
    %cst_59 = arith.constant 9.99999996E-13 : f32
    %154 = vector.broadcast %cst_59 : f32 to vector<16x1xf32>
    %155 = arith.addf %151, %154 : vector<16x1xf32>
    %156 = math.rsqrt %155 : vector<16x1xf32>
    %157 = vector.broadcast %156 : vector<16x1xf32> to vector<16x256xf32>
    %158 = arith.mulf %153, %157 : vector<16x256xf32>
    %159 = vector.broadcast %15 : vector<1x256xf32> to vector<16x256xf32>
    %160 = arith.mulf %158, %159 : vector<16x256xf32>
    %161 = vector.broadcast %16 : vector<1x256xf32> to vector<16x256xf32>
    %162 = arith.addf %160, %161 : vector<16x256xf32>
    %163 = vector.shape_cast %162 : vector<16x256xf32> to vector<2x8x256xf32>
    %c0_60 = arith.constant 0 : index
    %c0_61 = arith.constant 0 : index
    %c0_62 = arith.constant 0 : index
    %164 = vector.load %arg13[%c0_60, %c0_61, %c0_62] : memref<2x8x256xf32, #tpu.memory_space<vmem>>, vector<2x8x256xf32>
    tpu.vector_store %arg13[%c0_60, %c0_61, %c0_62], %163 {strides = array<i32>} : memref<2x8x256xf32, #tpu.memory_space<vmem>>, vector<2x8x256xf32>,
    %c1_i32 = arith.constant 1 : i32
    %165 = arith.cmpi eq, %arg0, %c1_i32 : i32
    %166 = arith.extui %165 : i1 to i32
    %c0_i32_63 = arith.constant 0 : i32
    %167 = arith.cmpi ne, %166, %c0_i32_63 : i32
    scf.if %167 {
      %168 = vector.shape_cast %162 : vector<16x256xf32> to vector<2x8x256xf32>
      %169 = vector.extract_strided_slice %168 {offsets = [0, 0, 0], sizes = [2, 1, 256], strides = [1, 1, 1]} : vector<2x8x256xf32> to vector<2x1x256xf32>
      %170 = vector.shape_cast %169 : vector<2x1x256xf32> to vector<2x256xf32>
      %171 = arith.truncf %170 : vector<2x256xf32> to vector<2x256xbf16>
      %c0_64 = arith.constant 0 : index
      %c0_65 = arith.constant 0 : index
      %172 = vector.load %arg8[%c0_64, %c0_65] : memref<256x128xbf16, #tpu.memory_space<vmem>>, vector<256x128xbf16>
      %cst_66 = arith.constant dense<0.000000e+00> : vector<2x128xf32>
      %173 = tpu.matmul %171, %172, %cst_66 {dimension_numbers = #tpu.dot_dimension_numbers<[1], [0], [0], [1], [0, 0, 1, 1], [], []>} : vector<2x256xbf16>, vector<256x128xbf16>, vector<2x128xf32> -> vector<2x128xf32>
      %c0_67 = arith.constant 0 : index
      %c0_68 = arith.constant 0 : index
      %174 = vector.load %arg9[%c0_67, %c0_68] : memref<1x128xf32, #tpu.memory_space<vmem>>, vector<1x128xf32>
      %175 = vector.broadcast %174 : vector<1x128xf32> to vector<2x128xf32>
      %176 = arith.addf %173, %175 : vector<2x128xf32>
      %177 = arith.truncf %176 : vector<2x128xf32> to vector<2x128xbf16>
      %c0_69 = arith.constant 0 : index
      %c0_70 = arith.constant 0 : index
      %178 = vector.load %arg10[%c0_69, %c0_70] : memref<128x128xbf16, #tpu.memory_space<vmem>>, vector<128x128xbf16>
      %cst_71 = arith.constant dense<0.000000e+00> : vector<2x128xf32>
      %179 = tpu.matmul %177, %178, %cst_71 {dimension_numbers = #tpu.dot_dimension_numbers<[1], [0], [0], [1], [0, 0, 1, 1], [], []>} : vector<2x128xbf16>, vector<128x128xbf16>, vector<2x128xf32> -> vector<2x128xf32>
      %c0_72 = arith.constant 0 : index
      %c0_73 = arith.constant 0 : index
      %180 = vector.load %arg11[%c0_72, %c0_73] : memref<1x128xf32, #tpu.memory_space<vmem>>, vector<1x128xf32>
      %181 = vector.broadcast %180 : vector<1x128xf32> to vector<2x128xf32>
      %182 = arith.addf %179, %181 : vector<2x128xf32>
      %c0_74 = arith.constant 0 : index
      %c0_75 = arith.constant 0 : index
      %183 = vector.load %arg12[%c0_74, %c0_75] : memref<2x128xf32, #tpu.memory_space<vmem>>, vector<2x128xf32>
      tpu.vector_store %arg12[%c0_74, %c0_75], %182 {strides = array<i32>} : memref<2x128xf32, #tpu.memory_space<vmem>>, vector<2x128xf32>,
    } else {
    }
    return
  }
  func.func @transform_0(%arg0: i32) -> (i32, i32, i32) {
    %c0_i32 = arith.constant 0 : i32
    %c0_i32_0 = arith.constant 0 : i32
    %c0_i32_1 = arith.constant 0 : i32
    %c0_i32_2 = arith.constant 0 : i32
    return %c0_i32, %c0_i32_0, %c0_i32_1 : i32, i32, i32
  }
  func.func @transform_1(%arg0: i32) -> (i32, i32, i32) {
    %c0_i32 = arith.constant 0 : i32
    %c0_i32_0 = arith.constant 0 : i32
    %c0_i32_1 = arith.constant 0 : i32
    %c0_i32_2 = arith.constant 0 : i32
    return %c0_i32, %c0_i32_0, %c0_i32_1 : i32, i32, i32
  }
  func.func @transform_2(%arg0: i32) -> (i32, i32, i32, i32) {
    %c0_i32 = arith.constant 0 : i32
    %c0_i32_0 = arith.constant 0 : i32
    %c0_i32_1 = arith.constant 0 : i32
    %c0_i32_2 = arith.constant 0 : i32
    return %arg0, %c0_i32, %c0_i32_0, %c0_i32_1 : i32, i32, i32, i32
  }
  func.func @transform_3(%arg0: i32) -> (i32, i32, i32) {
    %c0_i32 = arith.constant 0 : i32
    %c0_i32_0 = arith.constant 0 : i32
    %c0_i32_1 = arith.constant 0 : i32
    return %arg0, %c0_i32, %c0_i32_0 : i32, i32, i32
  }
  func.func @transform_4(%arg0: i32) -> (i32, i32, i32) {
    %c0_i32 = arith.constant 0 : i32
    %c0_i32_0 = arith.constant 0 : i32
    %c0_i32_1 = arith.constant 0 : i32
    return %arg0, %c0_i32, %c0_i32_0 : i32, i32, i32
  }
  func.func @transform_5(%arg0: i32) -> (i32, i32, i32) {
    %c0_i32 = arith.constant 0 : i32
    %c0_i32_0 = arith.constant 0 : i32
    %c0_i32_1 = arith.constant 0 : i32
    return %arg0, %c0_i32, %c0_i32_0 : i32, i32, i32
  }
  func.func @transform_6(%arg0: i32) -> (i32, i32, i32) {
    %c0_i32 = arith.constant 0 : i32
    %c0_i32_0 = arith.constant 0 : i32
    %c0_i32_1 = arith.constant 0 : i32
    return %arg0, %c0_i32, %c0_i32_0 : i32, i32, i32
  }
  func.func @transform_7(%arg0: i32) -> (i32, i32) {
    %c0_i32 = arith.constant 0 : i32
    %c0_i32_0 = arith.constant 0 : i32
    %c0_i32_1 = arith.constant 0 : i32
    return %c0_i32, %c0_i32_0 : i32, i32
  }
  func.func @transform_8(%arg0: i32) -> (i32, i32) {
    %c0_i32 = arith.constant 0 : i32
    %c0_i32_0 = arith.constant 0 : i32
    %c0_i32_1 = arith.constant 0 : i32
    return %c0_i32, %c0_i32_0 : i32, i32
  }
  func.func @transform_9(%arg0: i32) -> (i32, i32) {
    %c0_i32 = arith.constant 0 : i32
    %c0_i32_0 = arith.constant 0 : i32
    %c0_i32_1 = arith.constant 0 : i32
    return %c0_i32, %c0_i32_0 : i32, i32
  }
  func.func @transform_10(%arg0: i32) -> (i32, i32) {
    %c0_i32 = arith.constant 0 : i32
    %c0_i32_0 = arith.constant 0 : i32
    %c0_i32_1 = arith.constant 0 : i32
    return %c0_i32, %c0_i32_0 : i32, i32
  }
  func.func @transform_11(%arg0: i32) -> (i32, i32) {
    %c0_i32 = arith.constant 0 : i32
    %c0_i32_0 = arith.constant 0 : i32
    %c0_i32_1 = arith.constant 0 : i32
    return %c0_i32, %c0_i32_0 : i32, i32
  }
}

</mosaic_0001>

<llo_original>
// kernel: tpu_custom_call.1
$region0: #{tpu_custom_call.1}
  #allocation0 [shape = 'u32[]', space=smem, size = 0x4, offset = 0x4, fixed_abs, tag = 'smem constant byte address 0x4 - core index']
  #allocation1 [shape = 'u32[144,128]{1,0:T(1,128)}', space=vmem, size = 0x12000, scoped, tag = 'internal scratch']
  #allocation2 [shape = 'f32[2,8,256]{2,1,0:T(8,128)}', space=vmem, size = 0x4000, scoped, tag = 'scratch operand']
  %s0 = inlined_call_operand.vmem [shape: f32[2,8,256], index: 0, kind: input, shape index: {}]
  %s1 = inlined_call_operand.vmem [shape: f32[2,1,8], index: 1, kind: input, shape index: {}]
  %s2 = inlined_call_operand.hbm [shape: bf16[2,4,256,256], index: 2, kind: input, shape index: {}]
  %s3 = inlined_call_operand.vmem [shape: f32[2,9,256], index: 3, kind: input, shape index: {}]
  %s4 = inlined_call_operand.hbm [shape: bf16[2,256,512], index: 4, kind: input, shape index: {}]
  %s5 = inlined_call_operand.vmem [shape: f32[2,1,512], index: 5, kind: input, shape index: {}]
  %s6 = inlined_call_operand.hbm [shape: bf16[2,512,256], index: 6, kind: input, shape index: {}]
  %s7 = inlined_call_operand.hbm [shape: bf16[256,128], index: 7, kind: input, shape index: {}]
  %s8 = inlined_call_operand.vmem [shape: f32[1,128], index: 8, kind: input, shape index: {}]
  %s9 = inlined_call_operand.vmem [shape: bf16[128,128], index: 9, kind: input, shape index: {}]
  %s10 = inlined_call_operand.vmem [shape: f32[1,128], index: 10, kind: input, shape index: {}]
  %s11 = inlined_call_operand.hbm [shape: f32[2,128], index: 11, kind: output, shape index: {}]
  %s12 = sld [smem:[#allocation0]]
  $region101: #{tpu_custom_call.1} parent=0
    _
  %s14 = ssub.s32 1, %s12
  %s15 = scalar_select 0, %s14, %s12
  $region1: #{tpu_custom_call.1} parent=0
    #allocation3 [shape = 'u8[1048576]{0}', space=vmem, size = 0x100000, scoped, tag = 'input window, operand 2']
    #allocation4 [shape = 's32[2]{0}', space=sflag, size = 0x8, scoped, tag = 'scoped memory for tpu_custom_call.1']
    #allocation5 [shape = 's32[2]{0}', space=sflag, size = 0x8, scoped, tag = 'scoped memory for tpu_custom_call.1']
    #allocation6 [shape = 'u8[524288]{0}', space=vmem, size = 0x80000, scoped, tag = 'input window, operand 4']
    #allocation7 [shape = 's32[2]{0}', space=sflag, size = 0x8, scoped, tag = 'scoped memory for tpu_custom_call.1']
    #allocation8 [shape = 'u8[524288]{0}', space=vmem, size = 0x80000, scoped, tag = 'input window, operand 6']
    #allocation9 [shape = 'u8[65536]{0}', space=vmem, size = 0x10000, scoped, tag = 'input window, operand 7, single buffered']
    #allocation10 [shape = 's32[1]{0}', space=sflag, size = 0x4, scoped, tag = 'scoped memory for tpu_custom_call.1']
    #allocation11 [shape = 'u8[1024]{0}', space=vmem, size = 0x400, scoped, tag = 'output window, operand 0, single buffered']
    %16 = vsyncpa [#allocation4], 0
    %s17 = scalar_lea.sflag [#allocation4], 1
    %18 = vsyncpa %s17, 0
    %19 = vsyncpa [#allocation7], 0
    %s20 = scalar_lea.sflag [#allocation7], 1
    %21 = vsyncpa %s20, 0
    %22 = vsyncpa [#allocation10], 0
    %23 = vsyncpa [#allocation5], 0
    loop: start=0, step=1, limit=4
    $region2: #{tpu_custom_call.1} parent=1 // loop_pre_header
      _
    $region3: #{tpu_custom_call.1} parent=1 // loop_header
      %s25 = sphi 0, %s29
      %p26 = scmp.ge.s32.totalorder %s25, 4
      %s33 = sphi 0, %s33
      %s35 = sphi 0, %s33
      %s36 = sphi 0, %s35
      %s50 = sphi 0, %s36
      %s54 = sphi 0, %s54
      %s56 = sphi 0, %s54
      %s57 = sphi 0, %s56
      %s71 = sphi 0, %s57
      %s77 = sphi 0, %s79
      %s80 = sphi 0, %s77
      %s81 = sphi 0, %s80
      %s97 = sphi 0, %s81
      %s103 = sphi 0, %s105
      %s106 = sphi 0, %s103
      %s107 = sphi 0, %s106
      %s123 = sphi 0, %s107
      %s129 = sphi 0, %s131
      %s132 = sphi 0, %s129
      %s133 = sphi 0, %s132
      %s149 = sphi 0, %s133
      %s155 = sphi 0, %s157
      %s158 = sphi 0, %s155
      %s159 = sphi 0, %s158
      %s175 = sphi 0, %s159
      %s181 = sphi 0, %s183
      %s184 = sphi 0, %s181
      %s185 = sphi 0, %s184
      %s201 = sphi 0, %s185
      %s205 = sphi 0, %s205
      %s207 = sphi 0, %s205
      %s208 = sphi 0, %s207
      %s222 = sphi 0, %s208
      %s226 = sphi 0, %s226
      %s228 = sphi 0, %s226
      %s229 = sphi 0, %s228
      %s243 = sphi 0, %s229
      %s247 = sphi 0, %s247
      %s249 = sphi 0, %s247
      %s250 = sphi 0, %s249
      %s264 = sphi 0, %s250
      %s268 = sphi 0, %s268
      %s270 = sphi 0, %s268
      %s271 = sphi 0, %s270
      %s285 = sphi 0, %s271
      %s289 = sphi 0, %s289
      %s291 = sphi 0, %s289
      %s292 = sphi 0, %s291
      %s306 = sphi 0, %s292
    $region4: #{tpu_custom_call.1} parent=1 // loop_header_branch
      %28 = sbr.rel (%p26) target = $region8
    $region5: #{tpu_custom_call.1} parent=1 // loop_body
      %s30 = ssub.s32 %s25, 1
      %s31 = ssub.s32 %s25, 2
      %s32 = sadd.s32 %s25, 1
      %s34 = sadd.s32 %s33, 1
      %p37 = scmp.eq.s32.totalorder %s25, 1
      %p38 = scmp.ne.s32.totalorder %s33, %s35
      %p39 = scmp.eq.s32.totalorder %s25, 0
      %p40 = por %p38, %p39
      %p41 = scmp.ne.s32.totalorder %s33, %s35
      %p42 = scmp.eq.s32.totalorder %s30, 1
      %p43 = por %p41, %p42
      %p44 = scmp.ne.s32.totalorder %s35, %s36
      %p45 = scmp.eq.s32.totalorder %s30, 0
      %p46 = por %p44, %p45
      %p47 = scmp.ne.s32.totalorder %s35, %s36
      %p48 = scmp.eq.s32.totalorder %s31, 1
      %p49 = por %p47, %p48
      %p51 = scmp.ne.s32.totalorder %s36, %s50
      %p52 = scmp.eq.s32.totalorder %s31, 0
      %p53 = por %p51, %p52
      %s55 = sadd.s32 %s54, 1
      %p58 = scmp.eq.s32.totalorder %s25, 1
      %p59 = scmp.ne.s32.totalorder %s54, %s56
      %p60 = scmp.eq.s32.totalorder %s25, 0
      %p61 = por %p59, %p60
      %p62 = scmp.ne.s32.totalorder %s54, %s56
      %p63 = scmp.eq.s32.totalorder %s30, 1
      %p64 = por %p62, %p63
      %p65 = scmp.ne.s32.totalorder %s56, %s57
      %p66 = scmp.eq.s32.totalorder %s30, 0
      %p67 = por %p65, %p66
      %p68 = scmp.ne.s32.totalorder %s56, %s57
      %p69 = scmp.eq.s32.totalorder %s31, 1
      %p70 = por %p68, %p69
      %p72 = scmp.ne.s32.totalorder %s57, %s71
      %p73 = scmp.eq.s32.totalorder %s31, 0
      %p74 = por %p72, %p73
      %s75 = ssub.s32 %s25, %s32
      %p76 = scmp.eq.s32.totalorder %s75, 0
      %s78 = sadd.s32 %s77, 1
      %s79 = scalar_select %p76, %s77, %s78
      %p82 = pneg %p76
      %p83 = scmp.eq.s32.totalorder %s25, 1
      %p84 = por %p82, %p83
      %p85 = scmp.ne.s32.totalorder %s77, %s80
      %p86 = scmp.eq.s32.totalorder %s25, 0
      %p87 = por %p85, %p86
      %p88 = scmp.ne.s32.totalorder %s77, %s80
      %p89 = scmp.eq.s32.totalorder %s30, 1
      %p90 = por %p88, %p89
      %p91 = scmp.ne.s32.totalorder %s80, %s81
      %p92 = scmp.eq.s32.totalorder %s30, 0
      %p93 = por %p91, %p92
      %p94 = scmp.ne.s32.totalorder %s80, %s81
      %p95 = scmp.eq.s32.totalorder %s31, 1
      %p96 = por %p94, %p95
      %p98 = scmp.ne.s32.totalorder %s81, %s97
      %p99 = scmp.eq.s32.totalorder %s31, 0
      %p100 = por %p98, %p99
      %s101 = ssub.s32 %s25, %s32
      %p102 = scmp.eq.s32.totalorder %s101, 0
      %s104 = sadd.s32 %s103, 1
      %s105 = scalar_select %p102, %s103, %s104
      %p108 = pneg %p102
      %p109 = scmp.eq.s32.totalorder %s25, 1
      %p110 = por %p108, %p109
      %p111 = scmp.ne.s32.totalorder %s103, %s106
      %p112 = scmp.eq.s32.totalorder %s25, 0
      %p113 = por %p111, %p112
      %p114 = scmp.ne.s32.totalorder %s103, %s106
      %p115 = scmp.eq.s32.totalorder %s30, 1
      %p116 = por %p114, %p115
      %p117 = scmp.ne.s32.totalorder %s106, %s107
      %p118 = scmp.eq.s32.totalorder %s30, 0
      %p119 = por %p117, %p118
      %p120 = scmp.ne.s32.totalorder %s106, %s107
      %p121 = scmp.eq.s32.totalorder %s31, 1
      %p122 = por %p120, %p121
      %p124 = scmp.ne.s32.totalorder %s107, %s123
      %p125 = scmp.eq.s32.totalorder %s31, 0
      %p126 = por %p124, %p125
      %s127 = ssub.s32 %s25, %s32
      %p128 = scmp.eq.s32.totalorder %s127, 0
      %s130 = sadd.s32 %s129, 1
      %s131 = scalar_select %p128, %s129, %s130
      %p134 = pneg %p128
      %p135 = scmp.eq.s32.totalorder %s25, 1
      %p136 = por %p134, %p135
      %p137 = scmp.ne.s32.totalorder %s129, %s132
      %p138 = scmp.eq.s32.totalorder %s25, 0
      %p139 = por %p137, %p138
      %p140 = scmp.ne.s32.totalorder %s129, %s132
      %p141 = scmp.eq.s32.totalorder %s30, 1
      %p142 = por %p140, %p141
      %p143 = scmp.ne.s32.totalorder %s132, %s133
      %p144 = scmp.eq.s32.totalorder %s30, 0
      %p145 = por %p143, %p144
      %p146 = scmp.ne.s32.totalorder %s132, %s133
      %p147 = scmp.eq.s32.totalorder %s31, 1
      %p148 = por %p146, %p147
      %p150 = scmp.ne.s32.totalorder %s133, %s149
      %p151 = scmp.eq.s32.totalorder %s31, 0
      %p152 = por %p150, %p151
      %s153 = ssub.s32 %s25, %s32
      %p154 = scmp.eq.s32.totalorder %s153, 0
      %s156 = sadd.s32 %s155, 1
      %s157 = scalar_select %p154, %s155, %s156
      %p160 = pneg %p154
      %p161 = scmp.eq.s32.totalorder %s25, 1
      %p162 = por %p160, %p161
      %p163 = scmp.ne.s32.totalorder %s155, %s158
      %p164 = scmp.eq.s32.totalorder %s25, 0
      %p165 = por %p163, %p164
      %p166 = scmp.ne.s32.totalorder %s155, %s158
      %p167 = scmp.eq.s32.totalorder %s30, 1
      %p168 = por %p166, %p167
      %p169 = scmp.ne.s32.totalorder %s158, %s159
      %p170 = scmp.eq.s32.totalorder %s30, 0
      %p171 = por %p169, %p170
      %p172 = scmp.ne.s32.totalorder %s158, %s159
      %p173 = scmp.eq.s32.totalorder %s31, 1
      %p174 = por %p172, %p173
      %p176 = scmp.ne.s32.totalorder %s159, %s175
      %p177 = scmp.eq.s32.totalorder %s31, 0
      %p178 = por %p176, %p177
      %s179 = ssub.s32 %s25, %s32
      %p180 = scmp.eq.s32.totalorder %s179, 0
      %s182 = sadd.s32 %s181, 1
      %s183 = scalar_select %p180, %s181, %s182
      %p186 = pneg %p180
      %p187 = scmp.eq.s32.totalorder %s25, 1
      %p188 = por %p186, %p187
      %p189 = scmp.ne.s32.totalorder %s181, %s184
      %p190 = scmp.eq.s32.totalorder %s25, 0
      %p191 = por %p189, %p190
      %p192 = scmp.ne.s32.totalorder %s181, %s184
      %p193 = scmp.eq.s32.totalorder %s30, 1
      %p194 = por %p192, %p193
      %p195 = scmp.ne.s32.totalorder %s184, %s185
      %p196 = scmp.eq.s32.totalorder %s30, 0
      %p197 = por %p195, %p196
      %p198 = scmp.ne.s32.totalorder %s184, %s185
      %p199 = scmp.eq.s32.totalorder %s31, 1
      %p200 = por %p198, %p199
      %p202 = scmp.ne.s32.totalorder %s185, %s201
      %p203 = scmp.eq.s32.totalorder %s31, 0
      %p204 = por %p202, %p203
      %s206 = sadd.s32 %s205, 1
      %p209 = scmp.eq.s32.totalorder %s25, 1
      %p210 = scmp.ne.s32.totalorder %s205, %s207
      %p211 = scmp.eq.s32.totalorder %s25, 0
      %p212 = por %p210, %p211
      %p213 = scmp.ne.s32.totalorder %s205, %s207
      %p214 = scmp.eq.s32.totalorder %s30, 1
      %p215 = por %p213, %p214
      %p216 = scmp.ne.s32.totalorder %s207, %s208
      %p217 = scmp.eq.s32.totalorder %s30, 0
      %p218 = por %p216, %p217
      %p219 = scmp.ne.s32.totalorder %s207, %s208
      %p220 = scmp.eq.s32.totalorder %s31, 1
      %p221 = por %p219, %p220
      %p223 = scmp.ne.s32.totalorder %s208, %s222
      %p224 = scmp.eq.s32.totalorder %s31, 0
      %p225 = por %p223, %p224
      %s227 = sadd.s32 %s226, 1
      %p230 = scmp.eq.s32.totalorder %s25, 1
      %p231 = scmp.ne.s32.totalorder %s226, %s228
      %p232 = scmp.eq.s32.totalorder %s25, 0
      %p233 = por %p231, %p232
      %p234 = scmp.ne.s32.totalorder %s226, %s228
      %p235 = scmp.eq.s32.totalorder %s30, 1
      %p236 = por %p234, %p235
      %p237 = scmp.ne.s32.totalorder %s228, %s229
      %p238 = scmp.eq.s32.totalorder %s30, 0
      %p239 = por %p237, %p238
      %p240 = scmp.ne.s32.totalorder %s228, %s229
      %p241 = scmp.eq.s32.totalorder %s31, 1
      %p242 = por %p240, %p241
      %p244 = scmp.ne.s32.totalorder %s229, %s243
      %p245 = scmp.eq.s32.totalorder %s31, 0
      %p246 = por %p244, %p245
      %s248 = sadd.s32 %s247, 1
      %p251 = scmp.eq.s32.totalorder %s25, 1
      %p252 = scmp.ne.s32.totalorder %s247, %s249
      %p253 = scmp.eq.s32.totalorder %s25, 0
      %p254 = por %p252, %p253
      %p255 = scmp.ne.s32.totalorder %s247, %s249
      %p256 = scmp.eq.s32.totalorder %s30, 1
      %p257 = por %p255, %p256
      %p258 = scmp.ne.s32.totalorder %s249, %s250
      %p259 = scmp.eq.s32.totalorder %s30, 0
      %p260 = por %p258, %p259
      %p261 = scmp.ne.s32.totalorder %s249, %s250
      %p262 = scmp.eq.s32.totalorder %s31, 1
      %p263 = por %p261, %p262
      %p265 = scmp.ne.s32.totalorder %s250, %s264
      %p266 = scmp.eq.s32.totalorder %s31, 0
      %p267 = por %p265, %p266
      %s269 = sadd.s32 %s268, 1
      %p272 = scmp.eq.s32.totalorder %s25, 1
      %p273 = scmp.ne.s32.totalorder %s268, %s270
      %p274 = scmp.eq.s32.totalorder %s25, 0
      %p275 = por %p273, %p274
      %p276 = scmp.ne.s32.totalorder %s268, %s270
      %p277 = scmp.eq.s32.totalorder %s30, 1
      %p278 = por %p276, %p277
      %p279 = scmp.ne.s32.totalorder %s270, %s271
      %p280 = scmp.eq.s32.totalorder %s30, 0
      %p281 = por %p279, %p280
      %p282 = scmp.ne.s32.totalorder %s270, %s271
      %p283 = scmp.eq.s32.totalorder %s31, 1
      %p284 = por %p282, %p283
      %p286 = scmp.ne.s32.totalorder %s271, %s285
      %p287 = scmp.eq.s32.totalorder %s31, 0
      %p288 = por %p286, %p287
      %s290 = sadd.s32 %s289, 1
      %p293 = scmp.eq.s32.totalorder %s25, 1
      %p294 = scmp.ne.s32.totalorder %s289, %s291
      %p295 = scmp.eq.s32.totalorder %s25, 0
      %p296 = por %p294, %p295
      %p297 = scmp.ne.s32.totalorder %s289, %s291
      %p298 = scmp.eq.s32.totalorder %s30, 1
      %p299 = por %p297, %p298
      %p300 = scmp.ne.s32.totalorder %s291, %s292
      %p301 = scmp.eq.s32.totalorder %s30, 0
      %p302 = por %p300, %p301
      %p303 = scmp.ne.s32.totalorder %s291, %s292
      %p304 = scmp.eq.s32.totalorder %s31, 1
      %p305 = por %p303, %p304
      %p307 = scmp.ne.s32.totalorder %s292, %s306
      %p308 = scmp.eq.s32.totalorder %s31, 0
      %p309 = por %p307, %p308
      %p310 = scmp.le.s32.totalorder 1, %s25
      %p311 = scmp.lt.s32.totalorder %s25, 3
      %p312 = pnand %p310, %p311
      %p313 = pneg %p312
      // Predicated region
      $region9: #{tpu_custom_call.1} parent=5 // pred_check
        _
      $region10: #{tpu_custom_call.1} parent=5 // pred_check_branch
        %315 = sbr.rel (%p312) target = $region12
      $region11: #{tpu_custom_call.1} parent=5 // pred_region
        %s316 = ssub.s32 %s25, 1
        // Predicated region
        $region13: #{tpu_custom_call.1} parent=11 // pred_check
          %p317 = pneg %p46
        $region14: #{tpu_custom_call.1} parent=11 // pred_check_branch
          %319 = sbr.rel (%p317) target = $region16
        $region15: #{tpu_custom_call.1} parent=11 // pred_region
          _
        $region16: #{tpu_custom_call.1} parent=11 // pred_fallthru
          _
        // Predicated region
        $region17: #{tpu_custom_call.1} parent=11 // pred_check
          %p320 = pneg %p67
        $region18: #{tpu_custom_call.1} parent=11 // pred_check_branch
          %322 = sbr.rel (%p320) target = $region20
        $region19: #{tpu_custom_call.1} parent=11 // pred_region
          _
        $region20: #{tpu_custom_call.1} parent=11 // pred_fallthru
          _
        // Predicated region
        $region21: #{tpu_custom_call.1} parent=11 // pred_check
          %p323 = pneg %p218
        $region22: #{tpu_custom_call.1} parent=11 // pred_check_branch
          %325 = sbr.rel (%p323) target = $region24
        $region23: #{tpu_custom_call.1} parent=11 // pred_region
          %s327 = ssub.s32 2048, 2048
          %328 = vsyncadd [#allocation10], %s327
          %s329 = sshll.u32 [#allocation9], 4
          %s330 = int_to_ptr.vmem [resolvable:$true] %s329
          %335 = dma.hbm_to_vmem [thread:$0]  %s7, 2048, %s330, [#allocation10], 64, 64, 4
        $region24: #{tpu_custom_call.1} parent=11 // pred_fallthru
          _
        // Predicated region
        $region25: #{tpu_custom_call.1} parent=11 // pred_check
          %p336 = pneg %p239
        $region26: #{tpu_custom_call.1} parent=11 // pred_check_branch
          %338 = sbr.rel (%p336) target = $region28
        $region27: #{tpu_custom_call.1} parent=11 // pred_region
          _
        $region28: #{tpu_custom_call.1} parent=11 // pred_fallthru
          _
        // Predicated region
        $region29: #{tpu_custom_call.1} parent=11 // pred_check
          %p339 = pneg %p260
        $region30: #{tpu_custom_call.1} parent=11 // pred_check_branch
          %341 = sbr.rel (%p339) target = $region32
        $region31: #{tpu_custom_call.1} parent=11 // pred_region
          _
        $region32: #{tpu_custom_call.1} parent=11 // pred_fallthru
          _
        // Predicated region
        $region33: #{tpu_custom_call.1} parent=11 // pred_check
          %p342 = pneg %p281
        $region34: #{tpu_custom_call.1} parent=11 // pred_check_branch
          %344 = sbr.rel (%p342) target = $region36
        $region35: #{tpu_custom_call.1} parent=11 // pred_region
          _
        $region36: #{tpu_custom_call.1} parent=11 // pred_fallthru
          _
      $region12: #{tpu_custom_call.1} parent=5 // pred_fallthru
        _
      %p345 = scmp.lt.s32.totalorder %s25, 2
      // Predicated region
      $region37: #{tpu_custom_call.1} parent=5 // pred_check
        %p346 = pneg %p345
      $region38: #{tpu_custom_call.1} parent=5 // pred_check_branch
        %348 = sbr.rel (%p346) target = $region40
      $region39: #{tpu_custom_call.1} parent=5 // pred_region
        // Predicated region
        $region41: #{tpu_custom_call.1} parent=39 // pred_check
          %p349 = pneg %p87
        $region42: #{tpu_custom_call.1} parent=39 // pred_check_branch
          %351 = sbr.rel (%p349) target = $region44
        $region43: #{tpu_custom_call.1} parent=39 // pred_region
          %s352 = sand.u32 %s77, 1
          %s353 = scalar_lea.sflag [#allocation4], %s352
          %s354 = sand.u32 %s77, 1
          %s355 = smul.addr %s354, 1024
          %s356 = scalar_lea.vmem [#allocation3], %s355
          %s358 = ssub.s32 16384, 16384
          %359 = vsyncadd %s353, %s358
          %s360 = smul.addr %s25, 256
          %s361 = smul.addr %s360, 64
          %s362 = scalar_lea.hbm %s2, %s361
          %s363 = sshll.u32 %s356, 4
          %s364 = int_to_ptr.vmem [resolvable:$true] %s363
          %369 = dma.hbm_to_vmem [thread:$0]  %s362, 16384, %s364, %s353, 128, 128, 8
        $region44: #{tpu_custom_call.1} parent=39 // pred_fallthru
          _
        // Predicated region
        $region45: #{tpu_custom_call.1} parent=39 // pred_check
          %p370 = pneg %p113
        $region46: #{tpu_custom_call.1} parent=39 // pred_check_branch
          %372 = sbr.rel (%p370) target = $region48
        $region47: #{tpu_custom_call.1} parent=39 // pred_region
          %p373 = scmp.lt.s32.totalorder %s25, 1
          %s374 = scalar_select %p373, %s25, 1
          %s375 = smul.addr %s374, 4
          %s376 = smul.addr %s375, 8
          %s377 = scalar_lea.vmem %s3, %s376
        $region48: #{tpu_custom_call.1} parent=39 // pred_fallthru
          _
        // Predicated region
        $region49: #{tpu_custom_call.1} parent=39 // pred_check
          %p378 = pneg %p139
        $region50: #{tpu_custom_call.1} parent=39 // pred_check_branch
          %380 = sbr.rel (%p378) target = $region52
        $region51: #{tpu_custom_call.1} parent=39 // pred_region
          %s381 = sand.u32 %s25, 1
          %s382 = scalar_lea.sflag [#allocation7], %s381
          %s383 = sand.u32 %s129, 1
          %s384 = smul.addr %s383, 512
          %s385 = scalar_lea.vmem [#allocation6], %s384
          %s387 = ssub.s32 8192, 8192
          %388 = vsyncadd %s382, %s387
          %s389 = smul.addr %s25, 128
          %s390 = smul.addr %s389, 64
          %s391 = scalar_lea.hbm %s4, %s390
          %s392 = sshll.u32 %s385, 4
          %s393 = int_to_ptr.vmem [resolvable:$true] %s392
          %398 = dma.hbm_to_vmem [thread:$0]  %s391, 8192, %s393, %s382, 256, 256, 16
        $region52: #{tpu_custom_call.1} parent=39 // pred_fallthru
          _
        // Predicated region
        $region53: #{tpu_custom_call.1} parent=39 // pred_check
          %p399 = pneg %p165
        $region54: #{tpu_custom_call.1} parent=39 // pred_check_branch
          %401 = sbr.rel (%p399) target = $region56
        $region55: #{tpu_custom_call.1} parent=39 // pred_region
          %p402 = scmp.lt.s32.totalorder %s25, 1
          %s403 = scalar_select %p402, %s25, 1
          %s404 = smul.addr %s403, 4
          %s405 = scalar_lea.vmem %s5, %s404
        $region56: #{tpu_custom_call.1} parent=39 // pred_fallthru
          _
        // Predicated region
        $region57: #{tpu_custom_call.1} parent=39 // pred_check
          %p406 = pneg %p191
        $region58: #{tpu_custom_call.1} parent=39 // pred_check_branch
          %408 = sbr.rel (%p406) target = $region60
        $region59: #{tpu_custom_call.1} parent=39 // pred_region
          %s409 = sand.u32 %s25, 1
          %s410 = scalar_lea.sflag [#allocation7], %s409
          %s411 = sand.u32 %s181, 1
          %s412 = smul.addr %s411, 512
          %s413 = scalar_lea.vmem [#allocation8], %s412
          %s415 = ssub.s32 8192, 8192
          %416 = vsyncadd %s410, %s415
          %s417 = smul.addr %s25, 128
          %s418 = smul.addr %s417, 64
          %s419 = scalar_lea.hbm %s6, %s418
          %s420 = sshll.u32 %s413, 4
          %s421 = int_to_ptr.vmem [resolvable:$true] %s420
          %426 = dma.hbm_to_vmem [thread:$0]  %s419, 8192, %s421, %s410, 128, 128, 8
        $region60: #{tpu_custom_call.1} parent=39 // pred_fallthru
          _
      $region40: #{tpu_custom_call.1} parent=5 // pred_fallthru
        _
      %p427 = scmp.le.s32.totalorder 1, %s25
      %p428 = scmp.lt.s32.totalorder %s25, 3
      %p429 = pnand %p427, %p428
      %p430 = pneg %p429
      // Predicated region
      $region61: #{tpu_custom_call.1} parent=5 // pred_check
        _
      $region62: #{tpu_custom_call.1} parent=5 // pred_check_branch
        %432 = sbr.rel (%p429) target = $region64
      $region63: #{tpu_custom_call.1} parent=5 // pred_region
        %s433 = ssub.s32 %s25, 1
        %s434 = sand.u32 %s80, 1
        %s435 = scalar_lea.sflag [#allocation4], %s434
        %s436 = sand.u32 %s80, 1
        %s437 = smul.addr %s436, 1024
        %s438 = scalar_lea.vmem [#allocation3], %s437
        // Predicated region
        $region65: #{tpu_custom_call.1} parent=63 // pred_check
          %p439 = pneg %p93
        $region66: #{tpu_custom_call.1} parent=63 // pred_check_branch
          %441 = sbr.rel (%p439) target = $region68
        $region67: #{tpu_custom_call.1} parent=63 // pred_region
          %442 = dma.done %s435, 16384
        $region68: #{tpu_custom_call.1} parent=63 // pred_fallthru
          _
        %s443 = sand.u32 %s30, 1
        %s444 = scalar_lea.sflag [#allocation7], %s443
        %s445 = sand.u32 %s132, 1
        %s446 = smul.addr %s445, 512
        %s447 = scalar_lea.vmem [#allocation6], %s446
        // Predicated region
        $region69: #{tpu_custom_call.1} parent=63 // pred_check
          %p448 = pneg %p145
        $region70: #{tpu_custom_call.1} parent=63 // pred_check_branch
          %450 = sbr.rel (%p448) target = $region72
        $region71: #{tpu_custom_call.1} parent=63 // pred_region
          %451 = dma.done %s444, 8192
        $region72: #{tpu_custom_call.1} parent=63 // pred_fallthru
          _
        %s452 = sand.u32 %s30, 1
        %s453 = scalar_lea.sflag [#allocation7], %s452
        %s454 = sand.u32 %s184, 1
        %s455 = smul.addr %s454, 512
        %s456 = scalar_lea.vmem [#allocation8], %s455
        // Predicated region
        $region73: #{tpu_custom_call.1} parent=63 // pred_check
          %p457 = pneg %p197
        $region74: #{tpu_custom_call.1} parent=63 // pred_check_branch
          %459 = sbr.rel (%p457) target = $region76
        $region75: #{tpu_custom_call.1} parent=63 // pred_region
          %460 = dma.done %s453, 8192
        $region76: #{tpu_custom_call.1} parent=63 // pred_fallthru
          _
        // Predicated region
        $region77: #{tpu_custom_call.1} parent=63 // pred_check
          %p461 = pneg %p218
        $region78: #{tpu_custom_call.1} parent=63 // pred_check_branch
          %463 = sbr.rel (%p461) target = $region80
        $region79: #{tpu_custom_call.1} parent=63 // pred_region
          %464 = dma.done [#allocation10], 2048
        $region80: #{tpu_custom_call.1} parent=63 // pred_fallthru
          _
        %p465 = pneg %p46
        %p466 = pneg %p43
        %p467 = pneg %p67
        %p468 = pneg %p64
        %s469 = sand.u32 %s80, 1
        %s470 = scalar_lea.sflag [#allocation4], %s469
        %s471 = sand.u32 %s80, 1
        %s472 = smul.addr %s471, 1024
        %s473 = scalar_lea.vmem [#allocation3], %s472
        %p474 = pneg %p93
        %p475 = pneg %p90
        %p476 = scmp.lt.s32.totalorder %s30, 1
        %s477 = scalar_select %p476, %s30, 1
        %s478 = smul.addr %s477, 4
        %s479 = smul.addr %s478, 8
        %s480 = scalar_lea.vmem %s3, %s479
        %p481 = pneg %p119
        %p482 = pneg %p116
        %s483 = sand.u32 %s30, 1
        %s484 = scalar_lea.sflag [#allocation7], %s483
        %s485 = sand.u32 %s132, 1
        %s486 = smul.addr %s485, 512
        %s487 = scalar_lea.vmem [#allocation6], %s486
        %p488 = pneg %p145
        %p489 = pneg %p142
        %p490 = scmp.lt.s32.totalorder %s30, 1
        %s491 = scalar_select %p490, %s30, 1
        %s492 = smul.addr %s491, 4
        %s493 = scalar_lea.vmem %s5, %s492
        %p494 = pneg %p171
        %p495 = pneg %p168
        %s496 = sand.u32 %s30, 1
        %s497 = scalar_lea.sflag [#allocation7], %s496
        %s498 = sand.u32 %s184, 1
        %s499 = smul.addr %s498, 512
        %s500 = scalar_lea.vmem [#allocation8], %s499
        %p501 = pneg %p197
        %p502 = pneg %p194
        %p503 = pneg %p218
        %p504 = pneg %p215
        %p505 = pneg %p239
        %p506 = pneg %p236
        %p507 = pneg %p260
        %p508 = pneg %p257
        %p509 = pneg %p281
        %p510 = pneg %p278
        %p511 = pneg %p302
        %p512 = pneg %p299
        %p513 = scmp.lt.s32.totalorder %s30, 1
        %s514 = scalar_select %p513, %s30, 1
        %s515 = smul.addr %s514, 4
        %s516 = smul.addr %s515, 8
        %s517 = scalar_lea.vmem %s3, %s516
        %p518 = scmp.lt.s32.totalorder %s30, 1
        %s519 = scalar_select %p518, %s30, 1
        %s520 = smul.addr %s519, 4
        %s521 = scalar_lea.vmem %s5, %s520
        %p523 = scmp.eq.s32.totalorder %s30, 0
        // Predicated region
        $region81: #{tpu_custom_call.1} parent=63 // pred_check
          %p524 = pneg %p523
        $region82: #{tpu_custom_call.1} parent=63 // pred_check_branch
          %526 = sbr.rel (%p524) target = $region84
        $region83: #{tpu_custom_call.1} parent=63 // pred_region
          %v527 = vld [vmem:[%s0] sm:$0xff]
          %v528 = vld [vmem:[%s0 + $0x8] sm:$0xff]
          %v529 = vld [vmem:[%s0 + $0x10] sm:$0xff]
          %v530 = vld [vmem:[%s0 + $0x18] sm:$0xff]
          %531 = vst [vmem:[#allocation2] sm:$0xff] %v527
          %532 = vst [vmem:[#allocation2 + $0x8] sm:$0xff] %v528
          %533 = vst [vmem:[#allocation2 + $0x10] sm:$0xff] %v529
          %534 = vst [vmem:[#allocation2 + $0x18] sm:$0xff] %v530
        $region84: #{tpu_custom_call.1} parent=63 // pred_fallthru
          _
        %v535 = vld [vmem:[#allocation2] sm:$0xff]
        %v536 = vld [vmem:[#allocation2 + $0x8] sm:$0xff]
        %v537 = vld [vmem:[#allocation2 + $0x10] sm:$0xff]
        %v538 = vld [vmem:[#allocation2 + $0x18] sm:$0xff]
        %v539 = vpack.c.bf16 %v537, %v535
        %v540 = vpack.c.bf16 %v538, %v536
        %v541 = vld [vmem:[%s517] sm:$0xff]
        %v542 = vld [vmem:[%s517 + $0x8] sm:$0xff]
        %v543 = vld [vmem:[%s517 + $0x10] sm:$0x1]
        %v544 = vld [vmem:[%s517 + $0x18] sm:$0x1]
        %v545 = vld [vmem:[%s438] sm:$0xff]
        %v546 = vld [vmem:[%s438 + $0x8] sm:$0xff]
        %v547 = vld [vmem:[%s438 + $0x10] sm:$0xff]
        %v548 = vld [vmem:[%s438 + $0x18] sm:$0xff]
        %v549 = vld [vmem:[%s438 + $0x20] sm:$0xff]
        %v550 = vld [vmem:[%s438 + $0x28] sm:$0xff]
        %v551 = vld [vmem:[%s438 + $0x30] sm:$0xff]
        %v552 = vld [vmem:[%s438 + $0x38] sm:$0xff]
        %v553 = vld [vmem:[%s438 + $0x40] sm:$0xff]
        %v554 = vld [vmem:[%s438 + $0x48] sm:$0xff]
        %v555 = vld [vmem:[%s438 + $0x50] sm:$0xff]
        %v556 = vld [vmem:[%s438 + $0x58] sm:$0xff]
        %v557 = vld [vmem:[%s438 + $0x60] sm:$0xff]
        %v558 = vld [vmem:[%s438 + $0x68] sm:$0xff]
        %v559 = vld [vmem:[%s438 + $0x70] sm:$0xff]
        %v560 = vld [vmem:[%s438 + $0x78] sm:$0xff]
        %v561 = vld [vmem:[%s438 + $0x80] sm:$0xff]
        %v562 = vld [vmem:[%s438 + $0x88] sm:$0xff]
        %v563 = vld [vmem:[%s438 + $0x90] sm:$0xff]
        %v564 = vld [vmem:[%s438 + $0x98] sm:$0xff]
        %v565 = vld [vmem:[%s438 + $0xa0] sm:$0xff]
        %v566 = vld [vmem:[%s438 + $0xa8] sm:$0xff]
        %v567 = vld [vmem:[%s438 + $0xb0] sm:$0xff]
        %v568 = vld [vmem:[%s438 + $0xb8] sm:$0xff]
        %v569 = vld [vmem:[%s438 + $0xc0] sm:$0xff]
        %v570 = vld [vmem:[%s438 + $0xc8] sm:$0xff]
        %v571 = vld [vmem:[%s438 + $0xd0] sm:$0xff]
        %v572 = vld [vmem:[%s438 + $0xd8] sm:$0xff]
        %v573 = vld [vmem:[%s438 + $0xe0] sm:$0xff]
        %v574 = vld [vmem:[%s438 + $0xe8] sm:$0xff]
        %v575 = vld [vmem:[%s438 + $0xf0] sm:$0xff]
        %v576 = vld [vmem:[%s438 + $0xf8] sm:$0xff]
        %v577 = vlaneseq
        %v578 = vshrl.u32 %v577, 7
        %v579 = vsub.s32 0, %v578
        %v580 = vrot.slane %v541, %v579
        %v581 = vlaneseq
        %v582 = vshrl.u32 %v581, 7
        %v583 = vsub.s32 0, %v582
        %v584 = vrot.slane %v542, %v583
        %v617 = vunpack.c.l.b16 %v545
        %v618 = vunpack.c.h.b16 %v545
        %v619 = vunpack.c.l.b16 %v546
        %v620 = vunpack.c.h.b16 %v546
        %v621 = vunpack.c.l.b16 %v547
        %v622 = vunpack.c.h.b16 %v547
        %v623 = vunpack.c.l.b16 %v548
        %v624 = vunpack.c.h.b16 %v548
        %v625 = vunpack.c.l.b16 %v549
        %v626 = vunpack.c.h.b16 %v549
        %v627 = vunpack.c.l.b16 %v550
        %v628 = vunpack.c.h.b16 %v550
        %v629 = vunpack.c.l.b16 %v551
        %v630 = vunpack.c.h.b16 %v551
        %v631 = vunpack.c.l.b16 %v552
        %v632 = vunpack.c.h.b16 %v552
        %v633 = vunpack.c.l.b16 %v553
        %v634 = vunpack.c.h.b16 %v553
        %v635 = vunpack.c.l.b16 %v554
        %v636 = vunpack.c.h.b16 %v554
        %v637 = vunpack.c.l.b16 %v555
        %v638 = vunpack.c.h.b16 %v555
        %v639 = vunpack.c.l.b16 %v556
        %v640 = vunpack.c.h.b16 %v556
        %v641 = vunpack.c.l.b16 %v557
        %v642 = vunpack.c.h.b16 %v557
        %v643 = vunpack.c.l.b16 %v558
        %v644 = vunpack.c.h.b16 %v558
        %v645 = vunpack.c.l.b16 %v559
        %v646 = vunpack.c.h.b16 %v559
        %v647 = vunpack.c.l.b16 %v560
        %v648 = vunpack.c.h.b16 %v560
        %v649 = vunpack.c.l.b16 %v561
        %v650 = vunpack.c.h.b16 %v561
        %v651 = vunpack.c.l.b16 %v562
        %v652 = vunpack.c.h.b16 %v562
        %v653 = vunpack.c.l.b16 %v563
        %v654 = vunpack.c.h.b16 %v563
        %v655 = vunpack.c.l.b16 %v564
        %v656 = vunpack.c.h.b16 %v564
        %v657 = vunpack.c.l.b16 %v565
        %v658 = vunpack.c.h.b16 %v565
        %v659 = vunpack.c.l.b16 %v566
        %v660 = vunpack.c.h.b16 %v566
        %v661 = vunpack.c.l.b16 %v567
        %v662 = vunpack.c.h.b16 %v567
        %v663 = vunpack.c.l.b16 %v568
        %v664 = vunpack.c.h.b16 %v568
        %v665 = vunpack.c.l.b16 %v569
        %v666 = vunpack.c.h.b16 %v569
        %v667 = vunpack.c.l.b16 %v570
        %v668 = vunpack.c.h.b16 %v570
        %v669 = vunpack.c.l.b16 %v571
        %v670 = vunpack.c.h.b16 %v571
        %v671 = vunpack.c.l.b16 %v572
        %v672 = vunpack.c.h.b16 %v572
        %v673 = vunpack.c.l.b16 %v573
        %v674 = vunpack.c.h.b16 %v573
        %v675 = vunpack.c.l.b16 %v574
        %v676 = vunpack.c.h.b16 %v574
        %v677 = vunpack.c.l.b16 %v575
        %v678 = vunpack.c.h.b16 %v575
        %v679 = vunpack.c.l.b16 %v576
        %v680 = vunpack.c.h.b16 %v576
        %v681 = vpack.c.b16 %v619, %v617
        %v682 = vpack.c.b16 %v620, %v618
        %v683 = vpack.c.b16 %v623, %v621
        %v684 = vpack.c.b16 %v624, %v622
        %v685 = vpack.c.b16 %v627, %v625
        %v686 = vpack.c.b16 %v628, %v626
        %v687 = vpack.c.b16 %v631, %v629
        %v688 = vpack.c.b16 %v632, %v630
        %v689 = vpack.c.b16 %v635, %v633
        %v690 = vpack.c.b16 %v636, %v634
        %v691 = vpack.c.b16 %v639, %v637
        %v692 = vpack.c.b16 %v640, %v638
        %v693 = vpack.c.b16 %v643, %v641
        %v694 = vpack.c.b16 %v644, %v642
        %v695 = vpack.c.b16 %v647, %v645
        %v696 = vpack.c.b16 %v648, %v646
        %v697 = vpack.c.b16 %v651, %v649
        %v698 = vpack.c.b16 %v652, %v650
        %v699 = vpack.c.b16 %v655, %v653
        %v700 = vpack.c.b16 %v656, %v654
        %v701 = vpack.c.b16 %v659, %v657
        %v702 = vpack.c.b16 %v660, %v658
        %v703 = vpack.c.b16 %v663, %v661
        %v704 = vpack.c.b16 %v664, %v662
        %v705 = vpack.c.b16 %v667, %v665
        %v706 = vpack.c.b16 %v668, %v666
        %v707 = vpack.c.b16 %v671, %v669
        %v708 = vpack.c.b16 %v672, %v670
        %v709 = vpack.c.b16 %v675, %v673
        %v710 = vpack.c.b16 %v676, %v674
        %v711 = vpack.c.b16 %v679, %v677
        %v712 = vpack.c.b16 %v680, %v678
        %745 = vmatprep.subr.bf16.mxu0 %v682
        %746 = vmatpush1.bf16.msra.mxu0 %v681
        %747 = vmatprep.subr.bf16.mxu0 %v684
        %748 = vmatpush1.bf16.msra.mxu0 %v683
        %749 = vmatprep.subr.bf16.mxu0 %v686
        %750 = vmatpush1.bf16.msra.mxu0 %v685
        %751 = vmatprep.subr.bf16.mxu0 %v688
        %752 = vmatpush1.bf16.msra.mxu0 %v687
        %753 = vmatprep.subr.bf16.mxu0 %v690
        %754 = vmatpush1.bf16.msra.mxu0 %v689
        %755 = vmatprep.subr.bf16.mxu0 %v692
        %756 = vmatpush1.bf16.msra.mxu0 %v691
        %757 = vmatprep.subr.bf16.mxu0 %v694
        %758 = vmatpush1.bf16.msra.mxu0 %v693
        %759 = vmatprep.subr.bf16.mxu0 %v696
        %760 = vmatpush1.bf16.msra.mxu0 %v695
        %761 = vmatprep.subr.bf16.mxu0 %v698
        %762 = vmatpush1.bf16.msra.mxu0 %v697
        %763 = vmatprep.subr.bf16.mxu0 %v700
        %764 = vmatpush1.bf16.msra.mxu0 %v699
        %765 = vmatprep.subr.bf16.mxu0 %v702
        %766 = vmatpush1.bf16.msra.mxu0 %v701
        %767 = vmatprep.subr.bf16.mxu0 %v704
        %768 = vmatpush1.bf16.msra.mxu0 %v703
        %769 = vmatprep.subr.bf16.mxu0 %v706
        %770 = vmatpush1.bf16.msra.mxu0 %v705
        %771 = vmatprep.subr.bf16.mxu0 %v708
        %772 = vmatpush1.bf16.msra.mxu0 %v707
        %773 = vmatprep.subr.bf16.mxu0 %v710
        %774 = vmatpush1.bf16.msra.mxu0 %v709
        %775 = vmatprep.subr.bf16.mxu0 %v712
        %776 = vmatpush1.bf16.msra.mxu0 %v711
        %777 = vmatprep.mubr.bf16.mxu0 %v540
        %778 = vmatmul.mubr.bf16.gmra.mrb[0].mxu0 %v539
        %v779 = vpop.f32.mrb[0].mxu0
        %v780 = vadd.f32 %v580, %v779
        %v781 = vpop.f32.mrb[0].mxu0
        %v782 = vadd.f32 %v584, %v781
        %v783 = vpop.f32.mrb[0].mxu0
        %v784 = vadd.f32 %v580, %v783
        %v785 = vpop.f32.mrb[0].mxu0
        %v786 = vadd.f32 %v584, %v785
        %787 = vdwg.mxu0
        %s788 = scalar_lea.vmem %s438, 256 [#allocation3]
        %v789 = vld [vmem:[%s788] sm:$0xff]
        %v790 = vld [vmem:[%s788 + $0x8] sm:$0xff]
        %v791 = vld [vmem:[%s788 + $0x10] sm:$0xff]
        %v792 = vld [vmem:[%s788 + $0x18] sm:$0xff]
        %v793 = vld [vmem:[%s788 + $0x20] sm:$0xff]
        %v794 = vld [vmem:[%s788 + $0x28] sm:$0xff]
        %v795 = vld [vmem:[%s788 + $0x30] sm:$0xff]
        %v796 = vld [vmem:[%s788 + $0x38] sm:$0xff]
        %v797 = vld [vmem:[%s788 + $0x40] sm:$0xff]
        %v798 = vld [vmem:[%s788 + $0x48] sm:$0xff]
        %v799 = vld [vmem:[%s788 + $0x50] sm:$0xff]
        %v800 = vld [vmem:[%s788 + $0x58] sm:$0xff]
        %v801 = vld [vmem:[%s788 + $0x60] sm:$0xff]
        %v802 = vld [vmem:[%s788 + $0x68] sm:$0xff]
        %v803 = vld [vmem:[%s788 + $0x70] sm:$0xff]
        %v804 = vld [vmem:[%s788 + $0x78] sm:$0xff]
        %v805 = vld [vmem:[%s788 + $0x80] sm:$0xff]
        %v806 = vld [vmem:[%s788 + $0x88] sm:$0xff]
        %v807 = vld [vmem:[%s788 + $0x90] sm:$0xff]
        %v808 = vld [vmem:[%s788 + $0x98] sm:$0xff]
        %v809 = vld [vmem:[%s788 + $0xa0] sm:$0xff]
        %v810 = vld [vmem:[%s788 + $0xa8] sm:$0xff]
        %v811 = vld [vmem:[%s788 + $0xb0] sm:$0xff]
        %v812 = vld [vmem:[%s788 + $0xb8] sm:$0xff]
        %v813 = vld [vmem:[%s788 + $0xc0] sm:$0xff]
        %v814 = vld [vmem:[%s788 + $0xc8] sm:$0xff]
        %v815 = vld [vmem:[%s788 + $0xd0] sm:$0xff]
        %v816 = vld [vmem:[%s788 + $0xd8] sm:$0xff]
        %v817 = vld [vmem:[%s788 + $0xe0] sm:$0xff]
        %v818 = vld [vmem:[%s788 + $0xe8] sm:$0xff]
        %v819 = vld [vmem:[%s788 + $0xf0] sm:$0xff]
        %v820 = vld [vmem:[%s788 + $0xf8] sm:$0xff]
        %v821 = vlaneseq
        %v822 = vshrl.u32 %v821, 7
        %v823 = vsub.s32 1, %v822
        %v824 = vrot.slane %v541, %v823
        %v825 = vlaneseq
        %v826 = vshrl.u32 %v825, 7
        %v827 = vsub.s32 1, %v826
        %v828 = vrot.slane %v542, %v827
        %v861 = vunpack.c.l.b16 %v789
        %v862 = vunpack.c.h.b16 %v789
        %v863 = vunpack.c.l.b16 %v790
        %v864 = vunpack.c.h.b16 %v790
        %v865 = vunpack.c.l.b16 %v791
        %v866 = vunpack.c.h.b16 %v791
        %v867 = vunpack.c.l.b16 %v792
        %v868 = vunpack.c.h.b16 %v792
        %v869 = vunpack.c.l.b16 %v793
        %v870 = vunpack.c.h.b16 %v793
        %v871 = vunpack.c.l.b16 %v794
        %v872 = vunpack.c.h.b16 %v794
        %v873 = vunpack.c.l.b16 %v795
        %v874 = vunpack.c.h.b16 %v795
        %v875 = vunpack.c.l.b16 %v796
        %v876 = vunpack.c.h.b16 %v796
        %v877 = vunpack.c.l.b16 %v797
        %v878 = vunpack.c.h.b16 %v797
        %v879 = vunpack.c.l.b16 %v798
        %v880 = vunpack.c.h.b16 %v798
        %v881 = vunpack.c.l.b16 %v799
        %v882 = vunpack.c.h.b16 %v799
        %v883 = vunpack.c.l.b16 %v800
        %v884 = vunpack.c.h.b16 %v800
        %v885 = vunpack.c.l.b16 %v801
        %v886 = vunpack.c.h.b16 %v801
        %v887 = vunpack.c.l.b16 %v802
        %v888 = vunpack.c.h.b16 %v802
        %v889 = vunpack.c.l.b16 %v803
        %v890 = vunpack.c.h.b16 %v803
        %v891 = vunpack.c.l.b16 %v804
        %v892 = vunpack.c.h.b16 %v804
        %v893 = vunpack.c.l.b16 %v805
        %v894 = vunpack.c.h.b16 %v805
        %v895 = vunpack.c.l.b16 %v806
        %v896 = vunpack.c.h.b16 %v806
        %v897 = vunpack.c.l.b16 %v807
        %v898 = vunpack.c.h.b16 %v807
        %v899 = vunpack.c.l.b16 %v808
        %v900 = vunpack.c.h.b16 %v808
        %v901 = vunpack.c.l.b16 %v809
        %v902 = vunpack.c.h.b16 %v809
        %v903 = vunpack.c.l.b16 %v810
        %v904 = vunpack.c.h.b16 %v810
        %v905 = vunpack.c.l.b16 %v811
        %v906 = vunpack.c.h.b16 %v811
        %v907 = vunpack.c.l.b16 %v812
        %v908 = vunpack.c.h.b16 %v812
        %v909 = vunpack.c.l.b16 %v813
        %v910 = vunpack.c.h.b16 %v813
        %v911 = vunpack.c.l.b16 %v814
        %v912 = vunpack.c.h.b16 %v814
        %v913 = vunpack.c.l.b16 %v815
        %v914 = vunpack.c.h.b16 %v815
        %v915 = vunpack.c.l.b16 %v816
        %v916 = vunpack.c.h.b16 %v816
        %v917 = vunpack.c.l.b16 %v817
        %v918 = vunpack.c.h.b16 %v817
        %v919 = vunpack.c.l.b16 %v818
        %v920 = vunpack.c.h.b16 %v818
        %v921 = vunpack.c.l.b16 %v819
        %v922 = vunpack.c.h.b16 %v819
        %v923 = vunpack.c.l.b16 %v820
        %v924 = vunpack.c.h.b16 %v820
        %v925 = vpack.c.b16 %v863, %v861
        %v926 = vpack.c.b16 %v864, %v862
        %v927 = vpack.c.b16 %v867, %v865
        %v928 = vpack.c.b16 %v868, %v866
        %v929 = vpack.c.b16 %v871, %v869
        %v930 = vpack.c.b16 %v872, %v870
        %v931 = vpack.c.b16 %v875, %v873
        %v932 = vpack.c.b16 %v876, %v874
        %v933 = vpack.c.b16 %v879, %v877
        %v934 = vpack.c.b16 %v880, %v878
        %v935 = vpack.c.b16 %v883, %v881
        %v936 = vpack.c.b16 %v884, %v882
        %v937 = vpack.c.b16 %v887, %v885
        %v938 = vpack.c.b16 %v888, %v886
        %v939 = vpack.c.b16 %v891, %v889
        %v940 = vpack.c.b16 %v892, %v890
        %v941 = vpack.c.b16 %v895, %v893
        %v942 = vpack.c.b16 %v896, %v894
        %v943 = vpack.c.b16 %v899, %v897
        %v944 = vpack.c.b16 %v900, %v898
        %v945 = vpack.c.b16 %v903, %v901
        %v946 = vpack.c.b16 %v904, %v902
        %v947 = vpack.c.b16 %v907, %v905
        %v948 = vpack.c.b16 %v908, %v906
        %v949 = vpack.c.b16 %v911, %v909
        %v950 = vpack.c.b16 %v912, %v910
        %v951 = vpack.c.b16 %v915, %v913
        %v952 = vpack.c.b16 %v916, %v914
        %v953 = vpack.c.b16 %v919, %v917
        %v954 = vpack.c.b16 %v920, %v918
        %v955 = vpack.c.b16 %v923, %v921
        %v956 = vpack.c.b16 %v924, %v922
        %989 = vmatprep.subr.bf16.mxu0 %v926
        %990 = vmatpush1.bf16.msra.mxu0 %v925
        %991 = vmatprep.subr.bf16.mxu0 %v928
        %992 = vmatpush1.bf16.msra.mxu0 %v927
        %993 = vmatprep.subr.bf16.mxu0 %v930
        %994 = vmatpush1.bf16.msra.mxu0 %v929
        %995 = vmatprep.subr.bf16.mxu0 %v932
        %996 = vmatpush1.bf16.msra.mxu0 %v931
        %997 = vmatprep.subr.bf16.mxu0 %v934
        %998 = vmatpush1.bf16.msra.mxu0 %v933
        %999 = vmatprep.subr.bf16.mxu0 %v936
        %1000 = vmatpush1.bf16.msra.mxu0 %v935
        %1001 = vmatprep.subr.bf16.mxu0 %v938
        %1002 = vmatpush1.bf16.msra.mxu0 %v937
        %1003 = vmatprep.subr.bf16.mxu0 %v940
        %1004 = vmatpush1.bf16.msra.mxu0 %v939
        %1005 = vmatprep.subr.bf16.mxu0 %v942
        %1006 = vmatpush1.bf16.msra.mxu0 %v941
        %1007 = vmatprep.subr.bf16.mxu0 %v944
        %1008 = vmatpush1.bf16.msra.mxu0 %v943
        %1009 = vmatprep.subr.bf16.mxu0 %v946
        %1010 = vmatpush1.bf16.msra.mxu0 %v945
        %1011 = vmatprep.subr.bf16.mxu0 %v948
        %1012 = vmatpush1.bf16.msra.mxu0 %v947
        %1013 = vmatprep.subr.bf16.mxu0 %v950
        %1014 = vmatpush1.bf16.msra.mxu0 %v949
        %1015 = vmatprep.subr.bf16.mxu0 %v952
        %1016 = vmatpush1.bf16.msra.mxu0 %v951
        %1017 = vmatprep.subr.bf16.mxu0 %v954
        %1018 = vmatpush1.bf16.msra.mxu0 %v953
        %1019 = vmatprep.subr.bf16.mxu0 %v956
        %1020 = vmatpush1.bf16.msra.mxu0 %v955
        %1021 = vmatprep.mubr.bf16.mxu0 %v540
        %1022 = vmatmul.mubr.bf16.gmra.mrb[0].mxu0 %v539
        %v1023 = vpop.f32.mrb[0].mxu0
        %v1024 = vadd.f32 %v824, %v1023
        %v1025 = vpop.f32.mrb[0].mxu0
        %v1026 = vadd.f32 %v828, %v1025
        %v1027 = vpop.f32.mrb[0].mxu0
        %v1028 = vadd.f32 %v824, %v1027
        %v1029 = vpop.f32.mrb[0].mxu0
        %v1030 = vadd.f32 %v828, %v1029
        %1031 = vdwg.mxu0
        %s1032 = scalar_lea.vmem %s438, 512 [#allocation3]
        %v1033 = vld [vmem:[%s1032] sm:$0xff]
        %v1034 = vld [vmem:[%s1032 + $0x8] sm:$0xff]
        %v1035 = vld [vmem:[%s1032 + $0x10] sm:$0xff]
        %v1036 = vld [vmem:[%s1032 + $0x18] sm:$0xff]
        %v1037 = vld [vmem:[%s1032 + $0x20] sm:$0xff]
        %v1038 = vld [vmem:[%s1032 + $0x28] sm:$0xff]
        %v1039 = vld [vmem:[%s1032 + $0x30] sm:$0xff]
        %v1040 = vld [vmem:[%s1032 + $0x38] sm:$0xff]
        %v1041 = vld [vmem:[%s1032 + $0x40] sm:$0xff]
        %v1042 = vld [vmem:[%s1032 + $0x48] sm:$0xff]
        %v1043 = vld [vmem:[%s1032 + $0x50] sm:$0xff]
        %v1044 = vld [vmem:[%s1032 + $0x58] sm:$0xff]
        %v1045 = vld [vmem:[%s1032 + $0x60] sm:$0xff]
        %v1046 = vld [vmem:[%s1032 + $0x68] sm:$0xff]
        %v1047 = vld [vmem:[%s1032 + $0x70] sm:$0xff]
        %v1048 = vld [vmem:[%s1032 + $0x78] sm:$0xff]
        %v1049 = vld [vmem:[%s1032 + $0x80] sm:$0xff]
        %v1050 = vld [vmem:[%s1032 + $0x88] sm:$0xff]
        %v1051 = vld [vmem:[%s1032 + $0x90] sm:$0xff]
        %v1052 = vld [vmem:[%s1032 + $0x98] sm:$0xff]
        %v1053 = vld [vmem:[%s1032 + $0xa0] sm:$0xff]
        %v1054 = vld [vmem:[%s1032 + $0xa8] sm:$0xff]
        %v1055 = vld [vmem:[%s1032 + $0xb0] sm:$0xff]
        %v1056 = vld [vmem:[%s1032 + $0xb8] sm:$0xff]
        %v1057 = vld [vmem:[%s1032 + $0xc0] sm:$0xff]
        %v1058 = vld [vmem:[%s1032 + $0xc8] sm:$0xff]
        %v1059 = vld [vmem:[%s1032 + $0xd0] sm:$0xff]
        %v1060 = vld [vmem:[%s1032 + $0xd8] sm:$0xff]
        %v1061 = vld [vmem:[%s1032 + $0xe0] sm:$0xff]
        %v1062 = vld [vmem:[%s1032 + $0xe8] sm:$0xff]
        %v1063 = vld [vmem:[%s1032 + $0xf0] sm:$0xff]
        %v1064 = vld [vmem:[%s1032 + $0xf8] sm:$0xff]
        %v1065 = vlaneseq
        %v1066 = vshrl.u32 %v1065, 7
        %v1067 = vsub.s32 2, %v1066
        %v1068 = vrot.slane %v541, %v1067
        %v1069 = vlaneseq
        %v1070 = vshrl.u32 %v1069, 7
        %v1071 = vsub.s32 2, %v1070
        %v1072 = vrot.slane %v542, %v1071
        %v1105 = vunpack.c.l.b16 %v1033
        %v1106 = vunpack.c.h.b16 %v1033
        %v1107 = vunpack.c.l.b16 %v1034
        %v1108 = vunpack.c.h.b16 %v1034
        %v1109 = vunpack.c.l.b16 %v1035
        %v1110 = vunpack.c.h.b16 %v1035
        %v1111 = vunpack.c.l.b16 %v1036
        %v1112 = vunpack.c.h.b16 %v1036
        %v1113 = vunpack.c.l.b16 %v1037
        %v1114 = vunpack.c.h.b16 %v1037
        %v1115 = vunpack.c.l.b16 %v1038
        %v1116 = vunpack.c.h.b16 %v1038
        %v1117 = vunpack.c.l.b16 %v1039
        %v1118 = vunpack.c.h.b16 %v1039
        %v1119 = vunpack.c.l.b16 %v1040
        %v1120 = vunpack.c.h.b16 %v1040
        %v1121 = vunpack.c.l.b16 %v1041
        %v1122 = vunpack.c.h.b16 %v1041
        %v1123 = vunpack.c.l.b16 %v1042
        %v1124 = vunpack.c.h.b16 %v1042
        %v1125 = vunpack.c.l.b16 %v1043
        %v1126 = vunpack.c.h.b16 %v1043
        %v1127 = vunpack.c.l.b16 %v1044
        %v1128 = vunpack.c.h.b16 %v1044
        %v1129 = vunpack.c.l.b16 %v1045
        %v1130 = vunpack.c.h.b16 %v1045
        %v1131 = vunpack.c.l.b16 %v1046
        %v1132 = vunpack.c.h.b16 %v1046
        %v1133 = vunpack.c.l.b16 %v1047
        %v1134 = vunpack.c.h.b16 %v1047
        %v1135 = vunpack.c.l.b16 %v1048
        %v1136 = vunpack.c.h.b16 %v1048
        %v1137 = vunpack.c.l.b16 %v1049
        %v1138 = vunpack.c.h.b16 %v1049
        %v1139 = vunpack.c.l.b16 %v1050
        %v1140 = vunpack.c.h.b16 %v1050
        %v1141 = vunpack.c.l.b16 %v1051
        %v1142 = vunpack.c.h.b16 %v1051
        %v1143 = vunpack.c.l.b16 %v1052
        %v1144 = vunpack.c.h.b16 %v1052
        %v1145 = vunpack.c.l.b16 %v1053
        %v1146 = vunpack.c.h.b16 %v1053
        %v1147 = vunpack.c.l.b16 %v1054
        %v1148 = vunpack.c.h.b16 %v1054
        %v1149 = vunpack.c.l.b16 %v1055
        %v1150 = vunpack.c.h.b16 %v1055
        %v1151 = vunpack.c.l.b16 %v1056
        %v1152 = vunpack.c.h.b16 %v1056
        %v1153 = vunpack.c.l.b16 %v1057
        %v1154 = vunpack.c.h.b16 %v1057
        %v1155 = vunpack.c.l.b16 %v1058
        %v1156 = vunpack.c.h.b16 %v1058
        %v1157 = vunpack.c.l.b16 %v1059
        %v1158 = vunpack.c.h.b16 %v1059
        %v1159 = vunpack.c.l.b16 %v1060
        %v1160 = vunpack.c.h.b16 %v1060
        %v1161 = vunpack.c.l.b16 %v1061
        %v1162 = vunpack.c.h.b16 %v1061
        %v1163 = vunpack.c.l.b16 %v1062
        %v1164 = vunpack.c.h.b16 %v1062
        %v1165 = vunpack.c.l.b16 %v1063
        %v1166 = vunpack.c.h.b16 %v1063
        %v1167 = vunpack.c.l.b16 %v1064
        %v1168 = vunpack.c.h.b16 %v1064
        %v1169 = vpack.c.b16 %v1107, %v1105
        %v1170 = vpack.c.b16 %v1108, %v1106
        %v1171 = vpack.c.b16 %v1111, %v1109
        %v1172 = vpack.c.b16 %v1112, %v1110
        %v1173 = vpack.c.b16 %v1115, %v1113
        %v1174 = vpack.c.b16 %v1116, %v1114
        %v1175 = vpack.c.b16 %v1119, %v1117
        %v1176 = vpack.c.b16 %v1120, %v1118
        %v1177 = vpack.c.b16 %v1123, %v1121
        %v1178 = vpack.c.b16 %v1124, %v1122
        %v1179 = vpack.c.b16 %v1127, %v1125
        %v1180 = vpack.c.b16 %v1128, %v1126
        %v1181 = vpack.c.b16 %v1131, %v1129
        %v1182 = vpack.c.b16 %v1132, %v1130
        %v1183 = vpack.c.b16 %v1135, %v1133
        %v1184 = vpack.c.b16 %v1136, %v1134
        %v1185 = vpack.c.b16 %v1139, %v1137
        %v1186 = vpack.c.b16 %v1140, %v1138
        %v1187 = vpack.c.b16 %v1143, %v1141
        %v1188 = vpack.c.b16 %v1144, %v1142
        %v1189 = vpack.c.b16 %v1147, %v1145
        %v1190 = vpack.c.b16 %v1148, %v1146
        %v1191 = vpack.c.b16 %v1151, %v1149
        %v1192 = vpack.c.b16 %v1152, %v1150
        %v1193 = vpack.c.b16 %v1155, %v1153
        %v1194 = vpack.c.b16 %v1156, %v1154
        %v1195 = vpack.c.b16 %v1159, %v1157
        %v1196 = vpack.c.b16 %v1160, %v1158
        %v1197 = vpack.c.b16 %v1163, %v1161
        %v1198 = vpack.c.b16 %v1164, %v1162
        %v1199 = vpack.c.b16 %v1167, %v1165
        %v1200 = vpack.c.b16 %v1168, %v1166
        %1233 = vmatprep.subr.bf16.mxu0 %v1170
        %1234 = vmatpush1.bf16.msra.mxu0 %v1169
        %1235 = vmatprep.subr.bf16.mxu0 %v1172
        %1236 = vmatpush1.bf16.msra.mxu0 %v1171
        %1237 = vmatprep.subr.bf16.mxu0 %v1174
        %1238 = vmatpush1.bf16.msra.mxu0 %v1173
        %1239 = vmatprep.subr.bf16.mxu0 %v1176
        %1240 = vmatpush1.bf16.msra.mxu0 %v1175
        %1241 = vmatprep.subr.bf16.mxu0 %v1178
        %1242 = vmatpush1.bf16.msra.mxu0 %v1177
        %1243 = vmatprep.subr.bf16.mxu0 %v1180
        %1244 = vmatpush1.bf16.msra.mxu0 %v1179
        %1245 = vmatprep.subr.bf16.mxu0 %v1182
        %1246 = vmatpush1.bf16.msra.mxu0 %v1181
        %1247 = vmatprep.subr.bf16.mxu0 %v1184
        %1248 = vmatpush1.bf16.msra.mxu0 %v1183
        %1249 = vmatprep.subr.bf16.mxu0 %v1186
        %1250 = vmatpush1.bf16.msra.mxu0 %v1185
        %1251 = vmatprep.subr.bf16.mxu0 %v1188
        %1252 = vmatpush1.bf16.msra.mxu0 %v1187
        %1253 = vmatprep.subr.bf16.mxu0 %v1190
        %1254 = vmatpush1.bf16.msra.mxu0 %v1189
        %1255 = vmatprep.subr.bf16.mxu0 %v1192
        %1256 = vmatpush1.bf16.msra.mxu0 %v1191
        %1257 = vmatprep.subr.bf16.mxu0 %v1194
        %1258 = vmatpush1.bf16.msra.mxu0 %v1193
        %1259 = vmatprep.subr.bf16.mxu0 %v1196
        %1260 = vmatpush1.bf16.msra.mxu0 %v1195
        %1261 = vmatprep.subr.bf16.mxu0 %v1198
        %1262 = vmatpush1.bf16.msra.mxu0 %v1197
        %1263 = vmatprep.subr.bf16.mxu0 %v1200
        %1264 = vmatpush1.bf16.msra.mxu0 %v1199
        %1265 = vmatprep.mubr.bf16.mxu0 %v540
        %1266 = vmatmul.mubr.bf16.gmra.mrb[0].mxu0 %v539
        %v1267 = vpop.f32.mrb[0].mxu0
        %v1268 = vadd.f32 %v1068, %v1267
        %v1269 = vpop.f32.mrb[0].mxu0
        %v1270 = vadd.f32 %v1072, %v1269
        %v1271 = vpop.f32.mrb[0].mxu0
        %v1272 = vadd.f32 %v1068, %v1271
        %v1273 = vpop.f32.mrb[0].mxu0
        %v1274 = vadd.f32 %v1072, %v1273
        %1275 = vdwg.mxu0
        %v1276 = vld [vmem:[%s1] sm:$0x1]
        %v1277 = vld [vmem:[%s1 + $0x1] sm:$0x1]
        %v1278 = vpack.c.bf16 %v780, %v780
        %v1279 = vpack.c.bf16 %v784, %v784
        %v1280 = vpack.c.bf16 %v1024, %v1024
        %v1281 = vpack.c.bf16 %v1028, %v1028
        %v1282 = vpack.c.bf16 %v1268, %v1268
        %v1283 = vpack.c.bf16 %v1272, %v1272
        %1284 = vmatprep.subr.bf16.mxu0 0
        %1285 = vmatpush1.bf16.xpose.msra.mxu0 %v1280
        %1286 = vmatprep.subr.bf16.mxu0 0
        %1287 = vmatpush1.bf16.xpose.msra.mxu0 0
        %1288 = vmatprep.subr.bf16.mxu0 0
        %1289 = vmatpush1.bf16.xpose.msra.mxu0 0
        %1290 = vmatprep.subr.bf16.mxu0 0
        %1291 = vmatpush1.bf16.xpose.msra.mxu0 0
        %1292 = vmatprep.subr.bf16.mxu0 0
        %1293 = vmatpush1.bf16.xpose.msra.mxu0 0
        %1294 = vmatprep.subr.bf16.mxu0 0
        %1295 = vmatpush1.bf16.xpose.msra.mxu0 0
        %1296 = vmatprep.subr.bf16.mxu0 0
        %1297 = vmatpush1.bf16.xpose.msra.mxu0 0
        %1298 = vmatprep.subr.bf16.mxu0 0
        %1299 = vmatpush1.bf16.xpose.msra.mxu0 0
        %1300 = vmatprep.subr.bf16.mxu0 0
        %1301 = vmatpush1.bf16.xpose.msra.mxu0 0
        %1302 = vmatprep.subr.bf16.mxu0 0
        %1303 = vmatpush1.bf16.xpose.msra.mxu0 0
        %1304 = vmatprep.subr.bf16.mxu0 0
        %1305 = vmatpush1.bf16.xpose.msra.mxu0 0
        %1306 = vmatprep.subr.bf16.mxu0 0
        %1307 = vmatpush1.bf16.xpose.msra.mxu0 0
        %1308 = vmatprep.subr.bf16.mxu0 0
        %1309 = vmatpush1.bf16.xpose.msra.mxu0 0
        %1310 = vmatprep.subr.bf16.mxu0 0
        %1311 = vmatpush1.bf16.xpose.msra.mxu0 0
        %1312 = vmatprep.subr.bf16.mxu0 0
        %1313 = vmatpush1.bf16.xpose.msra.mxu0 0
        %1314 = vmatprep.subr.bf16.mxu0 0
        %1315 = vmatpush1.bf16.xpose.msra.mxu0 0
        %1316 = vmatprep.mubr.bf16.mxu0 0
        %1317 = vmatmul.mubr.bf16.gmra.mrb[0].mxu0 %v1278
        %v1318 = vpop.f32.mrb[0].mxu0
        %v1319 = vadd.f32 0.0, %v1318
        %v1320 = vpop.f32.mrb[0].mxu0
        %v1321 = vpop.f32.mrb[0].mxu0
        %v1322 = vpop.f32.mrb[0].mxu0
        %1323 = vdwg.mxu0
        %1324 = vmatprep.subr.bf16.mxu0 0
        %1325 = vmatpush1.bf16.xpose.msra.mxu0 %v1281
        %1326 = vmatprep.subr.bf16.mxu0 0
        %1327 = vmatpush1.bf16.xpose.msra.mxu0 0
        %1328 = vmatprep.subr.bf16.mxu0 0
        %1329 = vmatpush1.bf16.xpose.msra.mxu0 0
        %1330 = vmatprep.subr.bf16.mxu0 0
        %1331 = vmatpush1.bf16.xpose.msra.mxu0 0
        %1332 = vmatprep.subr.bf16.mxu0 0
        %1333 = vmatpush1.bf16.xpose.msra.mxu0 0
        %1334 = vmatprep.subr.bf16.mxu0 0
        %1335 = vmatpush1.bf16.xpose.msra.mxu0 0
        %1336 = vmatprep.subr.bf16.mxu0 0
        %1337 = vmatpush1.bf16.xpose.msra.mxu0 0
        %1338 = vmatprep.subr.bf16.mxu0 0
        %1339 = vmatpush1.bf16.xpose.msra.mxu0 0
        %1340 = vmatprep.subr.bf16.mxu0 0
        %1341 = vmatpush1.bf16.xpose.msra.mxu0 0
        %1342 = vmatprep.subr.bf16.mxu0 0
        %1343 = vmatpush1.bf16.xpose.msra.mxu0 0
        %1344 = vmatprep.subr.bf16.mxu0 0
        %1345 = vmatpush1.bf16.xpose.msra.mxu0 0
        %1346 = vmatprep.subr.bf16.mxu0 0
        %1347 = vmatpush1.bf16.xpose.msra.mxu0 0
        %1348 = vmatprep.subr.bf16.mxu0 0
        %1349 = vmatpush1.bf16.xpose.msra.mxu0 0
        %1350 = vmatprep.subr.bf16.mxu0 0
        %1351 = vmatpush1.bf16.xpose.msra.mxu0 0
        %1352 = vmatprep.subr.bf16.mxu0 0
        %1353 = vmatpush1.bf16.xpose.msra.mxu0 0
        %1354 = vmatprep.subr.bf16.mxu0 0
        %1355 = vmatpush1.bf16.xpose.msra.mxu0 0
        %1356 = vmatprep.mubr.bf16.mxu0 0
        %1357 = vmatmul.mubr.bf16.gmra.mrb[0].mxu0 %v1279
        %v1358 = vpop.f32.mrb[0].mxu0
        %v1359 = vadd.f32 0.0, %v1358
        %v1360 = vpop.f32.mrb[0].mxu0
        %v1361 = vpop.f32.mrb[0].mxu0
        %v1362 = vpop.f32.mrb[0].mxu0
        %1363 = vdwg.mxu0
        %v1364 = vmul.f32 %v1319, 0.088388346
        %v1365 = vmul.f32 %v1359, 0.088388346
        %v1368 = vlaneseq
        %v1369 = vshrl.u32 %v1368, 7
        %v1370 = vsub.s32 0, %v1369
        %v1371 = vrot.slane %v1276, %v1370
        %v1372 = vlaneseq
        %v1373 = vshrl.u32 %v1372, 7
        %v1374 = vsub.s32 0, %v1373
        %v1375 = vrot.slane %v1277, %v1374
        %v1378 = vadd.f32 %v1364, %v1371
        %v1379 = vadd.f32 %v1365, %v1375
        %vm1380 = vcmask 64512
        %v1381 = vsel %vm1380, %v1378, -inf
        %1382 = vmax.xlane.f32.xlu0 %v1381
        %v1383 = vpop.xlane.xlu0 %1382
        %v1384 = vsel %vm1380, %v1379, -inf
        %1385 = vmax.xlane.f32.xlu0 %v1384
        %v1386 = vpop.xlane.xlu0 %1385
        %v1387 = vsub.f32 %v1378, %v1383
        %v1388 = vsub.f32 %v1379, %v1386
        %v1389 = vmul.f32 %v1387, 1.442695
        %v1390 = vpow.pop %v1389
        %v1391 = vmul.f32 %v1388, 1.442695
        %v1392 = vpow.pop %v1391
        %v1393 = vsel %vm1380, %v1390, 0.0
        %1394 = vadd.xlane.f32.xlu0 %v1393
        %v1395 = vpop.xlane.xlu0 %1394
        %v1396 = vsel %vm1380, %v1392, 0.0
        %1397 = vadd.xlane.f32.xlu0 %v1396
        %v1398 = vpop.xlane.xlu0 %1397
        %v1399 = vrcp.pop %v1395
        %v1400 = vrcp.pop %v1398
        %v1401 = vmul.f32 %v1390, %v1399
        %v1402 = vmul.f32 %v1392, %v1400
        %v1403 = vpack.c.bf16 %v1401, %v1401
        %v1404 = vpack.c.bf16 %v1402, %v1402
        %v1406 = vsel %vm1380, %v1403, 0
        %vm1408 = vcmask 1043456
        %v1410 = vsel %vm1408, %v1282, 0
        %1412 = vmatprep.subr.bf16.mxu0 0
        %1413 = vmatpush1.bf16.msra.mxu0 %v1410
        %1414 = vmatprep.subr.bf16.mxu0 0
        %1415 = vmatpush1.bf16.msra.mxu0 0
        %1416 = vmatprep.subr.bf16.mxu0 0
        %1417 = vmatpush1.bf16.msra.mxu0 0
        %1418 = vmatprep.subr.bf16.mxu0 0
        %1419 = vmatpush1.bf16.msra.mxu0 0
        %1420 = vmatprep.subr.bf16.mxu0 0
        %1421 = vmatpush1.bf16.msra.mxu0 0
        %1422 = vmatprep.subr.bf16.mxu0 0
        %1423 = vmatpush1.bf16.msra.mxu0 0
        %1424 = vmatprep.subr.bf16.mxu0 0
        %1425 = vmatpush1.bf16.msra.mxu0 0
        %1426 = vmatprep.subr.bf16.mxu0 0
        %1427 = vmatpush1.bf16.msra.mxu0 0
        %1428 = vmatprep.subr.bf16.mxu0 0
        %1429 = vmatpush1.bf16.msra.mxu0 0
        %1430 = vmatprep.subr.bf16.mxu0 0
        %1431 = vmatpush1.bf16.msra.mxu0 0
        %1432 = vmatprep.subr.bf16.mxu0 0
        %1433 = vmatpush1.bf16.msra.mxu0 0
        %1434 = vmatprep.subr.bf16.mxu0 0
        %1435 = vmatpush1.bf16.msra.mxu0 0
        %1436 = vmatprep.subr.bf16.mxu0 0
        %1437 = vmatpush1.bf16.msra.mxu0 0
        %1438 = vmatprep.subr.bf16.mxu0 0
        %1439 = vmatpush1.bf16.msra.mxu0 0
        %1440 = vmatprep.subr.bf16.mxu0 0
        %1441 = vmatpush1.bf16.msra.mxu0 0
        %1442 = vmatprep.subr.bf16.mxu0 0
        %1443 = vmatpush1.bf16.msra.mxu0 0
        %1444 = vmatprep.mubr.bf16.mxu0 0
        %1445 = vmatmul.mubr.bf16.gmra.mrb[0].mxu0 %v1406
        %v1446 = vpop.f32.mrb[0].mxu0
        %v1447 = vadd.f32 0.0, %v1446
        %v1448 = vpop.f32.mrb[0].mxu0
        %v1449 = vpop.f32.mrb[0].mxu0
        %v1450 = vpop.f32.mrb[0].mxu0
        %1451 = vdwg.mxu0
        %v1453 = vsel %vm1380, %v1404, 0
        %v1456 = vsel %vm1408, %v1283, 0
        %1458 = vmatprep.subr.bf16.mxu0 0
        %1459 = vmatpush1.bf16.msra.mxu0 %v1456
        %1460 = vmatprep.subr.bf16.mxu0 0
        %1461 = vmatpush1.bf16.msra.mxu0 0
        %1462 = vmatprep.subr.bf16.mxu0 0
        %1463 = vmatpush1.bf16.msra.mxu0 0
        %1464 = vmatprep.subr.bf16.mxu0 0
        %1465 = vmatpush1.bf16.msra.mxu0 0
        %1466 = vmatprep.subr.bf16.mxu0 0
        %1467 = vmatpush1.bf16.msra.mxu0 0
        %1468 = vmatprep.subr.bf16.mxu0 0
        %1469 = vmatpush1.bf16.msra.mxu0 0
        %1470 = vmatprep.subr.bf16.mxu0 0
        %1471 = vmatpush1.bf16.msra.mxu0 0
        %1472 = vmatprep.subr.bf16.mxu0 0
        %1473 = vmatpush1.bf16.msra.mxu0 0
        %1474 = vmatprep.subr.bf16.mxu0 0
        %1475 = vmatpush1.bf16.msra.mxu0 0
        %1476 = vmatprep.subr.bf16.mxu0 0
        %1477 = vmatpush1.bf16.msra.mxu0 0
        %1478 = vmatprep.subr.bf16.mxu0 0
        %1479 = vmatpush1.bf16.msra.mxu0 0
        %1480 = vmatprep.subr.bf16.mxu0 0
        %1481 = vmatpush1.bf16.msra.mxu0 0
        %1482 = vmatprep.subr.bf16.mxu0 0
        %1483 = vmatpush1.bf16.msra.mxu0 0
        %1484 = vmatprep.subr.bf16.mxu0 0
        %1485 = vmatpush1.bf16.msra.mxu0 0
        %1486 = vmatprep.subr.bf16.mxu0 0
        %1487 = vmatpush1.bf16.msra.mxu0 0
        %1488 = vmatprep.subr.bf16.mxu0 0
        %1489 = vmatpush1.bf16.msra.mxu0 0
        %1490 = vmatprep.mubr.bf16.mxu0 0
        %1491 = vmatmul.mubr.bf16.gmra.mrb[0].mxu0 %v1453
        %v1492 = vpop.f32.mrb[0].mxu0
        %v1493 = vadd.f32 0.0, %v1492
        %v1494 = vpop.f32.mrb[0].mxu0
        %v1495 = vpop.f32.mrb[0].mxu0
        %v1496 = vpop.f32.mrb[0].mxu0
        %1497 = vdwg.mxu0
        %v1498 = vpack.c.bf16 %v782, %v782
        %v1499 = vpack.c.bf16 %v786, %v786
        %v1500 = vpack.c.bf16 %v1026, %v1026
        %v1501 = vpack.c.bf16 %v1030, %v1030
        %v1502 = vpack.c.bf16 %v1270, %v1270
        %v1503 = vpack.c.bf16 %v1274, %v1274
        %1504 = vmatprep.subr.bf16.mxu0 0
        %1505 = vmatpush1.bf16.xpose.msra.mxu0 %v1500
        %1506 = vmatprep.subr.bf16.mxu0 0
        %1507 = vmatpush1.bf16.xpose.msra.mxu0 0
        %1508 = vmatprep.subr.bf16.mxu0 0
        %1509 = vmatpush1.bf16.xpose.msra.mxu0 0
        %1510 = vmatprep.subr.bf16.mxu0 0
        %1511 = vmatpush1.bf16.xpose.msra.mxu0 0
        %1512 = vmatprep.subr.bf16.mxu0 0
        %1513 = vmatpush1.bf16.xpose.msra.mxu0 0
        %1514 = vmatprep.subr.bf16.mxu0 0
        %1515 = vmatpush1.bf16.xpose.msra.mxu0 0
        %1516 = vmatprep.subr.bf16.mxu0 0
        %1517 = vmatpush1.bf16.xpose.msra.mxu0 0
        %1518 = vmatprep.subr.bf16.mxu0 0
        %1519 = vmatpush1.bf16.xpose.msra.mxu0 0
        %1520 = vmatprep.subr.bf16.mxu0 0
        %1521 = vmatpush1.bf16.xpose.msra.mxu0 0
        %1522 = vmatprep.subr.bf16.mxu0 0
        %1523 = vmatpush1.bf16.xpose.msra.mxu0 0
        %1524 = vmatprep.subr.bf16.mxu0 0
        %1525 = vmatpush1.bf16.xpose.msra.mxu0 0
        %1526 = vmatprep.subr.bf16.mxu0 0
        %1527 = vmatpush1.bf16.xpose.msra.mxu0 0
        %1528 = vmatprep.subr.bf16.mxu0 0
        %1529 = vmatpush1.bf16.xpose.msra.mxu0 0
        %1530 = vmatprep.subr.bf16.mxu0 0
        %1531 = vmatpush1.bf16.xpose.msra.mxu0 0
        %1532 = vmatprep.subr.bf16.mxu0 0
        %1533 = vmatpush1.bf16.xpose.msra.mxu0 0
        %1534 = vmatprep.subr.bf16.mxu0 0
        %1535 = vmatpush1.bf16.xpose.msra.mxu0 0
        %1536 = vmatprep.mubr.bf16.mxu0 0
        %1537 = vmatmul.mubr.bf16.gmra.mrb[0].mxu0 %v1498
        %v1538 = vpop.f32.mrb[0].mxu0
        %v1539 = vadd.f32 0.0, %v1538
        %v1540 = vpop.f32.mrb[0].mxu0
        %v1541 = vpop.f32.mrb[0].mxu0
        %v1542 = vpop.f32.mrb[0].mxu0
        %1543 = vdwg.mxu0
        %1544 = vmatprep.subr.bf16.mxu0 0
        %1545 = vmatpush1.bf16.xpose.msra.mxu0 %v1501
        %1546 = vmatprep.subr.bf16.mxu0 0
        %1547 = vmatpush1.bf16.xpose.msra.mxu0 0
        %1548 = vmatprep.subr.bf16.mxu0 0
        %1549 = vmatpush1.bf16.xpose.msra.mxu0 0
        %1550 = vmatprep.subr.bf16.mxu0 0
        %1551 = vmatpush1.bf16.xpose.msra.mxu0 0
        %1552 = vmatprep.subr.bf16.mxu0 0
        %1553 = vmatpush1.bf16.xpose.msra.mxu0 0
        %1554 = vmatprep.subr.bf16.mxu0 0
        %1555 = vmatpush1.bf16.xpose.msra.mxu0 0
        %1556 = vmatprep.subr.bf16.mxu0 0
        %1557 = vmatpush1.bf16.xpose.msra.mxu0 0
        %1558 = vmatprep.subr.bf16.mxu0 0
        %1559 = vmatpush1.bf16.xpose.msra.mxu0 0
        %1560 = vmatprep.subr.bf16.mxu0 0
        %1561 = vmatpush1.bf16.xpose.msra.mxu0 0
        %1562 = vmatprep.subr.bf16.mxu0 0
        %1563 = vmatpush1.bf16.xpose.msra.mxu0 0
        %1564 = vmatprep.subr.bf16.mxu0 0
        %1565 = vmatpush1.bf16.xpose.msra.mxu0 0
        %1566 = vmatprep.subr.bf16.mxu0 0
        %1567 = vmatpush1.bf16.xpose.msra.mxu0 0
        %1568 = vmatprep.subr.bf16.mxu0 0
        %1569 = vmatpush1.bf16.xpose.msra.mxu0 0
        %1570 = vmatprep.subr.bf16.mxu0 0
        %1571 = vmatpush1.bf16.xpose.msra.mxu0 0
        %1572 = vmatprep.subr.bf16.mxu0 0
        %1573 = vmatpush1.bf16.xpose.msra.mxu0 0
        %1574 = vmatprep.subr.bf16.mxu0 0
        %1575 = vmatpush1.bf16.xpose.msra.mxu0 0
        %1576 = vmatprep.mubr.bf16.mxu0 0
        %1577 = vmatmul.mubr.bf16.gmra.mrb[0].mxu0 %v1499
        %v1578 = vpop.f32.mrb[0].mxu0
        %v1579 = vadd.f32 0.0, %v1578
        %v1580 = vpop.f32.mrb[0].mxu0
        %v1581 = vpop.f32.mrb[0].mxu0
        %v1582 = vpop.f32.mrb[0].mxu0
        %1583 = vdwg.mxu0
        %v1584 = vmul.f32 %v1539, 0.088388346
        %v1585 = vmul.f32 %v1579, 0.088388346
        %v1586 = vadd.f32 %v1584, %v1371
        %v1587 = vadd.f32 %v1585, %v1375
        %v1588 = vsel %vm1380, %v1586, -inf
        %1589 = vmax.xlane.f32.xlu0 %v1588
        %v1590 = vpop.xlane.xlu0 %1589
        %v1591 = vsel %vm1380, %v1587, -inf
        %1592 = vmax.xlane.f32.xlu0 %v1591
        %v1593 = vpop.xlane.xlu0 %1592
        %v1594 = vsub.f32 %v1586, %v1590
        %v1595 = vsub.f32 %v1587, %v1593
        %v1596 = vmul.f32 %v1594, 1.442695
        %v1597 = vpow.pop %v1596
        %v1598 = vmul.f32 %v1595, 1.442695
        %v1599 = vpow.pop %v1598
        %v1600 = vsel %vm1380, %v1597, 0.0
        %1601 = vadd.xlane.f32.xlu0 %v1600
        %v1602 = vpop.xlane.xlu0 %1601
        %v1603 = vsel %vm1380, %v1599, 0.0
        %1604 = vadd.xlane.f32.xlu0 %v1603
        %v1605 = vpop.xlane.xlu0 %1604
        %v1606 = vrcp.pop %v1602
        %v1607 = vrcp.pop %v1605
        %v1608 = vmul.f32 %v1597, %v1606
        %v1609 = vmul.f32 %v1599, %v1607
        %v1610 = vpack.c.bf16 %v1608, %v1608
        %v1611 = vpack.c.bf16 %v1609, %v1609
        %v1613 = vsel %vm1380, %v1610, 0
        %v1616 = vsel %vm1408, %v1502, 0
        %1618 = vmatprep.subr.bf16.mxu0 0
        %1619 = vmatpush1.bf16.msra.mxu0 %v1616
        %1620 = vmatprep.subr.bf16.mxu0 0
        %1621 = vmatpush1.bf16.msra.mxu0 0
        %1622 = vmatprep.subr.bf16.mxu0 0
        %1623 = vmatpush1.bf16.msra.mxu0 0
        %1624 = vmatprep.subr.bf16.mxu0 0
        %1625 = vmatpush1.bf16.msra.mxu0 0
        %1626 = vmatprep.subr.bf16.mxu0 0
        %1627 = vmatpush1.bf16.msra.mxu0 0
        %1628 = vmatprep.subr.bf16.mxu0 0
        %1629 = vmatpush1.bf16.msra.mxu0 0
        %1630 = vmatprep.subr.bf16.mxu0 0
        %1631 = vmatpush1.bf16.msra.mxu0 0
        %1632 = vmatprep.subr.bf16.mxu0 0
        %1633 = vmatpush1.bf16.msra.mxu0 0
        %1634 = vmatprep.subr.bf16.mxu0 0
        %1635 = vmatpush1.bf16.msra.mxu0 0
        %1636 = vmatprep.subr.bf16.mxu0 0
        %1637 = vmatpush1.bf16.msra.mxu0 0
        %1638 = vmatprep.subr.bf16.mxu0 0
        %1639 = vmatpush1.bf16.msra.mxu0 0
        %1640 = vmatprep.subr.bf16.mxu0 0
        %1641 = vmatpush1.bf16.msra.mxu0 0
        %1642 = vmatprep.subr.bf16.mxu0 0
        %1643 = vmatpush1.bf16.msra.mxu0 0
        %1644 = vmatprep.subr.bf16.mxu0 0
        %1645 = vmatpush1.bf16.msra.mxu0 0
        %1646 = vmatprep.subr.bf16.mxu0 0
        %1647 = vmatpush1.bf16.msra.mxu0 0
        %1648 = vmatprep.subr.bf16.mxu0 0
        %1649 = vmatpush1.bf16.msra.mxu0 0
        %1650 = vmatprep.mubr.bf16.mxu0 0
        %1651 = vmatmul.mubr.bf16.gmra.mrb[0].mxu0 %v1613
        %v1652 = vpop.f32.mrb[0].mxu0
        %v1653 = vadd.f32 0.0, %v1652
        %v1654 = vpop.f32.mrb[0].mxu0
        %v1655 = vpop.f32.mrb[0].mxu0
        %v1656 = vpop.f32.mrb[0].mxu0
        %1657 = vdwg.mxu0
        %v1659 = vsel %vm1380, %v1611, 0
        %v1662 = vsel %vm1408, %v1503, 0
        %1664 = vmatprep.subr.bf16.mxu0 0
        %1665 = vmatpush1.bf16.msra.mxu0 %v1662
        %1666 = vmatprep.subr.bf16.mxu0 0
        %1667 = vmatpush1.bf16.msra.mxu0 0
        %1668 = vmatprep.subr.bf16.mxu0 0
        %1669 = vmatpush1.bf16.msra.mxu0 0
        %1670 = vmatprep.subr.bf16.mxu0 0
        %1671 = vmatpush1.bf16.msra.mxu0 0
        %1672 = vmatprep.subr.bf16.mxu0 0
        %1673 = vmatpush1.bf16.msra.mxu0 0
        %1674 = vmatprep.subr.bf16.mxu0 0
        %1675 = vmatpush1.bf16.msra.mxu0 0
        %1676 = vmatprep.subr.bf16.mxu0 0
        %1677 = vmatpush1.bf16.msra.mxu0 0
        %1678 = vmatprep.subr.bf16.mxu0 0
        %1679 = vmatpush1.bf16.msra.mxu0 0
        %1680 = vmatprep.subr.bf16.mxu0 0
        %1681 = vmatpush1.bf16.msra.mxu0 0
        %1682 = vmatprep.subr.bf16.mxu0 0
        %1683 = vmatpush1.bf16.msra.mxu0 0
        %1684 = vmatprep.subr.bf16.mxu0 0
        %1685 = vmatpush1.bf16.msra.mxu0 0
        %1686 = vmatprep.subr.bf16.mxu0 0
        %1687 = vmatpush1.bf16.msra.mxu0 0
        %1688 = vmatprep.subr.bf16.mxu0 0
        %1689 = vmatpush1.bf16.msra.mxu0 0
        %1690 = vmatprep.subr.bf16.mxu0 0
        %1691 = vmatpush1.bf16.msra.mxu0 0
        %1692 = vmatprep.subr.bf16.mxu0 0
        %1693 = vmatpush1.bf16.msra.mxu0 0
        %1694 = vmatprep.subr.bf16.mxu0 0
        %1695 = vmatpush1.bf16.msra.mxu0 0
        %1696 = vmatprep.mubr.bf16.mxu0 0
        %1697 = vmatmul.mubr.bf16.gmra.mrb[0].mxu0 %v1659
        %v1698 = vpop.f32.mrb[0].mxu0
        %v1699 = vadd.f32 0.0, %v1698
        %v1700 = vpop.f32.mrb[0].mxu0
        %v1701 = vpop.f32.mrb[0].mxu0
        %v1702 = vpop.f32.mrb[0].mxu0
        %1703 = vdwg.mxu0
        %v1704 = vpack.c.bf16 %v1493, %v1447
        %v1705 = vpack.c.bf16 %v1699, %v1653
        %s1706 = scalar_lea.vmem %s438, 768 [#allocation3]
        %v1707 = vld [vmem:[%s1706] sm:$0xff]
        %v1708 = vld [vmem:[%s1706 + $0x8] sm:$0xff]
        %v1709 = vld [vmem:[%s1706 + $0x10] sm:$0xff]
        %v1710 = vld [vmem:[%s1706 + $0x18] sm:$0xff]
        %v1711 = vld [vmem:[%s1706 + $0x20] sm:$0xff]
        %v1712 = vld [vmem:[%s1706 + $0x28] sm:$0xff]
        %v1713 = vld [vmem:[%s1706 + $0x30] sm:$0xff]
        %v1714 = vld [vmem:[%s1706 + $0x38] sm:$0xff]
        %v1715 = vld [vmem:[%s1706 + $0x40] sm:$0xff]
        %v1716 = vld [vmem:[%s1706 + $0x48] sm:$0xff]
        %v1717 = vld [vmem:[%s1706 + $0x50] sm:$0xff]
        %v1718 = vld [vmem:[%s1706 + $0x58] sm:$0xff]
        %v1719 = vld [vmem:[%s1706 + $0x60] sm:$0xff]
        %v1720 = vld [vmem:[%s1706 + $0x68] sm:$0xff]
        %v1721 = vld [vmem:[%s1706 + $0x70] sm:$0xff]
        %v1722 = vld [vmem:[%s1706 + $0x78] sm:$0xff]
        %v1723 = vld [vmem:[%s1706 + $0x80] sm:$0xff]
        %v1724 = vld [vmem:[%s1706 + $0x88] sm:$0xff]
        %v1725 = vld [vmem:[%s1706 + $0x90] sm:$0xff]
        %v1726 = vld [vmem:[%s1706 + $0x98] sm:$0xff]
        %v1727 = vld [vmem:[%s1706 + $0xa0] sm:$0xff]
        %v1728 = vld [vmem:[%s1706 + $0xa8] sm:$0xff]
        %v1729 = vld [vmem:[%s1706 + $0xb0] sm:$0xff]
        %v1730 = vld [vmem:[%s1706 + $0xb8] sm:$0xff]
        %v1731 = vld [vmem:[%s1706 + $0xc0] sm:$0xff]
        %v1732 = vld [vmem:[%s1706 + $0xc8] sm:$0xff]
        %v1733 = vld [vmem:[%s1706 + $0xd0] sm:$0xff]
        %v1734 = vld [vmem:[%s1706 + $0xd8] sm:$0xff]
        %v1735 = vld [vmem:[%s1706 + $0xe0] sm:$0xff]
        %v1736 = vld [vmem:[%s1706 + $0xe8] sm:$0xff]
        %v1737 = vld [vmem:[%s1706 + $0xf0] sm:$0xff]
        %v1738 = vld [vmem:[%s1706 + $0xf8] sm:$0xff]
        %v1739 = vlaneseq
        %v1740 = vshrl.u32 %v1739, 7
        %v1741 = vsub.s32 3, %v1740
        %v1742 = vrot.slane %v541, %v1741
        %v1743 = vlaneseq
        %v1744 = vshrl.u32 %v1743, 7
        %v1745 = vsub.s32 3, %v1744
        %v1746 = vrot.slane %v542, %v1745
        %v1779 = vunpack.c.l.b16 %v1707
        %v1780 = vunpack.c.h.b16 %v1707
        %v1781 = vunpack.c.l.b16 %v1708
        %v1782 = vunpack.c.h.b16 %v1708
        %v1783 = vunpack.c.l.b16 %v1709
        %v1784 = vunpack.c.h.b16 %v1709
        %v1785 = vunpack.c.l.b16 %v1710
        %v1786 = vunpack.c.h.b16 %v1710
        %v1787 = vunpack.c.l.b16 %v1711
        %v1788 = vunpack.c.h.b16 %v1711
        %v1789 = vunpack.c.l.b16 %v1712
        %v1790 = vunpack.c.h.b16 %v1712
        %v1791 = vunpack.c.l.b16 %v1713
        %v1792 = vunpack.c.h.b16 %v1713
        %v1793 = vunpack.c.l.b16 %v1714
        %v1794 = vunpack.c.h.b16 %v1714
        %v1795 = vunpack.c.l.b16 %v1715
        %v1796 = vunpack.c.h.b16 %v1715
        %v1797 = vunpack.c.l.b16 %v1716
        %v1798 = vunpack.c.h.b16 %v1716
        %v1799 = vunpack.c.l.b16 %v1717
        %v1800 = vunpack.c.h.b16 %v1717
        %v1801 = vunpack.c.l.b16 %v1718
        %v1802 = vunpack.c.h.b16 %v1718
        %v1803 = vunpack.c.l.b16 %v1719
        %v1804 = vunpack.c.h.b16 %v1719
        %v1805 = vunpack.c.l.b16 %v1720
        %v1806 = vunpack.c.h.b16 %v1720
        %v1807 = vunpack.c.l.b16 %v1721
        %v1808 = vunpack.c.h.b16 %v1721
        %v1809 = vunpack.c.l.b16 %v1722
        %v1810 = vunpack.c.h.b16 %v1722
        %v1811 = vunpack.c.l.b16 %v1723
        %v1812 = vunpack.c.h.b16 %v1723
        %v1813 = vunpack.c.l.b16 %v1724
        %v1814 = vunpack.c.h.b16 %v1724
        %v1815 = vunpack.c.l.b16 %v1725
        %v1816 = vunpack.c.h.b16 %v1725
        %v1817 = vunpack.c.l.b16 %v1726
        %v1818 = vunpack.c.h.b16 %v1726
        %v1819 = vunpack.c.l.b16 %v1727
        %v1820 = vunpack.c.h.b16 %v1727
        %v1821 = vunpack.c.l.b16 %v1728
        %v1822 = vunpack.c.h.b16 %v1728
        %v1823 = vunpack.c.l.b16 %v1729
        %v1824 = vunpack.c.h.b16 %v1729
        %v1825 = vunpack.c.l.b16 %v1730
        %v1826 = vunpack.c.h.b16 %v1730
        %v1827 = vunpack.c.l.b16 %v1731
        %v1828 = vunpack.c.h.b16 %v1731
        %v1829 = vunpack.c.l.b16 %v1732
        %v1830 = vunpack.c.h.b16 %v1732
        %v1831 = vunpack.c.l.b16 %v1733
        %v1832 = vunpack.c.h.b16 %v1733
        %v1833 = vunpack.c.l.b16 %v1734
        %v1834 = vunpack.c.h.b16 %v1734
        %v1835 = vunpack.c.l.b16 %v1735
        %v1836 = vunpack.c.h.b16 %v1735
        %v1837 = vunpack.c.l.b16 %v1736
        %v1838 = vunpack.c.h.b16 %v1736
        %v1839 = vunpack.c.l.b16 %v1737
        %v1840 = vunpack.c.h.b16 %v1737
        %v1841 = vunpack.c.l.b16 %v1738
        %v1842 = vunpack.c.h.b16 %v1738
        %v1843 = vpack.c.b16 %v1781, %v1779
        %v1844 = vpack.c.b16 %v1782, %v1780
        %v1845 = vpack.c.b16 %v1785, %v1783
        %v1846 = vpack.c.b16 %v1786, %v1784
        %v1847 = vpack.c.b16 %v1789, %v1787
        %v1848 = vpack.c.b16 %v1790, %v1788
        %v1849 = vpack.c.b16 %v1793, %v1791
        %v1850 = vpack.c.b16 %v1794, %v1792
        %v1851 = vpack.c.b16 %v1797, %v1795
        %v1852 = vpack.c.b16 %v1798, %v1796
        %v1853 = vpack.c.b16 %v1801, %v1799
        %v1854 = vpack.c.b16 %v1802, %v1800
        %v1855 = vpack.c.b16 %v1805, %v1803
        %v1856 = vpack.c.b16 %v1806, %v1804
        %v1857 = vpack.c.b16 %v1809, %v1807
        %v1858 = vpack.c.b16 %v1810, %v1808
        %v1859 = vpack.c.b16 %v1813, %v1811
        %v1860 = vpack.c.b16 %v1814, %v1812
        %v1861 = vpack.c.b16 %v1817, %v1815
        %v1862 = vpack.c.b16 %v1818, %v1816
        %v1863 = vpack.c.b16 %v1821, %v1819
        %v1864 = vpack.c.b16 %v1822, %v1820
        %v1865 = vpack.c.b16 %v1825, %v1823
        %v1866 = vpack.c.b16 %v1826, %v1824
        %v1867 = vpack.c.b16 %v1829, %v1827
        %v1868 = vpack.c.b16 %v1830, %v1828
        %v1869 = vpack.c.b16 %v1833, %v1831
        %v1870 = vpack.c.b16 %v1834, %v1832
        %v1871 = vpack.c.b16 %v1837, %v1835
        %v1872 = vpack.c.b16 %v1838, %v1836
        %v1873 = vpack.c.b16 %v1841, %v1839
        %v1874 = vpack.c.b16 %v1842, %v1840
        %1907 = vmatprep.subr.bf16.mxu0 %v1844
        %1908 = vmatpush1.bf16.msra.mxu0 %v1843
        %1909 = vmatprep.subr.bf16.mxu0 %v1846
        %1910 = vmatpush1.bf16.msra.mxu0 %v1845
        %1911 = vmatprep.subr.bf16.mxu0 %v1848
        %1912 = vmatpush1.bf16.msra.mxu0 %v1847
        %1913 = vmatprep.subr.bf16.mxu0 %v1850
        %1914 = vmatpush1.bf16.msra.mxu0 %v1849
        %1915 = vmatprep.subr.bf16.mxu0 %v1852
        %1916 = vmatpush1.bf16.msra.mxu0 %v1851
        %1917 = vmatprep.subr.bf16.mxu0 %v1854
        %1918 = vmatpush1.bf16.msra.mxu0 %v1853
        %1919 = vmatprep.subr.bf16.mxu0 %v1856
        %1920 = vmatpush1.bf16.msra.mxu0 %v1855
        %1921 = vmatprep.subr.bf16.mxu0 %v1858
        %1922 = vmatpush1.bf16.msra.mxu0 %v1857
        %1923 = vmatprep.subr.bf16.mxu0 %v1860
        %1924 = vmatpush1.bf16.msra.mxu0 %v1859
        %1925 = vmatprep.subr.bf16.mxu0 %v1862
        %1926 = vmatpush1.bf16.msra.mxu0 %v1861
        %1927 = vmatprep.subr.bf16.mxu0 %v1864
        %1928 = vmatpush1.bf16.msra.mxu0 %v1863
        %1929 = vmatprep.subr.bf16.mxu0 %v1866
        %1930 = vmatpush1.bf16.msra.mxu0 %v1865
        %1931 = vmatprep.subr.bf16.mxu0 %v1868
        %1932 = vmatpush1.bf16.msra.mxu0 %v1867
        %1933 = vmatprep.subr.bf16.mxu0 %v1870
        %1934 = vmatpush1.bf16.msra.mxu0 %v1869
        %1935 = vmatprep.subr.bf16.mxu0 %v1872
        %1936 = vmatpush1.bf16.msra.mxu0 %v1871
        %1937 = vmatprep.subr.bf16.mxu0 %v1874
        %1938 = vmatpush1.bf16.msra.mxu0 %v1873
        %1939 = vmatprep.mubr.bf16.mxu0 %v1705
        %1940 = vmatmul.mubr.bf16.gmra.mrb[0].mxu0 %v1704
        %v1941 = vpop.f32.mrb[0].mxu0
        %v1942 = vadd.f32 %v1742, %v1941
        %v1943 = vpop.f32.mrb[0].mxu0
        %v1944 = vadd.f32 %v1746, %v1943
        %v1945 = vpop.f32.mrb[0].mxu0
        %v1946 = vadd.f32 %v1742, %v1945
        %v1947 = vpop.f32.mrb[0].mxu0
        %v1948 = vadd.f32 %v1746, %v1947
        %1949 = vdwg.mxu0
        %v1950 = vadd.f32 %v535, %v1942
        %v1951 = vadd.f32 %v536, %v1944
        %v1952 = vadd.f32 %v537, %v1946
        %v1953 = vadd.f32 %v538, %v1948
        %v1954 = vadd.f32 %v1950, %v1951
        %1955 = vadd.xlane.f32.xlu0 %v1954
        %v1956 = vpop.xlane.xlu0 %1955
        %v1957 = vadd.f32 %v1952, %v1953
        %1958 = vadd.xlane.f32.xlu0 %v1957
        %v1959 = vpop.xlane.xlu0 %1958
        %v1960 = vrcp.pop 256.0
        %v1961 = vmul.f32 %v1956, %v1960
        %v1962 = vmul.f32 %v1959, %v1960
        %v1963 = vsub.f32 %v1950, %v1961
        %v1964 = vsub.f32 %v1951, %v1961
        %v1965 = vsub.f32 %v1952, %v1962
        %v1966 = vsub.f32 %v1953, %v1962
        %v1967 = vmul.f32 %v1963, %v1963
        %v1968 = vmul.f32 %v1964, %v1964
        %v1969 = vmul.f32 %v1965, %v1965
        %v1970 = vmul.f32 %v1966, %v1966
        %v1971 = vadd.f32 %v1967, %v1968
        %1972 = vadd.xlane.f32.xlu0 %v1971
        %v1973 = vpop.xlane.xlu0 %1972
        %v1974 = vadd.f32 %v1969, %v1970
        %1975 = vadd.xlane.f32.xlu0 %v1974
        %v1976 = vpop.xlane.xlu0 %1975
        %v1977 = vmul.f32 %v1973, %v1960
        %v1978 = vmul.f32 %v1976, %v1960
        %v1979 = vadd.f32 %v1977, 1e-12
        %v1980 = vadd.f32 %v1978, 1e-12
        %v1981 = vrsqrt.pop %v1979
        %v1982 = vrsqrt.pop %v1980
        %v1983 = vmul.f32 %v1963, %v1981
        %v1984 = vmul.f32 %v1964, %v1981
        %v1985 = vmul.f32 %v1965, %v1982
        %v1986 = vmul.f32 %v1966, %v1982
        %v1987 = vlaneseq
        %v1988 = vshrl.u32 %v1987, 7
        %v1989 = vsub.s32 4, %v1988
        %v1990 = vrot.slane %v541, %v1989
        %v1991 = vlaneseq
        %v1992 = vshrl.u32 %v1991, 7
        %v1993 = vsub.s32 4, %v1992
        %v1994 = vrot.slane %v542, %v1993
        %v1995 = vmul.f32 %v1983, %v1990
        %v1996 = vmul.f32 %v1984, %v1994
        %v1997 = vmul.f32 %v1985, %v1990
        %v1998 = vmul.f32 %v1986, %v1994
        %v1999 = vlaneseq
        %v2000 = vshrl.u32 %v1999, 7
        %v2001 = vsub.s32 5, %v2000
        %v2002 = vrot.slane %v541, %v2001
        %v2003 = vlaneseq
        %v2004 = vshrl.u32 %v2003, 7
        %v2005 = vsub.s32 5, %v2004
        %v2006 = vrot.slane %v542, %v2005
        %v2007 = vadd.f32 %v1995, %v2002
        %v2008 = vadd.f32 %v1996, %v2006
        %v2009 = vadd.f32 %v1997, %v2002
        %v2010 = vadd.f32 %v1998, %v2006
        %v2011 = vpack.c.bf16 %v2009, %v2007
        %v2012 = vpack.c.bf16 %v2010, %v2008
        %v2013 = vld [vmem:[%s447] sm:$0xff]
        %v2014 = vld [vmem:[%s447 + $0x8] sm:$0xff]
        %v2015 = vld [vmem:[%s447 + $0x10] sm:$0xff]
        %v2016 = vld [vmem:[%s447 + $0x18] sm:$0xff]
        %v2017 = vld [vmem:[%s447 + $0x20] sm:$0xff]
        %v2018 = vld [vmem:[%s447 + $0x28] sm:$0xff]
        %v2019 = vld [vmem:[%s447 + $0x30] sm:$0xff]
        %v2020 = vld [vmem:[%s447 + $0x38] sm:$0xff]
        %v2021 = vld [vmem:[%s447 + $0x40] sm:$0xff]
        %v2022 = vld [vmem:[%s447 + $0x48] sm:$0xff]
        %v2023 = vld [vmem:[%s447 + $0x50] sm:$0xff]
        %v2024 = vld [vmem:[%s447 + $0x58] sm:$0xff]
        %v2025 = vld [vmem:[%s447 + $0x60] sm:$0xff]
        %v2026 = vld [vmem:[%s447 + $0x68] sm:$0xff]
        %v2027 = vld [vmem:[%s447 + $0x70] sm:$0xff]
        %v2028 = vld [vmem:[%s447 + $0x78] sm:$0xff]
        %v2029 = vld [vmem:[%s447 + $0x80] sm:$0xff]
        %v2030 = vld [vmem:[%s447 + $0x88] sm:$0xff]
        %v2031 = vld [vmem:[%s447 + $0x90] sm:$0xff]
        %v2032 = vld [vmem:[%s447 + $0x98] sm:$0xff]
        %v2033 = vld [vmem:[%s447 + $0xa0] sm:$0xff]
        %v2034 = vld [vmem:[%s447 + $0xa8] sm:$0xff]
        %v2035 = vld [vmem:[%s447 + $0xb0] sm:$0xff]
        %v2036 = vld [vmem:[%s447 + $0xb8] sm:$0xff]
        %v2037 = vld [vmem:[%s447 + $0xc0] sm:$0xff]
        %v2038 = vld [vmem:[%s447 + $0xc8] sm:$0xff]
        %v2039 = vld [vmem:[%s447 + $0xd0] sm:$0xff]
        %v2040 = vld [vmem:[%s447 + $0xd8] sm:$0xff]
        %v2041 = vld [vmem:[%s447 + $0xe0] sm:$0xff]
        %v2042 = vld [vmem:[%s447 + $0xe8] sm:$0xff]
        %v2043 = vld [vmem:[%s447 + $0xf0] sm:$0xff]
        %v2044 = vld [vmem:[%s447 + $0xf8] sm:$0xff]
        %v2045 = vld [vmem:[%s447 + $0x100] sm:$0xff]
        %v2046 = vld [vmem:[%s447 + $0x108] sm:$0xff]
        %v2047 = vld [vmem:[%s447 + $0x110] sm:$0xff]
        %v2048 = vld [vmem:[%s447 + $0x118] sm:$0xff]
        %v2049 = vld [vmem:[%s447 + $0x120] sm:$0xff]
        %v2050 = vld [vmem:[%s447 + $0x128] sm:$0xff]
        %v2051 = vld [vmem:[%s447 + $0x130] sm:$0xff]
        %v2052 = vld [vmem:[%s447 + $0x138] sm:$0xff]
        %v2053 = vld [vmem:[%s447 + $0x140] sm:$0xff]
        %v2054 = vld [vmem:[%s447 + $0x148] sm:$0xff]
        %v2055 = vld [vmem:[%s447 + $0x150] sm:$0xff]
        %v2056 = vld [vmem:[%s447 + $0x158] sm:$0xff]
        %v2057 = vld [vmem:[%s447 + $0x160] sm:$0xff]
        %v2058 = vld [vmem:[%s447 + $0x168] sm:$0xff]
        %v2059 = vld [vmem:[%s447 + $0x170] sm:$0xff]
        %v2060 = vld [vmem:[%s447 + $0x178] sm:$0xff]
        %v2061 = vld [vmem:[%s447 + $0x180] sm:$0xff]
        %v2062 = vld [vmem:[%s447 + $0x188] sm:$0xff]
        %v2063 = vld [vmem:[%s447 + $0x190] sm:$0xff]
        %v2064 = vld [vmem:[%s447 + $0x198] sm:$0xff]
        %v2065 = vld [vmem:[%s447 + $0x1a0] sm:$0xff]
        %v2066 = vld [vmem:[%s447 + $0x1a8] sm:$0xff]
        %v2067 = vld [vmem:[%s447 + $0x1b0] sm:$0xff]
        %v2068 = vld [vmem:[%s447 + $0x1b8] sm:$0xff]
        %v2069 = vld [vmem:[%s447 + $0x1c0] sm:$0xff]
        %v2070 = vld [vmem:[%s447 + $0x1c8] sm:$0xff]
        %v2071 = vld [vmem:[%s447 + $0x1d0] sm:$0xff]
        %v2072 = vld [vmem:[%s447 + $0x1d8] sm:$0xff]
        %v2073 = vld [vmem:[%s447 + $0x1e0] sm:$0xff]
        %v2074 = vld [vmem:[%s447 + $0x1e8] sm:$0xff]
        %v2075 = vld [vmem:[%s447 + $0x1f0] sm:$0xff]
        %v2076 = vld [vmem:[%s447 + $0x1f8] sm:$0xff]
        %v2077 = vld [vmem:[%s521] sm:$0xf]
        %v2079 = vlaneseq
        %v2080 = vshrl.u32 %v2079, 7
        %v2081 = vsub.s32 0, %v2080
        %v2082 = vrot.slane %v2077, %v2081
        %v2083 = vlaneseq
        %v2084 = vshrl.u32 %v2083, 7
        %v2085 = vsub.s32 1, %v2084
        %v2086 = vrot.slane %v2077, %v2085
        %v2087 = vlaneseq
        %v2088 = vshrl.u32 %v2087, 7
        %v2089 = vsub.s32 2, %v2088
        %v2090 = vrot.slane %v2077, %v2089
        %v2091 = vlaneseq
        %v2092 = vshrl.u32 %v2091, 7
        %v2093 = vsub.s32 3, %v2092
        %v2094 = vrot.slane %v2077, %v2093
        %v2163 = vunpack.c.l.b16 %v2013
        %v2164 = vunpack.c.h.b16 %v2013
        %v2165 = vunpack.c.l.b16 %v2014
        %v2166 = vunpack.c.h.b16 %v2014
        %v2167 = vunpack.c.l.b16 %v2015
        %v2168 = vunpack.c.h.b16 %v2015
        %v2169 = vunpack.c.l.b16 %v2016
        %v2170 = vunpack.c.h.b16 %v2016
        %v2171 = vunpack.c.l.b16 %v2017
        %v2172 = vunpack.c.h.b16 %v2017
        %v2173 = vunpack.c.l.b16 %v2018
        %v2174 = vunpack.c.h.b16 %v2018
        %v2175 = vunpack.c.l.b16 %v2019
        %v2176 = vunpack.c.h.b16 %v2019
        %v2177 = vunpack.c.l.b16 %v2020
        %v2178 = vunpack.c.h.b16 %v2020
        %v2179 = vunpack.c.l.b16 %v2021
        %v2180 = vunpack.c.h.b16 %v2021
        %v2181 = vunpack.c.l.b16 %v2022
        %v2182 = vunpack.c.h.b16 %v2022
        %v2183 = vunpack.c.l.b16 %v2023
        %v2184 = vunpack.c.h.b16 %v2023
        %v2185 = vunpack.c.l.b16 %v2024
        %v2186 = vunpack.c.h.b16 %v2024
        %v2187 = vunpack.c.l.b16 %v2025
        %v2188 = vunpack.c.h.b16 %v2025
        %v2189 = vunpack.c.l.b16 %v2026
        %v2190 = vunpack.c.h.b16 %v2026
        %v2191 = vunpack.c.l.b16 %v2027
        %v2192 = vunpack.c.h.b16 %v2027
        %v2193 = vunpack.c.l.b16 %v2028
        %v2194 = vunpack.c.h.b16 %v2028
        %v2195 = vunpack.c.l.b16 %v2029
        %v2196 = vunpack.c.h.b16 %v2029
        %v2197 = vunpack.c.l.b16 %v2030
        %v2198 = vunpack.c.h.b16 %v2030
        %v2199 = vunpack.c.l.b16 %v2031
        %v2200 = vunpack.c.h.b16 %v2031
        %v2201 = vunpack.c.l.b16 %v2032
        %v2202 = vunpack.c.h.b16 %v2032
        %v2203 = vunpack.c.l.b16 %v2033
        %v2204 = vunpack.c.h.b16 %v2033
        %v2205 = vunpack.c.l.b16 %v2034
        %v2206 = vunpack.c.h.b16 %v2034
        %v2207 = vunpack.c.l.b16 %v2035
        %v2208 = vunpack.c.h.b16 %v2035
        %v2209 = vunpack.c.l.b16 %v2036
        %v2210 = vunpack.c.h.b16 %v2036
        %v2211 = vunpack.c.l.b16 %v2037
        %v2212 = vunpack.c.h.b16 %v2037
        %v2213 = vunpack.c.l.b16 %v2038
        %v2214 = vunpack.c.h.b16 %v2038
        %v2215 = vunpack.c.l.b16 %v2039
        %v2216 = vunpack.c.h.b16 %v2039
        %v2217 = vunpack.c.l.b16 %v2040
        %v2218 = vunpack.c.h.b16 %v2040
        %v2219 = vunpack.c.l.b16 %v2041
        %v2220 = vunpack.c.h.b16 %v2041
        %v2221 = vunpack.c.l.b16 %v2042
        %v2222 = vunpack.c.h.b16 %v2042
        %v2223 = vunpack.c.l.b16 %v2043
        %v2224 = vunpack.c.h.b16 %v2043
        %v2225 = vunpack.c.l.b16 %v2044
        %v2226 = vunpack.c.h.b16 %v2044
        %v2227 = vunpack.c.l.b16 %v2045
        %v2228 = vunpack.c.h.b16 %v2045
        %v2229 = vunpack.c.l.b16 %v2046
        %v2230 = vunpack.c.h.b16 %v2046
        %v2231 = vunpack.c.l.b16 %v2047
        %v2232 = vunpack.c.h.b16 %v2047
        %v2233 = vunpack.c.l.b16 %v2048
        %v2234 = vunpack.c.h.b16 %v2048
        %v2235 = vunpack.c.l.b16 %v2049
        %v2236 = vunpack.c.h.b16 %v2049
        %v2237 = vunpack.c.l.b16 %v2050
        %v2238 = vunpack.c.h.b16 %v2050
        %v2239 = vunpack.c.l.b16 %v2051
        %v2240 = vunpack.c.h.b16 %v2051
        %v2241 = vunpack.c.l.b16 %v2052
        %v2242 = vunpack.c.h.b16 %v2052
        %v2243 = vunpack.c.l.b16 %v2053
        %v2244 = vunpack.c.h.b16 %v2053
        %v2245 = vunpack.c.l.b16 %v2054
        %v2246 = vunpack.c.h.b16 %v2054
        %v2247 = vunpack.c.l.b16 %v2055
        %v2248 = vunpack.c.h.b16 %v2055
        %v2249 = vunpack.c.l.b16 %v2056
        %v2250 = vunpack.c.h.b16 %v2056
        %v2251 = vunpack.c.l.b16 %v2057
        %v2252 = vunpack.c.h.b16 %v2057
        %v2253 = vunpack.c.l.b16 %v2058
        %v2254 = vunpack.c.h.b16 %v2058
        %v2255 = vunpack.c.l.b16 %v2059
        %v2256 = vunpack.c.h.b16 %v2059
        %v2257 = vunpack.c.l.b16 %v2060
        %v2258 = vunpack.c.h.b16 %v2060
        %v2259 = vunpack.c.l.b16 %v2061
        %v2260 = vunpack.c.h.b16 %v2061
        %v2261 = vunpack.c.l.b16 %v2062
        %v2262 = vunpack.c.h.b16 %v2062
        %v2263 = vunpack.c.l.b16 %v2063
        %v2264 = vunpack.c.h.b16 %v2063
        %v2265 = vunpack.c.l.b16 %v2064
        %v2266 = vunpack.c.h.b16 %v2064
        %v2267 = vunpack.c.l.b16 %v2065
        %v2268 = vunpack.c.h.b16 %v2065
        %v2269 = vunpack.c.l.b16 %v2066
        %v2270 = vunpack.c.h.b16 %v2066
        %v2271 = vunpack.c.l.b16 %v2067
        %v2272 = vunpack.c.h.b16 %v2067
        %v2273 = vunpack.c.l.b16 %v2068
        %v2274 = vunpack.c.h.b16 %v2068
        %v2275 = vunpack.c.l.b16 %v2069
        %v2276 = vunpack.c.h.b16 %v2069
        %v2277 = vunpack.c.l.b16 %v2070
        %v2278 = vunpack.c.h.b16 %v2070
        %v2279 = vunpack.c.l.b16 %v2071
        %v2280 = vunpack.c.h.b16 %v2071
        %v2281 = vunpack.c.l.b16 %v2072
        %v2282 = vunpack.c.h.b16 %v2072
        %v2283 = vunpack.c.l.b16 %v2073
        %v2284 = vunpack.c.h.b16 %v2073
        %v2285 = vunpack.c.l.b16 %v2074
        %v2286 = vunpack.c.h.b16 %v2074
        %v2287 = vunpack.c.l.b16 %v2075
        %v2288 = vunpack.c.h.b16 %v2075
        %v2289 = vunpack.c.l.b16 %v2076
        %v2290 = vunpack.c.h.b16 %v2076
        %v2291 = vpack.c.b16 %v2167, %v2163
        %v2292 = vpack.c.b16 %v2168, %v2164
        %v2293 = vpack.c.b16 %v2169, %v2165
        %v2294 = vpack.c.b16 %v2170, %v2166
        %v2295 = vpack.c.b16 %v2175, %v2171
        %v2296 = vpack.c.b16 %v2176, %v2172
        %v2297 = vpack.c.b16 %v2177, %v2173
        %v2298 = vpack.c.b16 %v2178, %v2174
        %v2299 = vpack.c.b16 %v2183, %v2179
        %v2300 = vpack.c.b16 %v2184, %v2180
        %v2301 = vpack.c.b16 %v2185, %v2181
        %v2302 = vpack.c.b16 %v2186, %v2182
        %v2303 = vpack.c.b16 %v2191, %v2187
        %v2304 = vpack.c.b16 %v2192, %v2188
        %v2305 = vpack.c.b16 %v2193, %v2189
        %v2306 = vpack.c.b16 %v2194, %v2190
        %v2307 = vpack.c.b16 %v2199, %v2195
        %v2308 = vpack.c.b16 %v2200, %v2196
        %v2309 = vpack.c.b16 %v2201, %v2197
        %v2310 = vpack.c.b16 %v2202, %v2198
        %v2311 = vpack.c.b16 %v2207, %v2203
        %v2312 = vpack.c.b16 %v2208, %v2204
        %v2313 = vpack.c.b16 %v2209, %v2205
        %v2314 = vpack.c.b16 %v2210, %v2206
        %v2315 = vpack.c.b16 %v2215, %v2211
        %v2316 = vpack.c.b16 %v2216, %v2212
        %v2317 = vpack.c.b16 %v2217, %v2213
        %v2318 = vpack.c.b16 %v2218, %v2214
        %v2319 = vpack.c.b16 %v2223, %v2219
        %v2320 = vpack.c.b16 %v2224, %v2220
        %v2321 = vpack.c.b16 %v2225, %v2221
        %v2322 = vpack.c.b16 %v2226, %v2222
        %v2323 = vpack.c.b16 %v2231, %v2227
        %v2324 = vpack.c.b16 %v2232, %v2228
        %v2325 = vpack.c.b16 %v2233, %v2229
        %v2326 = vpack.c.b16 %v2234, %v2230
        %v2327 = vpack.c.b16 %v2239, %v2235
        %v2328 = vpack.c.b16 %v2240, %v2236
        %v2329 = vpack.c.b16 %v2241, %v2237
        %v2330 = vpack.c.b16 %v2242, %v2238
        %v2331 = vpack.c.b16 %v2247, %v2243
        %v2332 = vpack.c.b16 %v2248, %v2244
        %v2333 = vpack.c.b16 %v2249, %v2245
        %v2334 = vpack.c.b16 %v2250, %v2246
        %v2335 = vpack.c.b16 %v2255, %v2251
        %v2336 = vpack.c.b16 %v2256, %v2252
        %v2337 = vpack.c.b16 %v2257, %v2253
        %v2338 = vpack.c.b16 %v2258, %v2254
        %v2339 = vpack.c.b16 %v2263, %v2259
        %v2340 = vpack.c.b16 %v2264, %v2260
        %v2341 = vpack.c.b16 %v2265, %v2261
        %v2342 = vpack.c.b16 %v2266, %v2262
        %v2343 = vpack.c.b16 %v2271, %v2267
        %v2344 = vpack.c.b16 %v2272, %v2268
        %v2345 = vpack.c.b16 %v2273, %v2269
        %v2346 = vpack.c.b16 %v2274, %v2270
        %v2347 = vpack.c.b16 %v2279, %v2275
        %v2348 = vpack.c.b16 %v2280, %v2276
        %v2349 = vpack.c.b16 %v2281, %v2277
        %v2350 = vpack.c.b16 %v2282, %v2278
        %v2351 = vpack.c.b16 %v2287, %v2283
        %v2352 = vpack.c.b16 %v2288, %v2284
        %v2353 = vpack.c.b16 %v2289, %v2285
        %v2354 = vpack.c.b16 %v2290, %v2286
        %2419 = vmatprep.subr.bf16.mxu0 %v2292
        %2420 = vmatpush1.bf16.msra.mxu0 %v2291
        %2421 = vmatprep.subr.bf16.mxu0 %v2296
        %2422 = vmatpush1.bf16.msra.mxu0 %v2295
        %2423 = vmatprep.subr.bf16.mxu0 %v2300
        %2424 = vmatpush1.bf16.msra.mxu0 %v2299
        %2425 = vmatprep.subr.bf16.mxu0 %v2304
        %2426 = vmatpush1.bf16.msra.mxu0 %v2303
        %2427 = vmatprep.subr.bf16.mxu0 %v2308
        %2428 = vmatpush1.bf16.msra.mxu0 %v2307
        %2429 = vmatprep.subr.bf16.mxu0 %v2312
        %2430 = vmatpush1.bf16.msra.mxu0 %v2311
        %2431 = vmatprep.subr.bf16.mxu0 %v2316
        %2432 = vmatpush1.bf16.msra.mxu0 %v2315
        %2433 = vmatprep.subr.bf16.mxu0 %v2320
        %2434 = vmatpush1.bf16.msra.mxu0 %v2319
        %2435 = vmatprep.subr.bf16.mxu0 %v2324
        %2436 = vmatpush1.bf16.msra.mxu0 %v2323
        %2437 = vmatprep.subr.bf16.mxu0 %v2328
        %2438 = vmatpush1.bf16.msra.mxu0 %v2327
        %2439 = vmatprep.subr.bf16.mxu0 %v2332
        %2440 = vmatpush1.bf16.msra.mxu0 %v2331
        %2441 = vmatprep.subr.bf16.mxu0 %v2336
        %2442 = vmatpush1.bf16.msra.mxu0 %v2335
        %2443 = vmatprep.subr.bf16.mxu0 %v2340
        %2444 = vmatpush1.bf16.msra.mxu0 %v2339
        %2445 = vmatprep.subr.bf16.mxu0 %v2344
        %2446 = vmatpush1.bf16.msra.mxu0 %v2343
        %2447 = vmatprep.subr.bf16.mxu0 %v2348
        %2448 = vmatpush1.bf16.msra.mxu0 %v2347
        %2449 = vmatprep.subr.bf16.mxu0 %v2352
        %2450 = vmatpush1.bf16.msra.mxu0 %v2351
        %2451 = vmatprep.mubr.bf16.mxu0 %v2012
        %2452 = vmatmul.mubr.bf16.gmra.mrb[0].mxu0 %v2011
        %v2453 = vpop.f32.mrb[0].mxu0
        %v2454 = vadd.f32 %v2082, %v2453
        %v2455 = vpop.f32.mrb[0].mxu0
        %v2456 = vadd.f32 %v2086, %v2455
        %v2457 = vpop.f32.mrb[0].mxu0
        %v2458 = vadd.f32 %v2082, %v2457
        %v2459 = vpop.f32.mrb[0].mxu0
        %v2460 = vadd.f32 %v2086, %v2459
        %2461 = vdwg.mxu0
        %2462 = vmatprep.subr.bf16.mxu0 %v2294
        %2463 = vmatpush1.bf16.msra.mxu0 %v2293
        %2464 = vmatprep.subr.bf16.mxu0 %v2298
        %2465 = vmatpush1.bf16.msra.mxu0 %v2297
        %2466 = vmatprep.subr.bf16.mxu0 %v2302
        %2467 = vmatpush1.bf16.msra.mxu0 %v2301
        %2468 = vmatprep.subr.bf16.mxu0 %v2306
        %2469 = vmatpush1.bf16.msra.mxu0 %v2305
        %2470 = vmatprep.subr.bf16.mxu0 %v2310
        %2471 = vmatpush1.bf16.msra.mxu0 %v2309
        %2472 = vmatprep.subr.bf16.mxu0 %v2314
        %2473 = vmatpush1.bf16.msra.mxu0 %v2313
        %2474 = vmatprep.subr.bf16.mxu0 %v2318
        %2475 = vmatpush1.bf16.msra.mxu0 %v2317
        %2476 = vmatprep.subr.bf16.mxu0 %v2322
        %2477 = vmatpush1.bf16.msra.mxu0 %v2321
        %2478 = vmatprep.subr.bf16.mxu0 %v2326
        %2479 = vmatpush1.bf16.msra.mxu0 %v2325
        %2480 = vmatprep.subr.bf16.mxu0 %v2330
        %2481 = vmatpush1.bf16.msra.mxu0 %v2329
        %2482 = vmatprep.subr.bf16.mxu0 %v2334
        %2483 = vmatpush1.bf16.msra.mxu0 %v2333
        %2484 = vmatprep.subr.bf16.mxu0 %v2338
        %2485 = vmatpush1.bf16.msra.mxu0 %v2337
        %2486 = vmatprep.subr.bf16.mxu0 %v2342
        %2487 = vmatpush1.bf16.msra.mxu0 %v2341
        %2488 = vmatprep.subr.bf16.mxu0 %v2346
        %2489 = vmatpush1.bf16.msra.mxu0 %v2345
        %2490 = vmatprep.subr.bf16.mxu0 %v2350
        %2491 = vmatpush1.bf16.msra.mxu0 %v2349
        %2492 = vmatprep.subr.bf16.mxu0 %v2354
        %2493 = vmatpush1.bf16.msra.mxu0 %v2353
        %2494 = vmatprep.mubr.bf16.mxu0 %v2012
        %2495 = vmatmul.mubr.bf16.gmra.mrb[0].mxu0 %v2011
        %v2496 = vpop.f32.mrb[0].mxu0
        %v2497 = vadd.f32 %v2090, %v2496
        %v2498 = vpop.f32.mrb[0].mxu0
        %v2499 = vadd.f32 %v2094, %v2498
        %v2500 = vpop.f32.mrb[0].mxu0
        %v2501 = vadd.f32 %v2090, %v2500
        %v2502 = vpop.f32.mrb[0].mxu0
        %v2503 = vadd.f32 %v2094, %v2502
        %2504 = vdwg.mxu0
        %v2505 = vmul.f32 %v2454, %v2454
        %v2506 = vmul.f32 %v2456, %v2456
        %v2507 = vmul.f32 %v2497, %v2497
        %v2508 = vmul.f32 %v2499, %v2499
        %v2509 = vmul.f32 %v2458, %v2458
        %v2510 = vmul.f32 %v2460, %v2460
        %v2511 = vmul.f32 %v2501, %v2501
        %v2512 = vmul.f32 %v2503, %v2503
        %v2513 = vmul.f32 %v2454, %v2505
        %v2514 = vmul.f32 %v2456, %v2506
        %v2515 = vmul.f32 %v2497, %v2507
        %v2516 = vmul.f32 %v2499, %v2508
        %v2517 = vmul.f32 %v2458, %v2509
        %v2518 = vmul.f32 %v2460, %v2510
        %v2519 = vmul.f32 %v2501, %v2511
        %v2520 = vmul.f32 %v2503, %v2512
        %v2521 = vmul.f32 %v2513, 0.044715
        %v2522 = vmul.f32 %v2514, 0.044715
        %v2523 = vmul.f32 %v2515, 0.044715
        %v2524 = vmul.f32 %v2516, 0.044715
        %v2525 = vmul.f32 %v2517, 0.044715
        %v2526 = vmul.f32 %v2518, 0.044715
        %v2527 = vmul.f32 %v2519, 0.044715
        %v2528 = vmul.f32 %v2520, 0.044715
        %v2529 = vadd.f32 %v2454, %v2521
        %v2530 = vadd.f32 %v2456, %v2522
        %v2531 = vadd.f32 %v2497, %v2523
        %v2532 = vadd.f32 %v2499, %v2524
        %v2533 = vadd.f32 %v2458, %v2525
        %v2534 = vadd.f32 %v2460, %v2526
        %v2535 = vadd.f32 %v2501, %v2527
        %v2536 = vadd.f32 %v2503, %v2528
        %v2537 = vmul.f32 %v2529, 0.7978846
        %v2538 = vmul.f32 %v2530, 0.7978846
        %v2539 = vmul.f32 %v2531, 0.7978846
        %v2540 = vmul.f32 %v2532, 0.7978846
        %v2541 = vmul.f32 %v2533, 0.7978846
        %v2542 = vmul.f32 %v2534, 0.7978846
        %v2543 = vmul.f32 %v2535, 0.7978846
        %v2544 = vmul.f32 %v2536, 0.7978846
        %v2545 = vtanh.pop %v2537
        %v2546 = vtanh.pop %v2538
        %v2547 = vtanh.pop %v2539
        %v2548 = vtanh.pop %v2540
        %v2549 = vtanh.pop %v2541
        %v2550 = vtanh.pop %v2542
        %v2551 = vtanh.pop %v2543
        %v2552 = vtanh.pop %v2544
        %v2553 = vadd.f32 %v2545, 1.0
        %v2554 = vadd.f32 %v2546, 1.0
        %v2555 = vadd.f32 %v2547, 1.0
        %v2556 = vadd.f32 %v2548, 1.0
        %v2557 = vadd.f32 %v2549, 1.0
        %v2558 = vadd.f32 %v2550, 1.0
        %v2559 = vadd.f32 %v2551, 1.0
        %v2560 = vadd.f32 %v2552, 1.0
        %v2561 = vmul.f32 %v2553, 0.5
        %v2562 = vmul.f32 %v2554, 0.5
        %v2563 = vmul.f32 %v2555, 0.5
        %v2564 = vmul.f32 %v2556, 0.5
        %v2565 = vmul.f32 %v2557, 0.5
        %v2566 = vmul.f32 %v2558, 0.5
        %v2567 = vmul.f32 %v2559, 0.5
        %v2568 = vmul.f32 %v2560, 0.5
        %v2569 = vmul.f32 %v2454, %v2561
        %v2570 = vmul.f32 %v2456, %v2562
        %v2571 = vmul.f32 %v2497, %v2563
        %v2572 = vmul.f32 %v2499, %v2564
        %v2573 = vmul.f32 %v2458, %v2565
        %v2574 = vmul.f32 %v2460, %v2566
        %v2575 = vmul.f32 %v2501, %v2567
        %v2576 = vmul.f32 %v2503, %v2568
        %v2577 = vpack.c.bf16 %v2573, %v2569
        %v2578 = vpack.c.bf16 %v2574, %v2570
        %v2579 = vpack.c.bf16 %v2575, %v2571
        %v2580 = vpack.c.bf16 %v2576, %v2572
        %v2581 = vld [vmem:[%s456] sm:$0xff]
        %v2582 = vld [vmem:[%s456 + $0x8] sm:$0xff]
        %v2583 = vld [vmem:[%s456 + $0x10] sm:$0xff]
        %v2584 = vld [vmem:[%s456 + $0x18] sm:$0xff]
        %v2585 = vld [vmem:[%s456 + $0x20] sm:$0xff]
        %v2586 = vld [vmem:[%s456 + $0x28] sm:$0xff]
        %v2587 = vld [vmem:[%s456 + $0x30] sm:$0xff]
        %v2588 = vld [vmem:[%s456 + $0x38] sm:$0xff]
        %v2589 = vld [vmem:[%s456 + $0x40] sm:$0xff]
        %v2590 = vld [vmem:[%s456 + $0x48] sm:$0xff]
        %v2591 = vld [vmem:[%s456 + $0x50] sm:$0xff]
        %v2592 = vld [vmem:[%s456 + $0x58] sm:$0xff]
        %v2593 = vld [vmem:[%s456 + $0x60] sm:$0xff]
        %v2594 = vld [vmem:[%s456 + $0x68] sm:$0xff]
        %v2595 = vld [vmem:[%s456 + $0x70] sm:$0xff]
        %v2596 = vld [vmem:[%s456 + $0x78] sm:$0xff]
        %v2597 = vld [vmem:[%s456 + $0x80] sm:$0xff]
        %v2598 = vld [vmem:[%s456 + $0x88] sm:$0xff]
        %v2599 = vld [vmem:[%s456 + $0x90] sm:$0xff]
        %v2600 = vld [vmem:[%s456 + $0x98] sm:$0xff]
        %v2601 = vld [vmem:[%s456 + $0xa0] sm:$0xff]
        %v2602 = vld [vmem:[%s456 + $0xa8] sm:$0xff]
        %v2603 = vld [vmem:[%s456 + $0xb0] sm:$0xff]
        %v2604 = vld [vmem:[%s456 + $0xb8] sm:$0xff]
        %v2605 = vld [vmem:[%s456 + $0xc0] sm:$0xff]
        %v2606 = vld [vmem:[%s456 + $0xc8] sm:$0xff]
        %v2607 = vld [vmem:[%s456 + $0xd0] sm:$0xff]
        %v2608 = vld [vmem:[%s456 + $0xd8] sm:$0xff]
        %v2609 = vld [vmem:[%s456 + $0xe0] sm:$0xff]
        %v2610 = vld [vmem:[%s456 + $0xe8] sm:$0xff]
        %v2611 = vld [vmem:[%s456 + $0xf0] sm:$0xff]
        %v2612 = vld [vmem:[%s456 + $0xf8] sm:$0xff]
        %v2613 = vld [vmem:[%s456 + $0x100] sm:$0xff]
        %v2614 = vld [vmem:[%s456 + $0x108] sm:$0xff]
        %v2615 = vld [vmem:[%s456 + $0x110] sm:$0xff]
        %v2616 = vld [vmem:[%s456 + $0x118] sm:$0xff]
        %v2617 = vld [vmem:[%s456 + $0x120] sm:$0xff]
        %v2618 = vld [vmem:[%s456 + $0x128] sm:$0xff]
        %v2619 = vld [vmem:[%s456 + $0x130] sm:$0xff]
        %v2620 = vld [vmem:[%s456 + $0x138] sm:$0xff]
        %v2621 = vld [vmem:[%s456 + $0x140] sm:$0xff]
        %v2622 = vld [vmem:[%s456 + $0x148] sm:$0xff]
        %v2623 = vld [vmem:[%s456 + $0x150] sm:$0xff]
        %v2624 = vld [vmem:[%s456 + $0x158] sm:$0xff]
        %v2625 = vld [vmem:[%s456 + $0x160] sm:$0xff]
        %v2626 = vld [vmem:[%s456 + $0x168] sm:$0xff]
        %v2627 = vld [vmem:[%s456 + $0x170] sm:$0xff]
        %v2628 = vld [vmem:[%s456 + $0x178] sm:$0xff]
        %v2629 = vld [vmem:[%s456 + $0x180] sm:$0xff]
        %v2630 = vld [vmem:[%s456 + $0x188] sm:$0xff]
        %v2631 = vld [vmem:[%s456 + $0x190] sm:$0xff]
        %v2632 = vld [vmem:[%s456 + $0x198] sm:$0xff]
        %v2633 = vld [vmem:[%s456 + $0x1a0] sm:$0xff]
        %v2634 = vld [vmem:[%s456 + $0x1a8] sm:$0xff]
        %v2635 = vld [vmem:[%s456 + $0x1b0] sm:$0xff]
        %v2636 = vld [vmem:[%s456 + $0x1b8] sm:$0xff]
        %v2637 = vld [vmem:[%s456 + $0x1c0] sm:$0xff]
        %v2638 = vld [vmem:[%s456 + $0x1c8] sm:$0xff]
        %v2639 = vld [vmem:[%s456 + $0x1d0] sm:$0xff]
        %v2640 = vld [vmem:[%s456 + $0x1d8] sm:$0xff]
        %v2641 = vld [vmem:[%s456 + $0x1e0] sm:$0xff]
        %v2642 = vld [vmem:[%s456 + $0x1e8] sm:$0xff]
        %v2643 = vld [vmem:[%s456 + $0x1f0] sm:$0xff]
        %v2644 = vld [vmem:[%s456 + $0x1f8] sm:$0xff]
        %v2645 = vlaneseq
        %v2646 = vshrl.u32 %v2645, 7
        %v2647 = vsub.s32 6, %v2646
        %v2648 = vrot.slane %v541, %v2647
        %v2649 = vlaneseq
        %v2650 = vshrl.u32 %v2649, 7
        %v2651 = vsub.s32 6, %v2650
        %v2652 = vrot.slane %v542, %v2651
        %v2717 = vunpack.c.l.b16 %v2581
        %v2718 = vunpack.c.h.b16 %v2581
        %v2719 = vunpack.c.l.b16 %v2582
        %v2720 = vunpack.c.h.b16 %v2582
        %v2721 = vunpack.c.l.b16 %v2583
        %v2722 = vunpack.c.h.b16 %v2583
        %v2723 = vunpack.c.l.b16 %v2584
        %v2724 = vunpack.c.h.b16 %v2584
        %v2725 = vunpack.c.l.b16 %v2585
        %v2726 = vunpack.c.h.b16 %v2585
        %v2727 = vunpack.c.l.b16 %v2586
        %v2728 = vunpack.c.h.b16 %v2586
        %v2729 = vunpack.c.l.b16 %v2587
        %v2730 = vunpack.c.h.b16 %v2587
        %v2731 = vunpack.c.l.b16 %v2588
        %v2732 = vunpack.c.h.b16 %v2588
        %v2733 = vunpack.c.l.b16 %v2589
        %v2734 = vunpack.c.h.b16 %v2589
        %v2735 = vunpack.c.l.b16 %v2590
        %v2736 = vunpack.c.h.b16 %v2590
        %v2737 = vunpack.c.l.b16 %v2591
        %v2738 = vunpack.c.h.b16 %v2591
        %v2739 = vunpack.c.l.b16 %v2592
        %v2740 = vunpack.c.h.b16 %v2592
        %v2741 = vunpack.c.l.b16 %v2593
        %v2742 = vunpack.c.h.b16 %v2593
        %v2743 = vunpack.c.l.b16 %v2594
        %v2744 = vunpack.c.h.b16 %v2594
        %v2745 = vunpack.c.l.b16 %v2595
        %v2746 = vunpack.c.h.b16 %v2595
        %v2747 = vunpack.c.l.b16 %v2596
        %v2748 = vunpack.c.h.b16 %v2596
        %v2749 = vunpack.c.l.b16 %v2597
        %v2750 = vunpack.c.h.b16 %v2597
        %v2751 = vunpack.c.l.b16 %v2598
        %v2752 = vunpack.c.h.b16 %v2598
        %v2753 = vunpack.c.l.b16 %v2599
        %v2754 = vunpack.c.h.b16 %v2599
        %v2755 = vunpack.c.l.b16 %v2600
        %v2756 = vunpack.c.h.b16 %v2600
        %v2757 = vunpack.c.l.b16 %v2601
        %v2758 = vunpack.c.h.b16 %v2601
        %v2759 = vunpack.c.l.b16 %v2602
        %v2760 = vunpack.c.h.b16 %v2602
        %v2761 = vunpack.c.l.b16 %v2603
        %v2762 = vunpack.c.h.b16 %v2603
        %v2763 = vunpack.c.l.b16 %v2604
        %v2764 = vunpack.c.h.b16 %v2604
        %v2765 = vunpack.c.l.b16 %v2605
        %v2766 = vunpack.c.h.b16 %v2605
        %v2767 = vunpack.c.l.b16 %v2606
        %v2768 = vunpack.c.h.b16 %v2606
        %v2769 = vunpack.c.l.b16 %v2607
        %v2770 = vunpack.c.h.b16 %v2607
        %v2771 = vunpack.c.l.b16 %v2608
        %v2772 = vunpack.c.h.b16 %v2608
        %v2773 = vunpack.c.l.b16 %v2609
        %v2774 = vunpack.c.h.b16 %v2609
        %v2775 = vunpack.c.l.b16 %v2610
        %v2776 = vunpack.c.h.b16 %v2610
        %v2777 = vunpack.c.l.b16 %v2611
        %v2778 = vunpack.c.h.b16 %v2611
        %v2779 = vunpack.c.l.b16 %v2612
        %v2780 = vunpack.c.h.b16 %v2612
        %v2781 = vunpack.c.l.b16 %v2613
        %v2782 = vunpack.c.h.b16 %v2613
        %v2783 = vunpack.c.l.b16 %v2614
        %v2784 = vunpack.c.h.b16 %v2614
        %v2785 = vunpack.c.l.b16 %v2615
        %v2786 = vunpack.c.h.b16 %v2615
        %v2787 = vunpack.c.l.b16 %v2616
        %v2788 = vunpack.c.h.b16 %v2616
        %v2789 = vunpack.c.l.b16 %v2617
        %v2790 = vunpack.c.h.b16 %v2617
        %v2791 = vunpack.c.l.b16 %v2618
        %v2792 = vunpack.c.h.b16 %v2618
        %v2793 = vunpack.c.l.b16 %v2619
        %v2794 = vunpack.c.h.b16 %v2619
        %v2795 = vunpack.c.l.b16 %v2620
        %v2796 = vunpack.c.h.b16 %v2620
        %v2797 = vunpack.c.l.b16 %v2621
        %v2798 = vunpack.c.h.b16 %v2621
        %v2799 = vunpack.c.l.b16 %v2622
        %v2800 = vunpack.c.h.b16 %v2622
        %v2801 = vunpack.c.l.b16 %v2623
        %v2802 = vunpack.c.h.b16 %v2623
        %v2803 = vunpack.c.l.b16 %v2624
        %v2804 = vunpack.c.h.b16 %v2624
        %v2805 = vunpack.c.l.b16 %v2625
        %v2806 = vunpack.c.h.b16 %v2625
        %v2807 = vunpack.c.l.b16 %v2626
        %v2808 = vunpack.c.h.b16 %v2626
        %v2809 = vunpack.c.l.b16 %v2627
        %v2810 = vunpack.c.h.b16 %v2627
        %v2811 = vunpack.c.l.b16 %v2628
        %v2812 = vunpack.c.h.b16 %v2628
        %v2813 = vunpack.c.l.b16 %v2629
        %v2814 = vunpack.c.h.b16 %v2629
        %v2815 = vunpack.c.l.b16 %v2630
        %v2816 = vunpack.c.h.b16 %v2630
        %v2817 = vunpack.c.l.b16 %v2631
        %v2818 = vunpack.c.h.b16 %v2631
        %v2819 = vunpack.c.l.b16 %v2632
        %v2820 = vunpack.c.h.b16 %v2632
        %v2821 = vunpack.c.l.b16 %v2633
        %v2822 = vunpack.c.h.b16 %v2633
        %v2823 = vunpack.c.l.b16 %v2634
        %v2824 = vunpack.c.h.b16 %v2634
        %v2825 = vunpack.c.l.b16 %v2635
        %v2826 = vunpack.c.h.b16 %v2635
        %v2827 = vunpack.c.l.b16 %v2636
        %v2828 = vunpack.c.h.b16 %v2636
        %v2829 = vunpack.c.l.b16 %v2637
        %v2830 = vunpack.c.h.b16 %v2637
        %v2831 = vunpack.c.l.b16 %v2638
        %v2832 = vunpack.c.h.b16 %v2638
        %v2833 = vunpack.c.l.b16 %v2639
        %v2834 = vunpack.c.h.b16 %v2639
        %v2835 = vunpack.c.l.b16 %v2640
        %v2836 = vunpack.c.h.b16 %v2640
        %v2837 = vunpack.c.l.b16 %v2641
        %v2838 = vunpack.c.h.b16 %v2641
        %v2839 = vunpack.c.l.b16 %v2642
        %v2840 = vunpack.c.h.b16 %v2642
        %v2841 = vunpack.c.l.b16 %v2643
        %v2842 = vunpack.c.h.b16 %v2643
        %v2843 = vunpack.c.l.b16 %v2644
        %v2844 = vunpack.c.h.b16 %v2644
        %v2845 = vpack.c.b16 %v2719, %v2717
        %v2846 = vpack.c.b16 %v2720, %v2718
        %v2847 = vpack.c.b16 %v2723, %v2721
        %v2848 = vpack.c.b16 %v2724, %v2722
        %v2849 = vpack.c.b16 %v2727, %v2725
        %v2850 = vpack.c.b16 %v2728, %v2726
        %v2851 = vpack.c.b16 %v2731, %v2729
        %v2852 = vpack.c.b16 %v2732, %v2730
        %v2853 = vpack.c.b16 %v2735, %v2733
        %v2854 = vpack.c.b16 %v2736, %v2734
        %v2855 = vpack.c.b16 %v2739, %v2737
        %v2856 = vpack.c.b16 %v2740, %v2738
        %v2857 = vpack.c.b16 %v2743, %v2741
        %v2858 = vpack.c.b16 %v2744, %v2742
        %v2859 = vpack.c.b16 %v2747, %v2745
        %v2860 = vpack.c.b16 %v2748, %v2746
        %v2861 = vpack.c.b16 %v2751, %v2749
        %v2862 = vpack.c.b16 %v2752, %v2750
        %v2863 = vpack.c.b16 %v2755, %v2753
        %v2864 = vpack.c.b16 %v2756, %v2754
        %v2865 = vpack.c.b16 %v2759, %v2757
        %v2866 = vpack.c.b16 %v2760, %v2758
        %v2867 = vpack.c.b16 %v2763, %v2761
        %v2868 = vpack.c.b16 %v2764, %v2762
        %v2869 = vpack.c.b16 %v2767, %v2765
        %v2870 = vpack.c.b16 %v2768, %v2766
        %v2871 = vpack.c.b16 %v2771, %v2769
        %v2872 = vpack.c.b16 %v2772, %v2770
        %v2873 = vpack.c.b16 %v2775, %v2773
        %v2874 = vpack.c.b16 %v2776, %v2774
        %v2875 = vpack.c.b16 %v2779, %v2777
        %v2876 = vpack.c.b16 %v2780, %v2778
        %v2877 = vpack.c.b16 %v2783, %v2781
        %v2878 = vpack.c.b16 %v2784, %v2782
        %v2879 = vpack.c.b16 %v2787, %v2785
        %v2880 = vpack.c.b16 %v2788, %v2786
        %v2881 = vpack.c.b16 %v2791, %v2789
        %v2882 = vpack.c.b16 %v2792, %v2790
        %v2883 = vpack.c.b16 %v2795, %v2793
        %v2884 = vpack.c.b16 %v2796, %v2794
        %v2885 = vpack.c.b16 %v2799, %v2797
        %v2886 = vpack.c.b16 %v2800, %v2798
        %v2887 = vpack.c.b16 %v2803, %v2801
        %v2888 = vpack.c.b16 %v2804, %v2802
        %v2889 = vpack.c.b16 %v2807, %v2805
        %v2890 = vpack.c.b16 %v2808, %v2806
        %v2891 = vpack.c.b16 %v2811, %v2809
        %v2892 = vpack.c.b16 %v2812, %v2810
        %v2893 = vpack.c.b16 %v2815, %v2813
        %v2894 = vpack.c.b16 %v2816, %v2814
        %v2895 = vpack.c.b16 %v2819, %v2817
        %v2896 = vpack.c.b16 %v2820, %v2818
        %v2897 = vpack.c.b16 %v2823, %v2821
        %v2898 = vpack.c.b16 %v2824, %v2822
        %v2899 = vpack.c.b16 %v2827, %v2825
        %v2900 = vpack.c.b16 %v2828, %v2826
        %v2901 = vpack.c.b16 %v2831, %v2829
        %v2902 = vpack.c.b16 %v2832, %v2830
        %v2903 = vpack.c.b16 %v2835, %v2833
        %v2904 = vpack.c.b16 %v2836, %v2834
        %v2905 = vpack.c.b16 %v2839, %v2837
        %v2906 = vpack.c.b16 %v2840, %v2838
        %v2907 = vpack.c.b16 %v2843, %v2841
        %v2908 = vpack.c.b16 %v2844, %v2842
        %2973 = vmatprep.subr.bf16.mxu0 %v2846
        %2974 = vmatpush1.bf16.msra.mxu0 %v2845
        %2975 = vmatprep.subr.bf16.mxu0 %v2848
        %2976 = vmatpush1.bf16.msra.mxu0 %v2847
        %2977 = vmatprep.subr.bf16.mxu0 %v2850
        %2978 = vmatpush1.bf16.msra.mxu0 %v2849
        %2979 = vmatprep.subr.bf16.mxu0 %v2852
        %2980 = vmatpush1.bf16.msra.mxu0 %v2851
        %2981 = vmatprep.subr.bf16.mxu0 %v2854
        %2982 = vmatpush1.bf16.msra.mxu0 %v2853
        %2983 = vmatprep.subr.bf16.mxu0 %v2856
        %2984 = vmatpush1.bf16.msra.mxu0 %v2855
        %2985 = vmatprep.subr.bf16.mxu0 %v2858
        %2986 = vmatpush1.bf16.msra.mxu0 %v2857
        %2987 = vmatprep.subr.bf16.mxu0 %v2860
        %2988 = vmatpush1.bf16.msra.mxu0 %v2859
        %2989 = vmatprep.subr.bf16.mxu0 %v2862
        %2990 = vmatpush1.bf16.msra.mxu0 %v2861
        %2991 = vmatprep.subr.bf16.mxu0 %v2864
        %2992 = vmatpush1.bf16.msra.mxu0 %v2863
        %2993 = vmatprep.subr.bf16.mxu0 %v2866
        %2994 = vmatpush1.bf16.msra.mxu0 %v2865
        %2995 = vmatprep.subr.bf16.mxu0 %v2868
        %2996 = vmatpush1.bf16.msra.mxu0 %v2867
        %2997 = vmatprep.subr.bf16.mxu0 %v2870
        %2998 = vmatpush1.bf16.msra.mxu0 %v2869
        %2999 = vmatprep.subr.bf16.mxu0 %v2872
        %3000 = vmatpush1.bf16.msra.mxu0 %v2871
        %3001 = vmatprep.subr.bf16.mxu0 %v2874
        %3002 = vmatpush1.bf16.msra.mxu0 %v2873
        %3003 = vmatprep.subr.bf16.mxu0 %v2876
        %3004 = vmatpush1.bf16.msra.mxu0 %v2875
        %3005 = vmatprep.mubr.bf16.mxu0 %v2578
        %3006 = vmatmul.mubr.bf16.gmra.mrb[0].mxu0 %v2577
        %v3007 = vpop.f32.mrb[0].mxu0
        %v3008 = vadd.f32 %v2648, %v3007
        %v3009 = vpop.f32.mrb[0].mxu0
        %v3010 = vadd.f32 %v2652, %v3009
        %v3011 = vpop.f32.mrb[0].mxu0
        %v3012 = vadd.f32 %v2648, %v3011
        %v3013 = vpop.f32.mrb[0].mxu0
        %v3014 = vadd.f32 %v2652, %v3013
        %3015 = vdwg.mxu0
        %3016 = vmatprep.subr.bf16.mxu0 %v2878
        %3017 = vmatpush1.bf16.msra.mxu0 %v2877
        %3018 = vmatprep.subr.bf16.mxu0 %v2880
        %3019 = vmatpush1.bf16.msra.mxu0 %v2879
        %3020 = vmatprep.subr.bf16.mxu0 %v2882
        %3021 = vmatpush1.bf16.msra.mxu0 %v2881
        %3022 = vmatprep.subr.bf16.mxu0 %v2884
        %3023 = vmatpush1.bf16.msra.mxu0 %v2883
        %3024 = vmatprep.subr.bf16.mxu0 %v2886
        %3025 = vmatpush1.bf16.msra.mxu0 %v2885
        %3026 = vmatprep.subr.bf16.mxu0 %v2888
        %3027 = vmatpush1.bf16.msra.mxu0 %v2887
        %3028 = vmatprep.subr.bf16.mxu0 %v2890
        %3029 = vmatpush1.bf16.msra.mxu0 %v2889
        %3030 = vmatprep.subr.bf16.mxu0 %v2892
        %3031 = vmatpush1.bf16.msra.mxu0 %v2891
        %3032 = vmatprep.subr.bf16.mxu0 %v2894
        %3033 = vmatpush1.bf16.msra.mxu0 %v2893
        %3034 = vmatprep.subr.bf16.mxu0 %v2896
        %3035 = vmatpush1.bf16.msra.mxu0 %v2895
        %3036 = vmatprep.subr.bf16.mxu0 %v2898
        %3037 = vmatpush1.bf16.msra.mxu0 %v2897
        %3038 = vmatprep.subr.bf16.mxu0 %v2900
        %3039 = vmatpush1.bf16.msra.mxu0 %v2899
        %3040 = vmatprep.subr.bf16.mxu0 %v2902
        %3041 = vmatpush1.bf16.msra.mxu0 %v2901
        %3042 = vmatprep.subr.bf16.mxu0 %v2904
        %3043 = vmatpush1.bf16.msra.mxu0 %v2903
        %3044 = vmatprep.subr.bf16.mxu0 %v2906
        %3045 = vmatpush1.bf16.msra.mxu0 %v2905
        %3046 = vmatprep.subr.bf16.mxu0 %v2908
        %3047 = vmatpush1.bf16.msra.mxu0 %v2907
        %3048 = vmatprep.mubr.bf16.mxu0 %v2580
        %3049 = vmatmul.mubr.bf16.gmra.mrb[0].mxu0 %v2579
        %v3050 = vpop.f32.mrb[0].mxu0
        %v3051 = vadd.f32 %v3008, %v3050
        %v3052 = vpop.f32.mrb[0].mxu0
        %v3053 = vadd.f32 %v3010, %v3052
        %v3054 = vpop.f32.mrb[0].mxu0
        %v3055 = vadd.f32 %v3012, %v3054
        %v3056 = vpop.f32.mrb[0].mxu0
        %v3057 = vadd.f32 %v3014, %v3056
        %3058 = vdwg.mxu0
        %v3059 = vadd.f32 %v2007, %v3051
        %v3060 = vadd.f32 %v2008, %v3053
        %v3061 = vadd.f32 %v2009, %v3055
        %v3062 = vadd.f32 %v2010, %v3057
        %v3063 = vadd.f32 %v3059, %v3060
        %3064 = vadd.xlane.f32.xlu0 %v3063
        %v3065 = vpop.xlane.xlu0 %3064
        %v3066 = vadd.f32 %v3061, %v3062
        %3067 = vadd.xlane.f32.xlu0 %v3066
        %v3068 = vpop.xlane.xlu0 %3067
        %v3069 = vmul.f32 %v3065, %v1960
        %v3070 = vmul.f32 %v3068, %v1960
        %v3071 = vsub.f32 %v3059, %v3069
        %v3072 = vsub.f32 %v3060, %v3069
        %v3073 = vsub.f32 %v3061, %v3070
        %v3074 = vsub.f32 %v3062, %v3070
        %v3075 = vmul.f32 %v3071, %v3071
        %v3076 = vmul.f32 %v3072, %v3072
        %v3077 = vmul.f32 %v3073, %v3073
        %v3078 = vmul.f32 %v3074, %v3074
        %v3079 = vadd.f32 %v3075, %v3076
        %3080 = vadd.xlane.f32.xlu0 %v3079
        %v3081 = vpop.xlane.xlu0 %3080
        %v3082 = vadd.f32 %v3077, %v3078
        %3083 = vadd.xlane.f32.xlu0 %v3082
        %v3084 = vpop.xlane.xlu0 %3083
        %v3085 = vmul.f32 %v3081, %v1960
        %v3086 = vmul.f32 %v3084, %v1960
        %v3087 = vadd.f32 %v3085, 1e-12
        %v3088 = vadd.f32 %v3086, 1e-12
        %v3089 = vrsqrt.pop %v3087
        %v3090 = vrsqrt.pop %v3088
        %v3091 = vmul.f32 %v3071, %v3089
        %v3092 = vmul.f32 %v3072, %v3089
        %v3093 = vmul.f32 %v3073, %v3090
        %v3094 = vmul.f32 %v3074, %v3090
        %v3095 = vlaneseq
        %v3096 = vshrl.u32 %v3095, 7
        %v3097 = vsub.s32 7, %v3096
        %v3098 = vrot.slane %v541, %v3097
        %v3099 = vlaneseq
        %v3100 = vshrl.u32 %v3099, 7
        %v3101 = vsub.s32 7, %v3100
        %v3102 = vrot.slane %v542, %v3101
        %v3103 = vmul.f32 %v3091, %v3098
        %v3104 = vmul.f32 %v3092, %v3102
        %v3105 = vmul.f32 %v3093, %v3098
        %v3106 = vmul.f32 %v3094, %v3102
        %v3107 = vlaneseq
        %v3108 = vshrl.u32 %v3107, 7
        %v3109 = vsub.s32 0, %v3108
        %v3110 = vrot.slane %v543, %v3109
        %v3111 = vlaneseq
        %v3112 = vshrl.u32 %v3111, 7
        %v3113 = vsub.s32 0, %v3112
        %v3114 = vrot.slane %v544, %v3113
        %v3115 = vadd.f32 %v3103, %v3110
        %v3116 = vadd.f32 %v3104, %v3114
        %v3117 = vadd.f32 %v3105, %v3110
        %v3118 = vadd.f32 %v3106, %v3114
        %3119 = vst [vmem:[#allocation2] sm:$0xff] %v3115
        %3120 = vst [vmem:[#allocation2 + $0x8] sm:$0xff] %v3116
        %3121 = vst [vmem:[#allocation2 + $0x10] sm:$0xff] %v3117
        %3122 = vst [vmem:[#allocation2 + $0x18] sm:$0xff] %v3118
        %p3123 = scmp.eq.s32.totalorder %s30, 1
        // Predicated region
        $region85: #{tpu_custom_call.1} parent=63 // pred_check
          %p3124 = pneg %p3123
        $region86: #{tpu_custom_call.1} parent=63 // pred_check_branch
          %3126 = sbr.rel (%p3124) target = $region88
        $region87: #{tpu_custom_call.1} parent=63 // pred_region
          %v3127 = vpack.c.bf16 %v3115, %v3115
          %v3128 = vpack.c.bf16 %v3116, %v3116
          %v3129 = vpack.c.bf16 %v3117, %v3117
          %v3130 = vpack.c.bf16 %v3118, %v3118
          %v3131 = vld [vmem:[#allocation9] sm:$0xf]
          %v3132 = vld [vmem:[#allocation9 + $0x4] sm:$0xf]
          %v3133 = vld [vmem:[#allocation9 + $0x8] sm:$0xf]
          %v3134 = vld [vmem:[#allocation9 + $0xc] sm:$0xf]
          %v3135 = vld [vmem:[#allocation9 + $0x10] sm:$0xf]
          %v3136 = vld [vmem:[#allocation9 + $0x14] sm:$0xf]
          %v3137 = vld [vmem:[#allocation9 + $0x18] sm:$0xf]
          %v3138 = vld [vmem:[#allocation9 + $0x1c] sm:$0xf]
          %v3139 = vld [vmem:[#allocation9 + $0x20] sm:$0xf]
          %v3140 = vld [vmem:[#allocation9 + $0x24] sm:$0xf]
          %v3141 = vld [vmem:[#allocation9 + $0x28] sm:$0xf]
          %v3142 = vld [vmem:[#allocation9 + $0x2c] sm:$0xf]
          %v3143 = vld [vmem:[#allocation9 + $0x30] sm:$0xf]
          %v3144 = vld [vmem:[#allocation9 + $0x34] sm:$0xf]
          %v3145 = vld [vmem:[#allocation9 + $0x38] sm:$0xf]
          %v3146 = vld [vmem:[#allocation9 + $0x3c] sm:$0xf]
          %v3147 = vld [vmem:[#allocation9 + $0x40] sm:$0xf]
          %v3148 = vld [vmem:[#allocation9 + $0x44] sm:$0xf]
          %v3149 = vld [vmem:[#allocation9 + $0x48] sm:$0xf]
          %v3150 = vld [vmem:[#allocation9 + $0x4c] sm:$0xf]
          %v3151 = vld [vmem:[#allocation9 + $0x50] sm:$0xf]
          %v3152 = vld [vmem:[#allocation9 + $0x54] sm:$0xf]
          %v3153 = vld [vmem:[#allocation9 + $0x58] sm:$0xf]
          %v3154 = vld [vmem:[#allocation9 + $0x5c] sm:$0xf]
          %v3155 = vld [vmem:[#allocation9 + $0x60] sm:$0xf]
          %v3156 = vld [vmem:[#allocation9 + $0x64] sm:$0xf]
          %v3157 = vld [vmem:[#allocation9 + $0x68] sm:$0xf]
          %v3158 = vld [vmem:[#allocation9 + $0x6c] sm:$0xf]
          %v3159 = vld [vmem:[#allocation9 + $0x70] sm:$0xf]
          %v3160 = vld [vmem:[#allocation9 + $0x74] sm:$0xf]
          %v3161 = vld [vmem:[#allocation9 + $0x78] sm:$0xf]
          %v3162 = vld [vmem:[#allocation9 + $0x7c] sm:$0xf]
          %v3163 = vld [vmem:[%s8] sm:$0x1]
          %v3165 = vlaneseq
          %v3166 = vshrl.u32 %v3165, 7
          %v3167 = vsub.s32 0, %v3166
          %v3168 = vrot.slane %v3163, %v3167
          %v3174 = vunpack.c.l.b16 %v3127
          %v3175 = vunpack.c.l.b16 %v3128
          %v3176 = vunpack.c.l.b16 %v3129
          %v3177 = vunpack.c.l.b16 %v3130
          %v3178 = vrot.slane %v3176, 7
          %vm3179 = vcmask 1041409
          %v3180 = vsel %vm3179, %v3178, %v3174
          %v3181 = vrot.slane %v3177, 7
          %v3182 = vsel %vm3179, %v3181, %v3175
          %v3183 = vpack.c.b16 %v3180, %v3180
          %v3184 = vpack.c.b16 %v3182, %v3182
          %v3219 = vunpack.c.l.b16 %v3131
          %v3220 = vunpack.c.l.b16 %v3132
          %v3221 = vunpack.c.l.b16 %v3133
          %v3222 = vunpack.c.l.b16 %v3134
          %v3223 = vunpack.c.l.b16 %v3135
          %v3224 = vunpack.c.l.b16 %v3136
          %v3225 = vunpack.c.l.b16 %v3137
          %v3226 = vunpack.c.l.b16 %v3138
          %v3227 = vunpack.c.l.b16 %v3139
          %v3228 = vunpack.c.l.b16 %v3140
          %v3229 = vunpack.c.l.b16 %v3141
          %v3230 = vunpack.c.l.b16 %v3142
          %v3231 = vunpack.c.l.b16 %v3143
          %v3232 = vunpack.c.l.b16 %v3144
          %v3233 = vunpack.c.l.b16 %v3145
          %v3234 = vunpack.c.l.b16 %v3146
          %v3235 = vunpack.c.l.b16 %v3147
          %v3236 = vunpack.c.l.b16 %v3148
          %v3237 = vunpack.c.l.b16 %v3149
          %v3238 = vunpack.c.l.b16 %v3150
          %v3239 = vunpack.c.l.b16 %v3151
          %v3240 = vunpack.c.l.b16 %v3152
          %v3241 = vunpack.c.l.b16 %v3153
          %v3242 = vunpack.c.l.b16 %v3154
          %v3243 = vunpack.c.l.b16 %v3155
          %v3244 = vunpack.c.l.b16 %v3156
          %v3245 = vunpack.c.l.b16 %v3157
          %v3246 = vunpack.c.l.b16 %v3158
          %v3247 = vunpack.c.l.b16 %v3159
          %v3248 = vunpack.c.l.b16 %v3160
          %v3249 = vunpack.c.l.b16 %v3161
          %v3250 = vunpack.c.l.b16 %v3162
          %v3251 = vpack.c.b16 %v3220, %v3219
          %v3252 = vpack.c.b16 %v3222, %v3221
          %v3253 = vpack.c.b16 %v3224, %v3223
          %v3254 = vpack.c.b16 %v3226, %v3225
          %v3255 = vpack.c.b16 %v3228, %v3227
          %v3256 = vpack.c.b16 %v3230, %v3229
          %v3257 = vpack.c.b16 %v3232, %v3231
          %v3258 = vpack.c.b16 %v3234, %v3233
          %v3259 = vpack.c.b16 %v3236, %v3235
          %v3260 = vpack.c.b16 %v3238, %v3237
          %v3261 = vpack.c.b16 %v3240, %v3239
          %v3262 = vpack.c.b16 %v3242, %v3241
          %v3263 = vpack.c.b16 %v3244, %v3243
          %v3264 = vpack.c.b16 %v3246, %v3245
          %v3265 = vpack.c.b16 %v3248, %v3247
          %v3266 = vpack.c.b16 %v3250, %v3249
          %3283 = vmatprep.subr.bf16.mxu0 0
          %3284 = vmatpush1.bf16.msra.mxu0 %v3251
          %3285 = vmatprep.subr.bf16.mxu0 0
          %3286 = vmatpush1.bf16.msra.mxu0 %v3252
          %3287 = vmatprep.subr.bf16.mxu0 0
          %3288 = vmatpush1.bf16.msra.mxu0 %v3253
          %3289 = vmatprep.subr.bf16.mxu0 0
          %3290 = vmatpush1.bf16.msra.mxu0 %v3254
          %3291 = vmatprep.subr.bf16.mxu0 0
          %3292 = vmatpush1.bf16.msra.mxu0 %v3255
          %3293 = vmatprep.subr.bf16.mxu0 0
          %3294 = vmatpush1.bf16.msra.mxu0 %v3256
          %3295 = vmatprep.subr.bf16.mxu0 0
          %3296 = vmatpush1.bf16.msra.mxu0 %v3257
          %3297 = vmatprep.subr.bf16.mxu0 0
          %3298 = vmatpush1.bf16.msra.mxu0 %v3258
          %3299 = vmatprep.subr.bf16.mxu0 0
          %3300 = vmatpush1.bf16.msra.mxu0 %v3259
          %3301 = vmatprep.subr.bf16.mxu0 0
          %3302 = vmatpush1.bf16.msra.mxu0 %v3260
          %3303 = vmatprep.subr.bf16.mxu0 0
          %3304 = vmatpush1.bf16.msra.mxu0 %v3261
          %3305 = vmatprep.subr.bf16.mxu0 0
          %3306 = vmatpush1.bf16.msra.mxu0 %v3262
          %3307 = vmatprep.subr.bf16.mxu0 0
          %3308 = vmatpush1.bf16.msra.mxu0 %v3263
          %3309 = vmatprep.subr.bf16.mxu0 0
          %3310 = vmatpush1.bf16.msra.mxu0 %v3264
          %3311 = vmatprep.subr.bf16.mxu0 0
          %3312 = vmatpush1.bf16.msra.mxu0 %v3265
          %3313 = vmatprep.subr.bf16.mxu0 0
          %3314 = vmatpush1.bf16.msra.mxu0 %v3266
          %3315 = vmatprep.mubr.bf16.mxu0 %v3184
          %3316 = vmatmul.mubr.bf16.gmra.mrb[0].mxu0 %v3183
          %v3317 = vpop.f32.mrb[0].mxu0
          %v3318 = vadd.f32 %v3168, %v3317
          %v3319 = vpop.f32.mrb[0].mxu0
          %v3320 = vpop.f32.mrb[0].mxu0
          %v3321 = vpop.f32.mrb[0].mxu0
          %3322 = vdwg.mxu0
          %v3323 = vpack.c.bf16 %v3318, %v3318
          %v3324 = vld [vmem:[%s9] sm:$0xf]
          %v3325 = vld [vmem:[%s9 + $0x4] sm:$0xf]
          %v3326 = vld [vmem:[%s9 + $0x8] sm:$0xf]
          %v3327 = vld [vmem:[%s9 + $0xc] sm:$0xf]
          %v3328 = vld [vmem:[%s9 + $0x10] sm:$0xf]
          %v3329 = vld [vmem:[%s9 + $0x14] sm:$0xf]
          %v3330 = vld [vmem:[%s9 + $0x18] sm:$0xf]
          %v3331 = vld [vmem:[%s9 + $0x1c] sm:$0xf]
          %v3332 = vld [vmem:[%s9 + $0x20] sm:$0xf]
          %v3333 = vld [vmem:[%s9 + $0x24] sm:$0xf]
          %v3334 = vld [vmem:[%s9 + $0x28] sm:$0xf]
          %v3335 = vld [vmem:[%s9 + $0x2c] sm:$0xf]
          %v3336 = vld [vmem:[%s9 + $0x30] sm:$0xf]
          %v3337 = vld [vmem:[%s9 + $0x34] sm:$0xf]
          %v3338 = vld [vmem:[%s9 + $0x38] sm:$0xf]
          %v3339 = vld [vmem:[%s9 + $0x3c] sm:$0xf]
          %v3340 = vld [vmem:[%s10] sm:$0x1]
          %v3342 = vlaneseq
          %v3343 = vshrl.u32 %v3342, 7
          %v3344 = vsub.s32 0, %v3343
          %v3345 = vrot.slane %v3340, %v3344
          %v3363 = vunpack.c.l.b16 %v3324
          %v3364 = vunpack.c.l.b16 %v3325
          %v3365 = vunpack.c.l.b16 %v3326
          %v3366 = vunpack.c.l.b16 %v3327
          %v3367 = vunpack.c.l.b16 %v3328
          %v3368 = vunpack.c.l.b16 %v3329
          %v3369 = vunpack.c.l.b16 %v3330
          %v3370 = vunpack.c.l.b16 %v3331
          %v3371 = vunpack.c.l.b16 %v3332
          %v3372 = vunpack.c.l.b16 %v3333
          %v3373 = vunpack.c.l.b16 %v3334
          %v3374 = vunpack.c.l.b16 %v3335
          %v3375 = vunpack.c.l.b16 %v3336
          %v3376 = vunpack.c.l.b16 %v3337
          %v3377 = vunpack.c.l.b16 %v3338
          %v3378 = vunpack.c.l.b16 %v3339
          %v3379 = vpack.c.b16 %v3364, %v3363
          %v3380 = vpack.c.b16 %v3366, %v3365
          %v3381 = vpack.c.b16 %v3368, %v3367
          %v3382 = vpack.c.b16 %v3370, %v3369
          %v3383 = vpack.c.b16 %v3372, %v3371
          %v3384 = vpack.c.b16 %v3374, %v3373
          %v3385 = vpack.c.b16 %v3376, %v3375
          %v3386 = vpack.c.b16 %v3378, %v3377
          %3395 = vmatprep.subr.bf16.mxu0 0
          %3396 = vmatpush1.bf16.msra.mxu0 %v3379
          %3397 = vmatprep.subr.bf16.mxu0 0
          %3398 = vmatpush1.bf16.msra.mxu0 %v3380
          %3399 = vmatprep.subr.bf16.mxu0 0
          %3400 = vmatpush1.bf16.msra.mxu0 %v3381
          %3401 = vmatprep.subr.bf16.mxu0 0
          %3402 = vmatpush1.bf16.msra.mxu0 %v3382
          %3403 = vmatprep.subr.bf16.mxu0 0
          %3404 = vmatpush1.bf16.msra.mxu0 %v3383
          %3405 = vmatprep.subr.bf16.mxu0 0
          %3406 = vmatpush1.bf16.msra.mxu0 %v3384
          %3407 = vmatprep.subr.bf16.mxu0 0
          %3408 = vmatpush1.bf16.msra.mxu0 %v3385
          %3409 = vmatprep.subr.bf16.mxu0 0
          %3410 = vmatpush1.bf16.msra.mxu0 %v3386
          %3411 = vmatprep.subr.bf16.mxu0 0
          %3412 = vmatpush1.bf16.msra.mxu0 0
          %3413 = vmatprep.subr.bf16.mxu0 0
          %3414 = vmatpush1.bf16.msra.mxu0 0
          %3415 = vmatprep.subr.bf16.mxu0 0
          %3416 = vmatpush1.bf16.msra.mxu0 0
          %3417 = vmatprep.subr.bf16.mxu0 0
          %3418 = vmatpush1.bf16.msra.mxu0 0
          %3419 = vmatprep.subr.bf16.mxu0 0
          %3420 = vmatpush1.bf16.msra.mxu0 0
          %3421 = vmatprep.subr.bf16.mxu0 0
          %3422 = vmatpush1.bf16.msra.mxu0 0
          %3423 = vmatprep.subr.bf16.mxu0 0
          %3424 = vmatpush1.bf16.msra.mxu0 0
          %3425 = vmatprep.subr.bf16.mxu0 0
          %3426 = vmatpush1.bf16.msra.mxu0 0
          %3427 = vmatprep.mubr.bf16.mxu0 0
          %3428 = vmatmul.mubr.bf16.gmra.mrb[0].mxu0 %v3323
          %v3429 = vpop.f32.mrb[0].mxu0
          %v3430 = vadd.f32 %v3345, %v3429
          %v3431 = vpop.f32.mrb[0].mxu0
          %v3432 = vpop.f32.mrb[0].mxu0
          %v3433 = vpop.f32.mrb[0].mxu0
          %3434 = vdwg.mxu0
          %3435 = vst [vmem:[#allocation11] sm:$0x3] %v3430
        $region88: #{tpu_custom_call.1} parent=63 // pred_fallthru
          _
        // Predicated region
        $region89: #{tpu_custom_call.1} parent=63 // pred_check
          %p3436 = pneg %p299
        $region90: #{tpu_custom_call.1} parent=63 // pred_check_branch
          %3438 = sbr.rel (%p3436) target = $region92
        $region91: #{tpu_custom_call.1} parent=63 // pred_region
          %s3440 = ssub.s32 32, 32
          %3441 = vsyncadd [#allocation5], %s3440
          %s3443 = sshll.u32 [#allocation11], 4
          %s3444 = int_to_ptr.vmem [resolvable:$true] %s3443
          %3446 = dma.vmem_to_hbm [thread:$0]  %s3444, 32, %s11, [#allocation5]
        $region92: #{tpu_custom_call.1} parent=63 // pred_fallthru
          _
        // Predicated region
        $region93: #{tpu_custom_call.1} parent=63 // pred_check
          %p3447 = pneg %p299
        $region94: #{tpu_custom_call.1} parent=63 // pred_check_branch
          %3449 = sbr.rel (%p3447) target = $region96
        $region95: #{tpu_custom_call.1} parent=63 // pred_region
          %3450 = dma.done [#allocation5], 32
        $region96: #{tpu_custom_call.1} parent=63 // pred_fallthru
          _
      $region64: #{tpu_custom_call.1} parent=5 // pred_fallthru
        _
      %p3451 = scmp.le.s32.totalorder 2, %s25
      // Predicated region
      $region97: #{tpu_custom_call.1} parent=5 // pred_check
        %p3452 = pneg %p3451
      $region98: #{tpu_custom_call.1} parent=5 // pred_check_branch
        %3454 = sbr.rel (%p3452) target = $region100
      $region99: #{tpu_custom_call.1} parent=5 // pred_region
        %s3455 = ssub.s32 %s25, 2
      $region100: #{tpu_custom_call.1} parent=5 // pred_fallthru
        _
    $region6: #{tpu_custom_call.1} parent=1 // loop_footer
      %s29 = sadd.s32 1, %s25
    $region7: #{tpu_custom_call.1} parent=1 // loop_footer_branch
      %24 = sbr.rel target = $region3
    $region8: #{tpu_custom_call.1} parent=1 // loop_exit
      _
    %3456 = vsyncpa [#allocation4], 1
    %s3457 = scalar_lea.sflag [#allocation4], 1
    %3458 = vsyncpa %s3457, 1
    %3459 = vsyncpa [#allocation7], 1
    %s3460 = scalar_lea.sflag [#allocation7], 1
    %3461 = vsyncpa %s3460, 1
    %3462 = vsyncpa [#allocation10], 1
    %3463 = vsyncpa [#allocation5], 1
    %s3464 = scalar_lea.sflag [#allocation5], 1
    %3465 = vsyncpa %s3464, 1

</llo_original>
